<compile_context>
chip_gen: v7x
topology: tpu7x:2x2x1
jax: 0.10.0
libtpu: 0.0.40
codegen_flags: <defaults>
</compile_context>

<pallas_src>
import functools

import jax
import jax.numpy as jnp
from jax.experimental import pallas as pl
from jax.experimental.pallas import tpu as pltpu


def _round_up(c, m):
    return max(m, ((c + m - 1) // m) * m)


# ----------------------------------------------------------------------------
# Fused kernel: conv tower + per-batch soft-argmax, fully VMEM-resident.
# ----------------------------------------------------------------------------
def _fused_corner_kernel(x_ref, coord_ref, mask_ref, *rest,
                         n_layers, cins_p, tap_shifts, hw, n_batch, out_rows,
                         inv_img_sz, compute_dtype):
    # x_ref       : (cin0_p, n_batch*hw)   channels on sublanes, batch folded
    #                                      into the lane axis
    # coord_ref   : (2, hw)                row 0 = coord_x, row 1 = coord_y
    # mask_ref    : (9, n_batch*hw)        per-tap zero-padding masks
    # rest        : n_layers weight refs   (cout_p_i, 9*cin_p_i) [compute_dtype]
    #               n_layers shift refs    (cout_p_i, 1)         [f32 bias+BN]
    #               output ref             (1, out_rows, 128)    [f32]
    #               patches scratch        (9*max_cin_p, n_batch*hw)
    w_refs = rest[:n_layers]
    s_refs = rest[n_layers:2 * n_layers]
    o_ref = rest[2 * n_layers]
    patches_ref = rest[2 * n_layers + 1]

    ew_dtype = x_ref.dtype
    h = x_ref[...]                                          # (cin0_p, N)
    scores = None
    for li in range(n_layers):
        cin_p = cins_p[li]
        # Stream the 9 im2col taps into the VMEM patch buffer (live set ~1 tap).
        for t in range(9):
            sh = tap_shifts[t]
            xt = pltpu.roll(h, sh, axis=1) if sh != 0 else h
            if t != 4:                      # center tap: mask is all-ones, skip
                xt = xt * mask_ref[t:t + 1, :]
            patches_ref[pl.ds(t * cin_p, cin_p), :] = xt.astype(compute_dtype)
        acc = jnp.dot(w_refs[li][...], patches_ref[pl.ds(0, 9 * cin_p), :],
                      preferred_element_type=jnp.float32)   # (cout_p, N) f32
        acc = acc + s_refs[li][...]                         # folded BN + bias
        if li < n_layers - 1:
            h = jnp.maximum(acc, 0.0).astype(ew_dtype)
        else:
            scores = acc                                    # final scores, f32

    # Per-batch soft-argmax over the two score maps (row 0 = TL, row 1 = BR).
    lane = jax.lax.broadcasted_iota(jnp.int32, (1, 128), 1)
    rows = []
    for b in range(n_batch):
        s2 = scores[0:2, b * hw:(b + 1) * hw]               # (2, hw) static slice
        m = jnp.max(s2, axis=1, keepdims=True)
        p = jnp.exp(s2 - m)
        inv_z = pl.reciprocal(jnp.sum(p, axis=1, keepdims=True), approx=True)
        ex = jnp.sum(p * coord_ref[0:1, :], axis=1, keepdims=True) * inv_z  # (2,1)
        ey = jnp.sum(p * coord_ref[1:2, :], axis=1, keepdims=True) * inv_z  # (2,1)
        vals = (ex[0:1, 0:1], ey[0:1, 0:1], ex[1:2, 0:1], ey[1:2, 0:1])
        row = jnp.zeros((1, 128), jnp.float32)
        for i, v in enumerate(vals):
            row = jnp.where(lane == i, v, row)              # lanes 0..3
        rows.append(row * inv_img_sz)
    if out_rows > n_batch:
        rows.append(jnp.zeros((out_rows - n_batch, 128), jnp.float32))
    o_ref[0] = jnp.concatenate(rows, axis=0)                # lane-dense store


# ----------------------------------------------------------------------------
# Wrapper: host-side parameter folding + single pallas_call.
# ----------------------------------------------------------------------------
def _auto_num_steps(batch_size):
    """2-way parallel grid on dual-TensorCore chips (v7x), else a single step."""
    try:
        kind = jax.devices()[0].device_kind.lower()
    except Exception:
        return 1
    return 2 if ("v7" in kind and batch_size % 2 == 0) else 1


def corner_predictor_lite_forward(x_nchw, params, feat_sz, stride,
                                  compute_dtype=jnp.bfloat16,
                                  elementwise_dtype=jnp.float32,
                                  num_steps=None):
    B, cin0, H, W = x_nchw.shape
    assert H == feat_sz and W == feat_sz
    HW = feat_sz * feat_sz
    assert HW % 128 == 0, "feat_sz**2 must be a multiple of 128 (lane-dense)"
    img_sz = feat_sz * stride
    n_layers = len(params)

    if num_steps is None:
        num_steps = _auto_num_steps(B)
    if B % num_steps != 0:
        num_steps = 1
    n_bps = B // num_steps                      # batch elements per grid step
    N = n_bps * HW                              # lane width per step
    pad_mult = 16 if jnp.dtype(compute_dtype).itemsize < 4 else 8

    # --- one-time parameter prep: fold BN + bias, pad channels to pad_mult,
    #     flatten the 3x3 taps into the contraction dim, cast to compute dtype.
    w_mats, shift_vecs, cins_p = [], [], []
    for prm in params:
        w = prm["w"]                            # (3, 3, cin, cout)  HWIO
        _, _, cin, cout = w.shape
        cin_p = _round_up(cin, pad_mult)
        cout_p = _round_up(cout, pad_mult)
        cins_p.append(cin_p)
        scale = prm["scale"].reshape(-1)
        shift = prm["shift"].reshape(-1)
        bias = prm["b"].reshape(-1)
        wm = jnp.transpose(w, (3, 0, 1, 2)) * scale[:, None, None, None]
        wm = jnp.pad(wm, ((0, cout_p - cout), (0, 0), (0, 0), (0, cin_p - cin)))
        w_mats.append(wm.reshape(cout_p, 9 * cin_p).astype(compute_dtype))
        sv = jnp.pad(bias * scale + shift, (0, cout_p - cout))
        shift_vecs.append(sv.reshape(cout_p, 1).astype(jnp.float32))
    max_cin_p = max(cins_p)

    # --- input: channels-first, batch folded into the lane axis.
    cin0_p = cins_p[0]
    x = x_nchw.astype(elementwise_dtype).reshape(B, cin0, HW)
    x = jnp.pad(x, ((0, 0), (0, cin0_p - cin0), (0, 0)))
    x = jnp.transpose(x, (1, 0, 2)).reshape(cin0_p, B * HW)

    # --- coordinate vectors (per pixel) and per-tap zero-padding masks.
    k = jnp.arange(HW, dtype=jnp.float32)
    coords = jnp.stack([(k % feat_sz + 0.5) * stride,            # coord_x
                        (k // feat_sz + 0.5) * stride], axis=0)  # coord_y (2,HW)

    ki = jnp.arange(HW, dtype=jnp.int32)
    hh, ww = ki // feat_sz, ki % feat_sz
    mask_rows, tap_shifts = [], []
    for dy in range(3):
        for dx in range(3):
            valid = ((hh + dy - 1 >= 0) & (hh + dy - 1 < feat_sz) &
                     (ww + dx - 1 >= 0) & (ww + dx - 1 < feat_sz))
            mask_rows.append(valid)
            s = (dy - 1) * feat_sz + (dx - 1)       # flattened tap offset
            tap_shifts.append(int((-s) % N))        # roll over the N-lane axis
    masks = jnp.stack(mask_rows, axis=0).astype(elementwise_dtype)   # (9, HW)
    masks = jnp.tile(masks, (1, n_bps))                              # (9, N)

    out_rows = _round_up(n_bps, 8)

    kernel = functools.partial(
        _fused_corner_kernel,
        n_layers=n_layers, cins_p=tuple(cins_p), tap_shifts=tuple(tap_shifts),
        hw=HW, n_batch=n_bps, out_rows=out_rows,
        inv_img_sz=1.0 / img_sz, compute_dtype=compute_dtype)

    out = pl.pallas_call(
        kernel,
        out_shape=jax.ShapeDtypeStruct((num_steps, out_rows, 128), jnp.float32),
        grid=(num_steps,),
        in_specs=[
            pl.BlockSpec((cin0_p, N), lambda i: (0, i)),     # x (lane-blocked)
            pl.BlockSpec((2, HW), lambda i: (0, 0)),         # coords
            pl.BlockSpec((9, N), lambda i: (0, 0)),          # tap masks
        ] + [pl.BlockSpec(wm.shape, lambda i: (0, 0)) for wm in w_mats]
          + [pl.BlockSpec(sv.shape, lambda i: (0, 0)) for sv in shift_vecs],
        out_specs=pl.BlockSpec((1, out_rows, 128), lambda i: (i, 0, 0)),
        scratch_shapes=[pltpu.VMEM((9 * max_cin_p, N), compute_dtype)],
        compiler_params=pltpu.CompilerParams(
            dimension_semantics=("parallel",)),
    )(x, coords, masks, *w_mats, *shift_vecs)

    # (step, row, lane) -> (B, 4) = (coorx_tl, coory_tl, coorx_br, coory_br)/img_sz
    return out[:, :n_bps, :4].reshape(B, 4)


# ----------------------------------------------------------------------------
# Deterministic synthetic parameters (HWIO conv weights, eval-mode BN stats).
# ----------------------------------------------------------------------------
def init_params(key, inplanes, channel):
    chans = [inplanes, channel, channel // 2, channel // 4, channel // 8, 2]
    eps = 1e-5
    params = []
    for i in range(5):
        cin, cout = chans[i], chans[i + 1]
        key, kw, kb = jax.random.split(key, 3)
        w = jax.random.normal(kw, (3, 3, cin, cout), jnp.float32) * 0.1
        b = jax.random.normal(kb, (1, cout), jnp.float32) * 0.1
        if i < 4:
            gamma = jnp.ones((1, cout), jnp.float32)
            beta = jnp.zeros((1, cout), jnp.float32)
            mean = jnp.zeros((1, cout), jnp.float32)
            var = jnp.ones((1, cout), jnp.float32)
            scale = gamma / jnp.sqrt(var + eps)
            shift = beta - mean * scale
        else:
            scale = jnp.ones((1, cout), jnp.float32)
            shift = jnp.zeros((1, cout), jnp.float32)
        params.append(dict(w=w, b=b, scale=scale, shift=shift))
    return params


# ----------------------------------------------------------------------------
# Pure-JAX reference.  operand_dtype=jnp.bfloat16 emulates the kernel's
# bf16-operand / f32-accumulate matmuls for a tight numerical comparison;
# operand_dtype=None is the faithful f32 reference of the PyTorch module.
# ----------------------------------------------------------------------------
def reference_forward(x_nchw, params, feat_sz, stride, operand_dtype=None):
    x = jnp.transpose(x_nchw, (0, 2, 3, 1)).astype(jnp.float32)   # NHWC
    n = len(params)
    for i, p in enumerate(params):
        scale = p["scale"].reshape(-1)
        shift = p["shift"].reshape(-1)
        bias = p["b"].reshape(-1)
        w_eff = p["w"] * scale                    # fold BN scale (algebraically
        b_eff = bias * scale + shift              # identical to conv->bias->BN)
        xin, win = x, w_eff
        if operand_dtype is not None:
            xin = xin.astype(operand_dtype).astype(jnp.float32)
            win = win.astype(operand_dtype).astype(jnp.float32)
        y = jax.lax.conv_general_dilated(
            xin, win, window_strides=(1, 1), padding="SAME",
            dimension_numbers=("NHWC", "HWIO", "NHWC"))
        y = y + b_eff.reshape(1, 1, 1, -1)
        if i < n - 1:
            y = jnp.maximum(y, 0.0)
        x = y
    B = x.shape[0]
    HW = feat_sz * feat_sz
    scores = jnp.transpose(x, (0, 3, 1, 2)).reshape(B * 2, HW)
    prob = jax.nn.softmax(scores, axis=1)
    k = jnp.arange(HW, dtype=jnp.float32)
    cx = (k % feat_sz + 0.5) * stride
    cy = (k // feat_sz + 0.5) * stride
    ex = jnp.sum(prob * cx[None, :], axis=1)
    ey = jnp.sum(prob * cy[None, :], axis=1)
    return jnp.stack([ex, ey], axis=1).reshape(B, 4) / (feat_sz * stride)


if __name__ == "__main__":
    B, inplanes, channel, feat_sz, stride = 2, 4, 32, 16, 16

    key = jax.random.PRNGKey(0)
    key, kx = jax.random.split(key)
    x_nchw = jax.random.normal(kx, (B, inplanes, feat_sz, feat_sz), jnp.float32)
    params = init_params(key, inplanes, channel)

    fwd = jax.jit(functools.partial(corner_predictor_lite_forward,
                                    feat_sz=feat_sz, stride=stride))
    out = jax.block_until_ready(fwd(x_nchw, params))

    assert out.shape == (B, 4), out.shape
    assert bool(jnp.all(jnp.isfinite(out)))

    # Tight check against a reference that emulates bf16 operands / f32 accumulate.
    ref_bf16 = reference_forward(x_nchw, params, feat_sz, stride,
                                 operand_dtype=jnp.bfloat16)
    assert bool(jnp.allclose(out, ref_bf16, rtol=1e-2, atol=1e-2)), (out, ref_bf16)

    # Sanity check against the full-f32 reference (matches the PyTorch module).
    ref_f32 = reference_forward(x_nchw, params, feat_sz, stride)
    assert bool(jnp.allclose(out, ref_f32, rtol=3e-2, atol=3e-2)), (out, ref_f32)

    print("KERNEL_OK")
</pallas_src>

<mosaic_0001>
module attributes {stable_mosaic.version = 11 : i64} {
  func.func @_fused_corner_kernel(%arg0: i32, %arg1: memref<16x512xf32, #tpu.memory_space<vmem>>, %arg2: memref<2x256xf32, #tpu.memory_space<vmem>>, %arg3: memref<9x512xf32, #tpu.memory_space<vmem>>, %arg4: memref<32x144xbf16, #tpu.memory_space<vmem>>, %arg5: memref<16x288xbf16, #tpu.memory_space<vmem>>, %arg6: memref<16x144xbf16, #tpu.memory_space<vmem>>, %arg7: memref<16x144xbf16, #tpu.memory_space<vmem>>, %arg8: memref<16x144xbf16, #tpu.memory_space<vmem>>, %arg9: memref<32x1xf32, #tpu.memory_space<vmem>>, %arg10: memref<16x1xf32, #tpu.memory_space<vmem>>, %arg11: memref<16x1xf32, #tpu.memory_space<vmem>>, %arg12: memref<16x1xf32, #tpu.memory_space<vmem>>, %arg13: memref<16x1xf32, #tpu.memory_space<vmem>>, %arg14: memref<1x8x128xf32, #tpu.memory_space<vmem>>, %arg15: memref<288x512xbf16, #tpu.memory_space<vmem>>) attributes {dimension_semantics = [#tpu.dimension_semantics<parallel>], iteration_bounds = array<i64: 1>, scalar_prefetch = 0 : i64, scratch_operands = 1 : i64, tpu.core_type = #tpu.core_type<tc>, window_params = [{transform_indices = @transform_0, window_bounds = array<i64: 16, 512>}, {pipeline_mode = #tpu.pipeline_mode<synchronous>, transform_indices = @transform_1, window_bounds = array<i64: 2, 256>}, {pipeline_mode = #tpu.pipeline_mode<synchronous>, transform_indices = @transform_2, window_bounds = array<i64: 9, 512>}, {pipeline_mode = #tpu.pipeline_mode<synchronous>, transform_indices = @transform_3, window_bounds = array<i64: 32, 144>}, {pipeline_mode = #tpu.pipeline_mode<synchronous>, transform_indices = @transform_4, window_bounds = array<i64: 16, 288>}, {pipeline_mode = #tpu.pipeline_mode<synchronous>, transform_indices = @transform_5, window_bounds = array<i64: 16, 144>}, {pipeline_mode = #tpu.pipeline_mode<synchronous>, transform_indices = @transform_6, window_bounds = array<i64: 16, 144>}, {pipeline_mode = #tpu.pipeline_mode<synchronous>, transform_indices = @transform_7, window_bounds = array<i64: 16, 144>}, {pipeline_mode = #tpu.pipeline_mode<synchronous>, transform_indices = @transform_8, window_bounds = array<i64: 32, 1>}, {pipeline_mode = #tpu.pipeline_mode<synchronous>, transform_indices = @transform_9, window_bounds = array<i64: 16, 1>}, {pipeline_mode = #tpu.pipeline_mode<synchronous>, transform_indices = @transform_10, window_bounds = array<i64: 16, 1>}, {pipeline_mode = #tpu.pipeline_mode<synchronous>, transform_indices = @transform_11, window_bounds = array<i64: 16, 1>}, {pipeline_mode = #tpu.pipeline_mode<synchronous>, transform_indices = @transform_12, window_bounds = array<i64: 16, 1>}, {transform_indices = @transform_13, window_bounds = array<i64: 1, 8, 128>}]} {
    %c0 = arith.constant 0 : index
    %c0_0 = arith.constant 0 : index
    %0 = vector.load %arg1[%c0, %c0_0] : memref<16x512xf32, #tpu.memory_space<vmem>>, vector<16x512xf32>
    %c17_i32 = arith.constant 17 : i32
    %1 = tpu.dynamic_rotate %0 by %c17_i32 dim 1 : vector<16x512xf32>, i32 -> vector<16x512xf32>
    %c0_1 = arith.constant 0 : index
    %c0_2 = arith.constant 0 : index
    %2 = vector.load %arg3[%c0_1, %c0_2] : memref<9x512xf32, #tpu.memory_space<vmem>>, vector<1x512xf32>
    %3 = vector.broadcast %2 : vector<1x512xf32> to vector<16x512xf32>
    %4 = arith.mulf %1, %3 : vector<16x512xf32>
    %5 = arith.truncf %4 : vector<16x512xf32> to vector<16x512xbf16>
    %c0_3 = arith.constant 0 : index
    %c0_4 = arith.constant 0 : index
    %6 = vector.load %arg15[%c0_3, %c0_4] : memref<288x512xbf16, #tpu.memory_space<vmem>>, vector<16x512xbf16>
    tpu.vector_store %arg15[%c0_3, %c0_4], %5 {strides = array<i32>} : memref<288x512xbf16, #tpu.memory_space<vmem>>, vector<16x512xbf16>,
    %c16_i32 = arith.constant 16 : i32
    %7 = tpu.dynamic_rotate %0 by %c16_i32 dim 1 : vector<16x512xf32>, i32 -> vector<16x512xf32>
    %c1 = arith.constant 1 : index
    %c0_5 = arith.constant 0 : index
    %8 = vector.load %arg3[%c1, %c0_5] : memref<9x512xf32, #tpu.memory_space<vmem>>, vector<1x512xf32>
    %9 = vector.broadcast %8 : vector<1x512xf32> to vector<16x512xf32>
    %10 = arith.mulf %7, %9 : vector<16x512xf32>
    %11 = arith.truncf %10 : vector<16x512xf32> to vector<16x512xbf16>
    %c16 = arith.constant 16 : index
    %c0_6 = arith.constant 0 : index
    %12 = vector.load %arg15[%c16, %c0_6] : memref<288x512xbf16, #tpu.memory_space<vmem>>, vector<16x512xbf16>
    tpu.vector_store %arg15[%c16, %c0_6], %11 {strides = array<i32>} : memref<288x512xbf16, #tpu.memory_space<vmem>>, vector<16x512xbf16>,
    %c15_i32 = arith.constant 15 : i32
    %13 = tpu.dynamic_rotate %0 by %c15_i32 dim 1 : vector<16x512xf32>, i32 -> vector<16x512xf32>
    %c2 = arith.constant 2 : index
    %c0_7 = arith.constant 0 : index
    %14 = vector.load %arg3[%c2, %c0_7] : memref<9x512xf32, #tpu.memory_space<vmem>>, vector<1x512xf32>
    %15 = vector.broadcast %14 : vector<1x512xf32> to vector<16x512xf32>
    %16 = arith.mulf %13, %15 : vector<16x512xf32>
    %17 = arith.truncf %16 : vector<16x512xf32> to vector<16x512xbf16>
    %c32 = arith.constant 32 : index
    %c0_8 = arith.constant 0 : index
    %18 = vector.load %arg15[%c32, %c0_8] : memref<288x512xbf16, #tpu.memory_space<vmem>>, vector<16x512xbf16>
    tpu.vector_store %arg15[%c32, %c0_8], %17 {strides = array<i32>} : memref<288x512xbf16, #tpu.memory_space<vmem>>, vector<16x512xbf16>,
    %c1_i32 = arith.constant 1 : i32
    %19 = tpu.dynamic_rotate %0 by %c1_i32 dim 1 : vector<16x512xf32>, i32 -> vector<16x512xf32>
    %c3 = arith.constant 3 : index
    %c0_9 = arith.constant 0 : index
    %20 = vector.load %arg3[%c3, %c0_9] : memref<9x512xf32, #tpu.memory_space<vmem>>, vector<1x512xf32>
    %21 = vector.broadcast %20 : vector<1x512xf32> to vector<16x512xf32>
    %22 = arith.mulf %19, %21 : vector<16x512xf32>
    %23 = arith.truncf %22 : vector<16x512xf32> to vector<16x512xbf16>
    %c48 = arith.constant 48 : index
    %c0_10 = arith.constant 0 : index
    %24 = vector.load %arg15[%c48, %c0_10] : memref<288x512xbf16, #tpu.memory_space<vmem>>, vector<16x512xbf16>
    tpu.vector_store %arg15[%c48, %c0_10], %23 {strides = array<i32>} : memref<288x512xbf16, #tpu.memory_space<vmem>>, vector<16x512xbf16>,
    %25 = arith.truncf %0 : vector<16x512xf32> to vector<16x512xbf16>
    %c64 = arith.constant 64 : index
    %c0_11 = arith.constant 0 : index
    %26 = vector.load %arg15[%c64, %c0_11] : memref<288x512xbf16, #tpu.memory_space<vmem>>, vector<16x512xbf16>
    tpu.vector_store %arg15[%c64, %c0_11], %25 {strides = array<i32>} : memref<288x512xbf16, #tpu.memory_space<vmem>>, vector<16x512xbf16>,
    %c511_i32 = arith.constant 511 : i32
    %27 = tpu.dynamic_rotate %0 by %c511_i32 dim 1 : vector<16x512xf32>, i32 -> vector<16x512xf32>
    %c5 = arith.constant 5 : index
    %c0_12 = arith.constant 0 : index
    %28 = vector.load %arg3[%c5, %c0_12] : memref<9x512xf32, #tpu.memory_space<vmem>>, vector<1x512xf32>
    %29 = vector.broadcast %28 : vector<1x512xf32> to vector<16x512xf32>
    %30 = arith.mulf %27, %29 : vector<16x512xf32>
    %31 = arith.truncf %30 : vector<16x512xf32> to vector<16x512xbf16>
    %c80 = arith.constant 80 : index
    %c0_13 = arith.constant 0 : index
    %32 = vector.load %arg15[%c80, %c0_13] : memref<288x512xbf16, #tpu.memory_space<vmem>>, vector<16x512xbf16>
    tpu.vector_store %arg15[%c80, %c0_13], %31 {strides = array<i32>} : memref<288x512xbf16, #tpu.memory_space<vmem>>, vector<16x512xbf16>,
    %c497_i32 = arith.constant 497 : i32
    %33 = tpu.dynamic_rotate %0 by %c497_i32 dim 1 : vector<16x512xf32>, i32 -> vector<16x512xf32>
    %c6 = arith.constant 6 : index
    %c0_14 = arith.constant 0 : index
    %34 = vector.load %arg3[%c6, %c0_14] : memref<9x512xf32, #tpu.memory_space<vmem>>, vector<1x512xf32>
    %35 = vector.broadcast %34 : vector<1x512xf32> to vector<16x512xf32>
    %36 = arith.mulf %33, %35 : vector<16x512xf32>
    %37 = arith.truncf %36 : vector<16x512xf32> to vector<16x512xbf16>
    %c96 = arith.constant 96 : index
    %c0_15 = arith.constant 0 : index
    %38 = vector.load %arg15[%c96, %c0_15] : memref<288x512xbf16, #tpu.memory_space<vmem>>, vector<16x512xbf16>
    tpu.vector_store %arg15[%c96, %c0_15], %37 {strides = array<i32>} : memref<288x512xbf16, #tpu.memory_space<vmem>>, vector<16x512xbf16>,
    %c496_i32 = arith.constant 496 : i32
    %39 = tpu.dynamic_rotate %0 by %c496_i32 dim 1 : vector<16x512xf32>, i32 -> vector<16x512xf32>
    %c7 = arith.constant 7 : index
    %c0_16 = arith.constant 0 : index
    %40 = vector.load %arg3[%c7, %c0_16] : memref<9x512xf32, #tpu.memory_space<vmem>>, vector<1x512xf32>
    %41 = vector.broadcast %40 : vector<1x512xf32> to vector<16x512xf32>
    %42 = arith.mulf %39, %41 : vector<16x512xf32>
    %43 = arith.truncf %42 : vector<16x512xf32> to vector<16x512xbf16>
    %c112 = arith.constant 112 : index
    %c0_17 = arith.constant 0 : index
    %44 = vector.load %arg15[%c112, %c0_17] : memref<288x512xbf16, #tpu.memory_space<vmem>>, vector<16x512xbf16>
    tpu.vector_store %arg15[%c112, %c0_17], %43 {strides = array<i32>} : memref<288x512xbf16, #tpu.memory_space<vmem>>, vector<16x512xbf16>,
    %c495_i32 = arith.constant 495 : i32
    %45 = tpu.dynamic_rotate %0 by %c495_i32 dim 1 : vector<16x512xf32>, i32 -> vector<16x512xf32>
    %c8 = arith.constant 8 : index
    %c0_18 = arith.constant 0 : index
    %46 = vector.load %arg3[%c8, %c0_18] : memref<9x512xf32, #tpu.memory_space<vmem>>, vector<1x512xf32>
    %47 = vector.broadcast %46 : vector<1x512xf32> to vector<16x512xf32>
    %48 = arith.mulf %45, %47 : vector<16x512xf32>
    %49 = arith.truncf %48 : vector<16x512xf32> to vector<16x512xbf16>
    %c128 = arith.constant 128 : index
    %c0_19 = arith.constant 0 : index
    %50 = vector.load %arg15[%c128, %c0_19] : memref<288x512xbf16, #tpu.memory_space<vmem>>, vector<16x512xbf16>
    tpu.vector_store %arg15[%c128, %c0_19], %49 {strides = array<i32>} : memref<288x512xbf16, #tpu.memory_space<vmem>>, vector<16x512xbf16>,
    %c0_20 = arith.constant 0 : index
    %c0_21 = arith.constant 0 : index
    %51 = vector.load %arg4[%c0_20, %c0_21] : memref<32x144xbf16, #tpu.memory_space<vmem>>, vector<32x144xbf16>
    %c0_22 = arith.constant 0 : index
    %c0_23 = arith.constant 0 : index
    %52 = vector.load %arg15[%c0_22, %c0_23] : memref<288x512xbf16, #tpu.memory_space<vmem>>, vector<144x512xbf16>
    %cst = arith.constant dense<0.000000e+00> : vector<32x512xf32>
    %53 = tpu.matmul %51, %52, %cst {dimension_numbers = #tpu.dot_dimension_numbers<[1], [0], [0], [1], [0, 0, 1, 1], [], []>} : vector<32x144xbf16>, vector<144x512xbf16>, vector<32x512xf32> -> vector<32x512xf32>
    %c0_24 = arith.constant 0 : index
    %c0_25 = arith.constant 0 : index
    %54 = vector.load %arg9[%c0_24, %c0_25] : memref<32x1xf32, #tpu.memory_space<vmem>>, vector<32x1xf32>
    %55 = vector.broadcast %54 : vector<32x1xf32> to vector<32x512xf32>
    %56 = arith.addf %53, %55 : vector<32x512xf32>
    %cst_26 = arith.constant 0.000000e+00 : f32
    %57 = vector.broadcast %cst_26 : f32 to vector<32x512xf32>
    %58 = arith.maximumf %56, %57 : vector<32x512xf32>
    %c17_i32_27 = arith.constant 17 : i32
    %59 = tpu.dynamic_rotate %58 by %c17_i32_27 dim 1 : vector<32x512xf32>, i32 -> vector<32x512xf32>
    %c0_28 = arith.constant 0 : index
    %c0_29 = arith.constant 0 : index
    %60 = vector.load %arg3[%c0_28, %c0_29] : memref<9x512xf32, #tpu.memory_space<vmem>>, vector<1x512xf32>
    %61 = vector.broadcast %60 : vector<1x512xf32> to vector<32x512xf32>
    %62 = arith.mulf %59, %61 : vector<32x512xf32>
    %63 = arith.truncf %62 : vector<32x512xf32> to vector<32x512xbf16>
    %c0_30 = arith.constant 0 : index
    %c0_31 = arith.constant 0 : index
    %64 = vector.load %arg15[%c0_30, %c0_31] : memref<288x512xbf16, #tpu.memory_space<vmem>>, vector<32x512xbf16>
    tpu.vector_store %arg15[%c0_30, %c0_31], %63 {strides = array<i32>} : memref<288x512xbf16, #tpu.memory_space<vmem>>, vector<32x512xbf16>,
    %c16_i32_32 = arith.constant 16 : i32
    %65 = tpu.dynamic_rotate %58 by %c16_i32_32 dim 1 : vector<32x512xf32>, i32 -> vector<32x512xf32>
    %c1_33 = arith.constant 1 : index
    %c0_34 = arith.constant 0 : index
    %66 = vector.load %arg3[%c1_33, %c0_34] : memref<9x512xf32, #tpu.memory_space<vmem>>, vector<1x512xf32>
    %67 = vector.broadcast %66 : vector<1x512xf32> to vector<32x512xf32>
    %68 = arith.mulf %65, %67 : vector<32x512xf32>
    %69 = arith.truncf %68 : vector<32x512xf32> to vector<32x512xbf16>
    %c32_35 = arith.constant 32 : index
    %c0_36 = arith.constant 0 : index
    %70 = vector.load %arg15[%c32_35, %c0_36] : memref<288x512xbf16, #tpu.memory_space<vmem>>, vector<32x512xbf16>
    tpu.vector_store %arg15[%c32_35, %c0_36], %69 {strides = array<i32>} : memref<288x512xbf16, #tpu.memory_space<vmem>>, vector<32x512xbf16>,
    %c15_i32_37 = arith.constant 15 : i32
    %71 = tpu.dynamic_rotate %58 by %c15_i32_37 dim 1 : vector<32x512xf32>, i32 -> vector<32x512xf32>
    %c2_38 = arith.constant 2 : index
    %c0_39 = arith.constant 0 : index
    %72 = vector.load %arg3[%c2_38, %c0_39] : memref<9x512xf32, #tpu.memory_space<vmem>>, vector<1x512xf32>
    %73 = vector.broadcast %72 : vector<1x512xf32> to vector<32x512xf32>
    %74 = arith.mulf %71, %73 : vector<32x512xf32>
    %75 = arith.truncf %74 : vector<32x512xf32> to vector<32x512xbf16>
    %c64_40 = arith.constant 64 : index
    %c0_41 = arith.constant 0 : index
    %76 = vector.load %arg15[%c64_40, %c0_41] : memref<288x512xbf16, #tpu.memory_space<vmem>>, vector<32x512xbf16>
    tpu.vector_store %arg15[%c64_40, %c0_41], %75 {strides = array<i32>} : memref<288x512xbf16, #tpu.memory_space<vmem>>, vector<32x512xbf16>,
    %c1_i32_42 = arith.constant 1 : i32
    %77 = tpu.dynamic_rotate %58 by %c1_i32_42 dim 1 : vector<32x512xf32>, i32 -> vector<32x512xf32>
    %c3_43 = arith.constant 3 : index
    %c0_44 = arith.constant 0 : index
    %78 = vector.load %arg3[%c3_43, %c0_44] : memref<9x512xf32, #tpu.memory_space<vmem>>, vector<1x512xf32>
    %79 = vector.broadcast %78 : vector<1x512xf32> to vector<32x512xf32>
    %80 = arith.mulf %77, %79 : vector<32x512xf32>
    %81 = arith.truncf %80 : vector<32x512xf32> to vector<32x512xbf16>
    %c96_45 = arith.constant 96 : index
    %c0_46 = arith.constant 0 : index
    %82 = vector.load %arg15[%c96_45, %c0_46] : memref<288x512xbf16, #tpu.memory_space<vmem>>, vector<32x512xbf16>
    tpu.vector_store %arg15[%c96_45, %c0_46], %81 {strides = array<i32>} : memref<288x512xbf16, #tpu.memory_space<vmem>>, vector<32x512xbf16>,
    %83 = arith.truncf %58 : vector<32x512xf32> to vector<32x512xbf16>
    %c128_47 = arith.constant 128 : index
    %c0_48 = arith.constant 0 : index
    %84 = vector.load %arg15[%c128_47, %c0_48] : memref<288x512xbf16, #tpu.memory_space<vmem>>, vector<32x512xbf16>
    tpu.vector_store %arg15[%c128_47, %c0_48], %83 {strides = array<i32>} : memref<288x512xbf16, #tpu.memory_space<vmem>>, vector<32x512xbf16>,
    %c511_i32_49 = arith.constant 511 : i32
    %85 = tpu.dynamic_rotate %58 by %c511_i32_49 dim 1 : vector<32x512xf32>, i32 -> vector<32x512xf32>
    %c5_50 = arith.constant 5 : index
    %c0_51 = arith.constant 0 : index
    %86 = vector.load %arg3[%c5_50, %c0_51] : memref<9x512xf32, #tpu.memory_space<vmem>>, vector<1x512xf32>
    %87 = vector.broadcast %86 : vector<1x512xf32> to vector<32x512xf32>
    %88 = arith.mulf %85, %87 : vector<32x512xf32>
    %89 = arith.truncf %88 : vector<32x512xf32> to vector<32x512xbf16>
    %c160 = arith.constant 160 : index
    %c0_52 = arith.constant 0 : index
    %90 = vector.load %arg15[%c160, %c0_52] : memref<288x512xbf16, #tpu.memory_space<vmem>>, vector<32x512xbf16>
    tpu.vector_store %arg15[%c160, %c0_52], %89 {strides = array<i32>} : memref<288x512xbf16, #tpu.memory_space<vmem>>, vector<32x512xbf16>,
    %c497_i32_53 = arith.constant 497 : i32
    %91 = tpu.dynamic_rotate %58 by %c497_i32_53 dim 1 : vector<32x512xf32>, i32 -> vector<32x512xf32>
    %c6_54 = arith.constant 6 : index
    %c0_55 = arith.constant 0 : index
    %92 = vector.load %arg3[%c6_54, %c0_55] : memref<9x512xf32, #tpu.memory_space<vmem>>, vector<1x512xf32>
    %93 = vector.broadcast %92 : vector<1x512xf32> to vector<32x512xf32>
    %94 = arith.mulf %91, %93 : vector<32x512xf32>
    %95 = arith.truncf %94 : vector<32x512xf32> to vector<32x512xbf16>
    %c192 = arith.constant 192 : index
    %c0_56 = arith.constant 0 : index
    %96 = vector.load %arg15[%c192, %c0_56] : memref<288x512xbf16, #tpu.memory_space<vmem>>, vector<32x512xbf16>
    tpu.vector_store %arg15[%c192, %c0_56], %95 {strides = array<i32>} : memref<288x512xbf16, #tpu.memory_space<vmem>>, vector<32x512xbf16>,
    %c496_i32_57 = arith.constant 496 : i32
    %97 = tpu.dynamic_rotate %58 by %c496_i32_57 dim 1 : vector<32x512xf32>, i32 -> vector<32x512xf32>
    %c7_58 = arith.constant 7 : index
    %c0_59 = arith.constant 0 : index
    %98 = vector.load %arg3[%c7_58, %c0_59] : memref<9x512xf32, #tpu.memory_space<vmem>>, vector<1x512xf32>
    %99 = vector.broadcast %98 : vector<1x512xf32> to vector<32x512xf32>
    %100 = arith.mulf %97, %99 : vector<32x512xf32>
    %101 = arith.truncf %100 : vector<32x512xf32> to vector<32x512xbf16>
    %c224 = arith.constant 224 : index
    %c0_60 = arith.constant 0 : index
    %102 = vector.load %arg15[%c224, %c0_60] : memref<288x512xbf16, #tpu.memory_space<vmem>>, vector<32x512xbf16>
    tpu.vector_store %arg15[%c224, %c0_60], %101 {strides = array<i32>} : memref<288x512xbf16, #tpu.memory_space<vmem>>, vector<32x512xbf16>,
    %c495_i32_61 = arith.constant 495 : i32
    %103 = tpu.dynamic_rotate %58 by %c495_i32_61 dim 1 : vector<32x512xf32>, i32 -> vector<32x512xf32>
    %c8_62 = arith.constant 8 : index
    %c0_63 = arith.constant 0 : index
    %104 = vector.load %arg3[%c8_62, %c0_63] : memref<9x512xf32, #tpu.memory_space<vmem>>, vector<1x512xf32>
    %105 = vector.broadcast %104 : vector<1x512xf32> to vector<32x512xf32>
    %106 = arith.mulf %103, %105 : vector<32x512xf32>
    %107 = arith.truncf %106 : vector<32x512xf32> to vector<32x512xbf16>
    %c256 = arith.constant 256 : index
    %c0_64 = arith.constant 0 : index
    %108 = vector.load %arg15[%c256, %c0_64] : memref<288x512xbf16, #tpu.memory_space<vmem>>, vector<32x512xbf16>
    tpu.vector_store %arg15[%c256, %c0_64], %107 {strides = array<i32>} : memref<288x512xbf16, #tpu.memory_space<vmem>>, vector<32x512xbf16>,
    %c0_65 = arith.constant 0 : index
    %c0_66 = arith.constant 0 : index
    %109 = vector.load %arg5[%c0_65, %c0_66] : memref<16x288xbf16, #tpu.memory_space<vmem>>, vector<16x288xbf16>
    %c0_67 = arith.constant 0 : index
    %c0_68 = arith.constant 0 : index
    %110 = vector.load %arg15[%c0_67, %c0_68] : memref<288x512xbf16, #tpu.memory_space<vmem>>, vector<288x512xbf16>
    %cst_69 = arith.constant dense<0.000000e+00> : vector<16x512xf32>
    %111 = tpu.matmul %109, %110, %cst_69 {dimension_numbers = #tpu.dot_dimension_numbers<[1], [0], [0], [1], [0, 0, 1, 1], [], []>} : vector<16x288xbf16>, vector<288x512xbf16>, vector<16x512xf32> -> vector<16x512xf32>
    %c0_70 = arith.constant 0 : index
    %c0_71 = arith.constant 0 : index
    %112 = vector.load %arg10[%c0_70, %c0_71] : memref<16x1xf32, #tpu.memory_space<vmem>>, vector<16x1xf32>
    %113 = vector.broadcast %112 : vector<16x1xf32> to vector<16x512xf32>
    %114 = arith.addf %111, %113 : vector<16x512xf32>
    %cst_72 = arith.constant 0.000000e+00 : f32
    %115 = vector.broadcast %cst_72 : f32 to vector<16x512xf32>
    %116 = arith.maximumf %114, %115 : vector<16x512xf32>
    %c17_i32_73 = arith.constant 17 : i32
    %117 = tpu.dynamic_rotate %116 by %c17_i32_73 dim 1 : vector<16x512xf32>, i32 -> vector<16x512xf32>
    %c0_74 = arith.constant 0 : index
    %c0_75 = arith.constant 0 : index
    %118 = vector.load %arg3[%c0_74, %c0_75] : memref<9x512xf32, #tpu.memory_space<vmem>>, vector<1x512xf32>
    %119 = vector.broadcast %118 : vector<1x512xf32> to vector<16x512xf32>
    %120 = arith.mulf %117, %119 : vector<16x512xf32>
    %121 = arith.truncf %120 : vector<16x512xf32> to vector<16x512xbf16>
    %c0_76 = arith.constant 0 : index
    %c0_77 = arith.constant 0 : index
    %122 = vector.load %arg15[%c0_76, %c0_77] : memref<288x512xbf16, #tpu.memory_space<vmem>>, vector<16x512xbf16>
    tpu.vector_store %arg15[%c0_76, %c0_77], %121 {strides = array<i32>} : memref<288x512xbf16, #tpu.memory_space<vmem>>, vector<16x512xbf16>,
    %c16_i32_78 = arith.constant 16 : i32
    %123 = tpu.dynamic_rotate %116 by %c16_i32_78 dim 1 : vector<16x512xf32>, i32 -> vector<16x512xf32>
    %c1_79 = arith.constant 1 : index
    %c0_80 = arith.constant 0 : index
    %124 = vector.load %arg3[%c1_79, %c0_80] : memref<9x512xf32, #tpu.memory_space<vmem>>, vector<1x512xf32>
    %125 = vector.broadcast %124 : vector<1x512xf32> to vector<16x512xf32>
    %126 = arith.mulf %123, %125 : vector<16x512xf32>
    %127 = arith.truncf %126 : vector<16x512xf32> to vector<16x512xbf16>
    %c16_81 = arith.constant 16 : index
    %c0_82 = arith.constant 0 : index
    %128 = vector.load %arg15[%c16_81, %c0_82] : memref<288x512xbf16, #tpu.memory_space<vmem>>, vector<16x512xbf16>
    tpu.vector_store %arg15[%c16_81, %c0_82], %127 {strides = array<i32>} : memref<288x512xbf16, #tpu.memory_space<vmem>>, vector<16x512xbf16>,
    %c15_i32_83 = arith.constant 15 : i32
    %129 = tpu.dynamic_rotate %116 by %c15_i32_83 dim 1 : vector<16x512xf32>, i32 -> vector<16x512xf32>
    %c2_84 = arith.constant 2 : index
    %c0_85 = arith.constant 0 : index
    %130 = vector.load %arg3[%c2_84, %c0_85] : memref<9x512xf32, #tpu.memory_space<vmem>>, vector<1x512xf32>
    %131 = vector.broadcast %130 : vector<1x512xf32> to vector<16x512xf32>
    %132 = arith.mulf %129, %131 : vector<16x512xf32>
    %133 = arith.truncf %132 : vector<16x512xf32> to vector<16x512xbf16>
    %c32_86 = arith.constant 32 : index
    %c0_87 = arith.constant 0 : index
    %134 = vector.load %arg15[%c32_86, %c0_87] : memref<288x512xbf16, #tpu.memory_space<vmem>>, vector<16x512xbf16>
    tpu.vector_store %arg15[%c32_86, %c0_87], %133 {strides = array<i32>} : memref<288x512xbf16, #tpu.memory_space<vmem>>, vector<16x512xbf16>,
    %c1_i32_88 = arith.constant 1 : i32
    %135 = tpu.dynamic_rotate %116 by %c1_i32_88 dim 1 : vector<16x512xf32>, i32 -> vector<16x512xf32>
    %c3_89 = arith.constant 3 : index
    %c0_90 = arith.constant 0 : index
    %136 = vector.load %arg3[%c3_89, %c0_90] : memref<9x512xf32, #tpu.memory_space<vmem>>, vector<1x512xf32>
    %137 = vector.broadcast %136 : vector<1x512xf32> to vector<16x512xf32>
    %138 = arith.mulf %135, %137 : vector<16x512xf32>
    %139 = arith.truncf %138 : vector<16x512xf32> to vector<16x512xbf16>
    %c48_91 = arith.constant 48 : index
    %c0_92 = arith.constant 0 : index
    %140 = vector.load %arg15[%c48_91, %c0_92] : memref<288x512xbf16, #tpu.memory_space<vmem>>, vector<16x512xbf16>
    tpu.vector_store %arg15[%c48_91, %c0_92], %139 {strides = array<i32>} : memref<288x512xbf16, #tpu.memory_space<vmem>>, vector<16x512xbf16>,
    %141 = arith.truncf %116 : vector<16x512xf32> to vector<16x512xbf16>
    %c64_93 = arith.constant 64 : index
    %c0_94 = arith.constant 0 : index
    %142 = vector.load %arg15[%c64_93, %c0_94] : memref<288x512xbf16, #tpu.memory_space<vmem>>, vector<16x512xbf16>
    tpu.vector_store %arg15[%c64_93, %c0_94], %141 {strides = array<i32>} : memref<288x512xbf16, #tpu.memory_space<vmem>>, vector<16x512xbf16>,
    %c511_i32_95 = arith.constant 511 : i32
    %143 = tpu.dynamic_rotate %116 by %c511_i32_95 dim 1 : vector<16x512xf32>, i32 -> vector<16x512xf32>
    %c5_96 = arith.constant 5 : index
    %c0_97 = arith.constant 0 : index
    %144 = vector.load %arg3[%c5_96, %c0_97] : memref<9x512xf32, #tpu.memory_space<vmem>>, vector<1x512xf32>
    %145 = vector.broadcast %144 : vector<1x512xf32> to vector<16x512xf32>
    %146 = arith.mulf %143, %145 : vector<16x512xf32>
    %147 = arith.truncf %146 : vector<16x512xf32> to vector<16x512xbf16>
    %c80_98 = arith.constant 80 : index
    %c0_99 = arith.constant 0 : index
    %148 = vector.load %arg15[%c80_98, %c0_99] : memref<288x512xbf16, #tpu.memory_space<vmem>>, vector<16x512xbf16>
    tpu.vector_store %arg15[%c80_98, %c0_99], %147 {strides = array<i32>} : memref<288x512xbf16, #tpu.memory_space<vmem>>, vector<16x512xbf16>,
    %c497_i32_100 = arith.constant 497 : i32
    %149 = tpu.dynamic_rotate %116 by %c497_i32_100 dim 1 : vector<16x512xf32>, i32 -> vector<16x512xf32>
    %c6_101 = arith.constant 6 : index
    %c0_102 = arith.constant 0 : index
    %150 = vector.load %arg3[%c6_101, %c0_102] : memref<9x512xf32, #tpu.memory_space<vmem>>, vector<1x512xf32>
    %151 = vector.broadcast %150 : vector<1x512xf32> to vector<16x512xf32>
    %152 = arith.mulf %149, %151 : vector<16x512xf32>
    %153 = arith.truncf %152 : vector<16x512xf32> to vector<16x512xbf16>
    %c96_103 = arith.constant 96 : index
    %c0_104 = arith.constant 0 : index
    %154 = vector.load %arg15[%c96_103, %c0_104] : memref<288x512xbf16, #tpu.memory_space<vmem>>, vector<16x512xbf16>
    tpu.vector_store %arg15[%c96_103, %c0_104], %153 {strides = array<i32>} : memref<288x512xbf16, #tpu.memory_space<vmem>>, vector<16x512xbf16>,
    %c496_i32_105 = arith.constant 496 : i32
    %155 = tpu.dynamic_rotate %116 by %c496_i32_105 dim 1 : vector<16x512xf32>, i32 -> vector<16x512xf32>
    %c7_106 = arith.constant 7 : index
    %c0_107 = arith.constant 0 : index
    %156 = vector.load %arg3[%c7_106, %c0_107] : memref<9x512xf32, #tpu.memory_space<vmem>>, vector<1x512xf32>
    %157 = vector.broadcast %156 : vector<1x512xf32> to vector<16x512xf32>
    %158 = arith.mulf %155, %157 : vector<16x512xf32>
    %159 = arith.truncf %158 : vector<16x512xf32> to vector<16x512xbf16>
    %c112_108 = arith.constant 112 : index
    %c0_109 = arith.constant 0 : index
    %160 = vector.load %arg15[%c112_108, %c0_109] : memref<288x512xbf16, #tpu.memory_space<vmem>>, vector<16x512xbf16>
    tpu.vector_store %arg15[%c112_108, %c0_109], %159 {strides = array<i32>} : memref<288x512xbf16, #tpu.memory_space<vmem>>, vector<16x512xbf16>,
    %c495_i32_110 = arith.constant 495 : i32
    %161 = tpu.dynamic_rotate %116 by %c495_i32_110 dim 1 : vector<16x512xf32>, i32 -> vector<16x512xf32>
    %c8_111 = arith.constant 8 : index
    %c0_112 = arith.constant 0 : index
    %162 = vector.load %arg3[%c8_111, %c0_112] : memref<9x512xf32, #tpu.memory_space<vmem>>, vector<1x512xf32>
    %163 = vector.broadcast %162 : vector<1x512xf32> to vector<16x512xf32>
    %164 = arith.mulf %161, %163 : vector<16x512xf32>
    %165 = arith.truncf %164 : vector<16x512xf32> to vector<16x512xbf16>
    %c128_113 = arith.constant 128 : index
    %c0_114 = arith.constant 0 : index
    %166 = vector.load %arg15[%c128_113, %c0_114] : memref<288x512xbf16, #tpu.memory_space<vmem>>, vector<16x512xbf16>
    tpu.vector_store %arg15[%c128_113, %c0_114], %165 {strides = array<i32>} : memref<288x512xbf16, #tpu.memory_space<vmem>>, vector<16x512xbf16>,
    %c0_115 = arith.constant 0 : index
    %c0_116 = arith.constant 0 : index
    %167 = vector.load %arg6[%c0_115, %c0_116] : memref<16x144xbf16, #tpu.memory_space<vmem>>, vector<16x144xbf16>
    %c0_117 = arith.constant 0 : index
    %c0_118 = arith.constant 0 : index
    %168 = vector.load %arg15[%c0_117, %c0_118] : memref<288x512xbf16, #tpu.memory_space<vmem>>, vector<144x512xbf16>
    %cst_119 = arith.constant dense<0.000000e+00> : vector<16x512xf32>
    %169 = tpu.matmul %167, %168, %cst_119 {dimension_numbers = #tpu.dot_dimension_numbers<[1], [0], [0], [1], [0, 0, 1, 1], [], []>} : vector<16x144xbf16>, vector<144x512xbf16>, vector<16x512xf32> -> vector<16x512xf32>
    %c0_120 = arith.constant 0 : index
    %c0_121 = arith.constant 0 : index
    %170 = vector.load %arg11[%c0_120, %c0_121] : memref<16x1xf32, #tpu.memory_space<vmem>>, vector<16x1xf32>
    %171 = vector.broadcast %170 : vector<16x1xf32> to vector<16x512xf32>
    %172 = arith.addf %169, %171 : vector<16x512xf32>
    %cst_122 = arith.constant 0.000000e+00 : f32
    %173 = vector.broadcast %cst_122 : f32 to vector<16x512xf32>
    %174 = arith.maximumf %172, %173 : vector<16x512xf32>
    %c17_i32_123 = arith.constant 17 : i32
    %175 = tpu.dynamic_rotate %174 by %c17_i32_123 dim 1 : vector<16x512xf32>, i32 -> vector<16x512xf32>
    %c0_124 = arith.constant 0 : index
    %c0_125 = arith.constant 0 : index
    %176 = vector.load %arg3[%c0_124, %c0_125] : memref<9x512xf32, #tpu.memory_space<vmem>>, vector<1x512xf32>
    %177 = vector.broadcast %176 : vector<1x512xf32> to vector<16x512xf32>
    %178 = arith.mulf %175, %177 : vector<16x512xf32>
    %179 = arith.truncf %178 : vector<16x512xf32> to vector<16x512xbf16>
    %c0_126 = arith.constant 0 : index
    %c0_127 = arith.constant 0 : index
    %180 = vector.load %arg15[%c0_126, %c0_127] : memref<288x512xbf16, #tpu.memory_space<vmem>>, vector<16x512xbf16>
    tpu.vector_store %arg15[%c0_126, %c0_127], %179 {strides = array<i32>} : memref<288x512xbf16, #tpu.memory_space<vmem>>, vector<16x512xbf16>,
    %c16_i32_128 = arith.constant 16 : i32
    %181 = tpu.dynamic_rotate %174 by %c16_i32_128 dim 1 : vector<16x512xf32>, i32 -> vector<16x512xf32>
    %c1_129 = arith.constant 1 : index
    %c0_130 = arith.constant 0 : index
    %182 = vector.load %arg3[%c1_129, %c0_130] : memref<9x512xf32, #tpu.memory_space<vmem>>, vector<1x512xf32>
    %183 = vector.broadcast %182 : vector<1x512xf32> to vector<16x512xf32>
    %184 = arith.mulf %181, %183 : vector<16x512xf32>
    %185 = arith.truncf %184 : vector<16x512xf32> to vector<16x512xbf16>
    %c16_131 = arith.constant 16 : index
    %c0_132 = arith.constant 0 : index
    %186 = vector.load %arg15[%c16_131, %c0_132] : memref<288x512xbf16, #tpu.memory_space<vmem>>, vector<16x512xbf16>
    tpu.vector_store %arg15[%c16_131, %c0_132], %185 {strides = array<i32>} : memref<288x512xbf16, #tpu.memory_space<vmem>>, vector<16x512xbf16>,
    %c15_i32_133 = arith.constant 15 : i32
    %187 = tpu.dynamic_rotate %174 by %c15_i32_133 dim 1 : vector<16x512xf32>, i32 -> vector<16x512xf32>
    %c2_134 = arith.constant 2 : index
    %c0_135 = arith.constant 0 : index
    %188 = vector.load %arg3[%c2_134, %c0_135] : memref<9x512xf32, #tpu.memory_space<vmem>>, vector<1x512xf32>
    %189 = vector.broadcast %188 : vector<1x512xf32> to vector<16x512xf32>
    %190 = arith.mulf %187, %189 : vector<16x512xf32>
    %191 = arith.truncf %190 : vector<16x512xf32> to vector<16x512xbf16>
    %c32_136 = arith.constant 32 : index
    %c0_137 = arith.constant 0 : index
    %192 = vector.load %arg15[%c32_136, %c0_137] : memref<288x512xbf16, #tpu.memory_space<vmem>>, vector<16x512xbf16>
    tpu.vector_store %arg15[%c32_136, %c0_137], %191 {strides = array<i32>} : memref<288x512xbf16, #tpu.memory_space<vmem>>, vector<16x512xbf16>,
    %c1_i32_138 = arith.constant 1 : i32
    %193 = tpu.dynamic_rotate %174 by %c1_i32_138 dim 1 : vector<16x512xf32>, i32 -> vector<16x512xf32>
    %c3_139 = arith.constant 3 : index
    %c0_140 = arith.constant 0 : index
    %194 = vector.load %arg3[%c3_139, %c0_140] : memref<9x512xf32, #tpu.memory_space<vmem>>, vector<1x512xf32>
    %195 = vector.broadcast %194 : vector<1x512xf32> to vector<16x512xf32>
    %196 = arith.mulf %193, %195 : vector<16x512xf32>
    %197 = arith.truncf %196 : vector<16x512xf32> to vector<16x512xbf16>
    %c48_141 = arith.constant 48 : index
    %c0_142 = arith.constant 0 : index
    %198 = vector.load %arg15[%c48_141, %c0_142] : memref<288x512xbf16, #tpu.memory_space<vmem>>, vector<16x512xbf16>
    tpu.vector_store %arg15[%c48_141, %c0_142], %197 {strides = array<i32>} : memref<288x512xbf16, #tpu.memory_space<vmem>>, vector<16x512xbf16>,
    %199 = arith.truncf %174 : vector<16x512xf32> to vector<16x512xbf16>
    %c64_143 = arith.constant 64 : index
    %c0_144 = arith.constant 0 : index
    %200 = vector.load %arg15[%c64_143, %c0_144] : memref<288x512xbf16, #tpu.memory_space<vmem>>, vector<16x512xbf16>
    tpu.vector_store %arg15[%c64_143, %c0_144], %199 {strides = array<i32>} : memref<288x512xbf16, #tpu.memory_space<vmem>>, vector<16x512xbf16>,
    %c511_i32_145 = arith.constant 511 : i32
    %201 = tpu.dynamic_rotate %174 by %c511_i32_145 dim 1 : vector<16x512xf32>, i32 -> vector<16x512xf32>
    %c5_146 = arith.constant 5 : index
    %c0_147 = arith.constant 0 : index
    %202 = vector.load %arg3[%c5_146, %c0_147] : memref<9x512xf32, #tpu.memory_space<vmem>>, vector<1x512xf32>
    %203 = vector.broadcast %202 : vector<1x512xf32> to vector<16x512xf32>
    %204 = arith.mulf %201, %203 : vector<16x512xf32>
    %205 = arith.truncf %204 : vector<16x512xf32> to vector<16x512xbf16>
    %c80_148 = arith.constant 80 : index
    %c0_149 = arith.constant 0 : index
    %206 = vector.load %arg15[%c80_148, %c0_149] : memref<288x512xbf16, #tpu.memory_space<vmem>>, vector<16x512xbf16>
    tpu.vector_store %arg15[%c80_148, %c0_149], %205 {strides = array<i32>} : memref<288x512xbf16, #tpu.memory_space<vmem>>, vector<16x512xbf16>,
    %c497_i32_150 = arith.constant 497 : i32
    %207 = tpu.dynamic_rotate %174 by %c497_i32_150 dim 1 : vector<16x512xf32>, i32 -> vector<16x512xf32>
    %c6_151 = arith.constant 6 : index
    %c0_152 = arith.constant 0 : index
    %208 = vector.load %arg3[%c6_151, %c0_152] : memref<9x512xf32, #tpu.memory_space<vmem>>, vector<1x512xf32>
    %209 = vector.broadcast %208 : vector<1x512xf32> to vector<16x512xf32>
    %210 = arith.mulf %207, %209 : vector<16x512xf32>
    %211 = arith.truncf %210 : vector<16x512xf32> to vector<16x512xbf16>
    %c96_153 = arith.constant 96 : index
    %c0_154 = arith.constant 0 : index
    %212 = vector.load %arg15[%c96_153, %c0_154] : memref<288x512xbf16, #tpu.memory_space<vmem>>, vector<16x512xbf16>
    tpu.vector_store %arg15[%c96_153, %c0_154], %211 {strides = array<i32>} : memref<288x512xbf16, #tpu.memory_space<vmem>>, vector<16x512xbf16>,
    %c496_i32_155 = arith.constant 496 : i32
    %213 = tpu.dynamic_rotate %174 by %c496_i32_155 dim 1 : vector<16x512xf32>, i32 -> vector<16x512xf32>
    %c7_156 = arith.constant 7 : index
    %c0_157 = arith.constant 0 : index
    %214 = vector.load %arg3[%c7_156, %c0_157] : memref<9x512xf32, #tpu.memory_space<vmem>>, vector<1x512xf32>
    %215 = vector.broadcast %214 : vector<1x512xf32> to vector<16x512xf32>
    %216 = arith.mulf %213, %215 : vector<16x512xf32>
    %217 = arith.truncf %216 : vector<16x512xf32> to vector<16x512xbf16>
    %c112_158 = arith.constant 112 : index
    %c0_159 = arith.constant 0 : index
    %218 = vector.load %arg15[%c112_158, %c0_159] : memref<288x512xbf16, #tpu.memory_space<vmem>>, vector<16x512xbf16>
    tpu.vector_store %arg15[%c112_158, %c0_159], %217 {strides = array<i32>} : memref<288x512xbf16, #tpu.memory_space<vmem>>, vector<16x512xbf16>,
    %c495_i32_160 = arith.constant 495 : i32
    %219 = tpu.dynamic_rotate %174 by %c495_i32_160 dim 1 : vector<16x512xf32>, i32 -> vector<16x512xf32>
    %c8_161 = arith.constant 8 : index
    %c0_162 = arith.constant 0 : index
    %220 = vector.load %arg3[%c8_161, %c0_162] : memref<9x512xf32, #tpu.memory_space<vmem>>, vector<1x512xf32>
    %221 = vector.broadcast %220 : vector<1x512xf32> to vector<16x512xf32>
    %222 = arith.mulf %219, %221 : vector<16x512xf32>
    %223 = arith.truncf %222 : vector<16x512xf32> to vector<16x512xbf16>
    %c128_163 = arith.constant 128 : index
    %c0_164 = arith.constant 0 : index
    %224 = vector.load %arg15[%c128_163, %c0_164] : memref<288x512xbf16, #tpu.memory_space<vmem>>, vector<16x512xbf16>
    tpu.vector_store %arg15[%c128_163, %c0_164], %223 {strides = array<i32>} : memref<288x512xbf16, #tpu.memory_space<vmem>>, vector<16x512xbf16>,
    %c0_165 = arith.constant 0 : index
    %c0_166 = arith.constant 0 : index
    %225 = vector.load %arg7[%c0_165, %c0_166] : memref<16x144xbf16, #tpu.memory_space<vmem>>, vector<16x144xbf16>
    %c0_167 = arith.constant 0 : index
    %c0_168 = arith.constant 0 : index
    %226 = vector.load %arg15[%c0_167, %c0_168] : memref<288x512xbf16, #tpu.memory_space<vmem>>, vector<144x512xbf16>
    %cst_169 = arith.constant dense<0.000000e+00> : vector<16x512xf32>
    %227 = tpu.matmul %225, %226, %cst_169 {dimension_numbers = #tpu.dot_dimension_numbers<[1], [0], [0], [1], [0, 0, 1, 1], [], []>} : vector<16x144xbf16>, vector<144x512xbf16>, vector<16x512xf32> -> vector<16x512xf32>
    %c0_170 = arith.constant 0 : index
    %c0_171 = arith.constant 0 : index
    %228 = vector.load %arg12[%c0_170, %c0_171] : memref<16x1xf32, #tpu.memory_space<vmem>>, vector<16x1xf32>
    %229 = vector.broadcast %228 : vector<16x1xf32> to vector<16x512xf32>
    %230 = arith.addf %227, %229 : vector<16x512xf32>
    %cst_172 = arith.constant 0.000000e+00 : f32
    %231 = vector.broadcast %cst_172 : f32 to vector<16x512xf32>
    %232 = arith.maximumf %230, %231 : vector<16x512xf32>
    %c17_i32_173 = arith.constant 17 : i32
    %233 = tpu.dynamic_rotate %232 by %c17_i32_173 dim 1 : vector<16x512xf32>, i32 -> vector<16x512xf32>
    %c0_174 = arith.constant 0 : index
    %c0_175 = arith.constant 0 : index
    %234 = vector.load %arg3[%c0_174, %c0_175] : memref<9x512xf32, #tpu.memory_space<vmem>>, vector<1x512xf32>
    %235 = vector.broadcast %234 : vector<1x512xf32> to vector<16x512xf32>
    %236 = arith.mulf %233, %235 : vector<16x512xf32>
    %237 = arith.truncf %236 : vector<16x512xf32> to vector<16x512xbf16>
    %c0_176 = arith.constant 0 : index
    %c0_177 = arith.constant 0 : index
    %238 = vector.load %arg15[%c0_176, %c0_177] : memref<288x512xbf16, #tpu.memory_space<vmem>>, vector<16x512xbf16>
    tpu.vector_store %arg15[%c0_176, %c0_177], %237 {strides = array<i32>} : memref<288x512xbf16, #tpu.memory_space<vmem>>, vector<16x512xbf16>,
    %c16_i32_178 = arith.constant 16 : i32
    %239 = tpu.dynamic_rotate %232 by %c16_i32_178 dim 1 : vector<16x512xf32>, i32 -> vector<16x512xf32>
    %c1_179 = arith.constant 1 : index
    %c0_180 = arith.constant 0 : index
    %240 = vector.load %arg3[%c1_179, %c0_180] : memref<9x512xf32, #tpu.memory_space<vmem>>, vector<1x512xf32>
    %241 = vector.broadcast %240 : vector<1x512xf32> to vector<16x512xf32>
    %242 = arith.mulf %239, %241 : vector<16x512xf32>
    %243 = arith.truncf %242 : vector<16x512xf32> to vector<16x512xbf16>
    %c16_181 = arith.constant 16 : index
    %c0_182 = arith.constant 0 : index
    %244 = vector.load %arg15[%c16_181, %c0_182] : memref<288x512xbf16, #tpu.memory_space<vmem>>, vector<16x512xbf16>
    tpu.vector_store %arg15[%c16_181, %c0_182], %243 {strides = array<i32>} : memref<288x512xbf16, #tpu.memory_space<vmem>>, vector<16x512xbf16>,
    %c15_i32_183 = arith.constant 15 : i32
    %245 = tpu.dynamic_rotate %232 by %c15_i32_183 dim 1 : vector<16x512xf32>, i32 -> vector<16x512xf32>
    %c2_184 = arith.constant 2 : index
    %c0_185 = arith.constant 0 : index
    %246 = vector.load %arg3[%c2_184, %c0_185] : memref<9x512xf32, #tpu.memory_space<vmem>>, vector<1x512xf32>
    %247 = vector.broadcast %246 : vector<1x512xf32> to vector<16x512xf32>
    %248 = arith.mulf %245, %247 : vector<16x512xf32>
    %249 = arith.truncf %248 : vector<16x512xf32> to vector<16x512xbf16>
    %c32_186 = arith.constant 32 : index
    %c0_187 = arith.constant 0 : index
    %250 = vector.load %arg15[%c32_186, %c0_187] : memref<288x512xbf16, #tpu.memory_space<vmem>>, vector<16x512xbf16>
    tpu.vector_store %arg15[%c32_186, %c0_187], %249 {strides = array<i32>} : memref<288x512xbf16, #tpu.memory_space<vmem>>, vector<16x512xbf16>,
    %c1_i32_188 = arith.constant 1 : i32
    %251 = tpu.dynamic_rotate %232 by %c1_i32_188 dim 1 : vector<16x512xf32>, i32 -> vector<16x512xf32>
    %c3_189 = arith.constant 3 : index
    %c0_190 = arith.constant 0 : index
    %252 = vector.load %arg3[%c3_189, %c0_190] : memref<9x512xf32, #tpu.memory_space<vmem>>, vector<1x512xf32>
    %253 = vector.broadcast %252 : vector<1x512xf32> to vector<16x512xf32>
    %254 = arith.mulf %251, %253 : vector<16x512xf32>
    %255 = arith.truncf %254 : vector<16x512xf32> to vector<16x512xbf16>
    %c48_191 = arith.constant 48 : index
    %c0_192 = arith.constant 0 : index
    %256 = vector.load %arg15[%c48_191, %c0_192] : memref<288x512xbf16, #tpu.memory_space<vmem>>, vector<16x512xbf16>
    tpu.vector_store %arg15[%c48_191, %c0_192], %255 {strides = array<i32>} : memref<288x512xbf16, #tpu.memory_space<vmem>>, vector<16x512xbf16>,
    %257 = arith.truncf %232 : vector<16x512xf32> to vector<16x512xbf16>
    %c64_193 = arith.constant 64 : index
    %c0_194 = arith.constant 0 : index
    %258 = vector.load %arg15[%c64_193, %c0_194] : memref<288x512xbf16, #tpu.memory_space<vmem>>, vector<16x512xbf16>
    tpu.vector_store %arg15[%c64_193, %c0_194], %257 {strides = array<i32>} : memref<288x512xbf16, #tpu.memory_space<vmem>>, vector<16x512xbf16>,
    %c511_i32_195 = arith.constant 511 : i32
    %259 = tpu.dynamic_rotate %232 by %c511_i32_195 dim 1 : vector<16x512xf32>, i32 -> vector<16x512xf32>
    %c5_196 = arith.constant 5 : index
    %c0_197 = arith.constant 0 : index
    %260 = vector.load %arg3[%c5_196, %c0_197] : memref<9x512xf32, #tpu.memory_space<vmem>>, vector<1x512xf32>
    %261 = vector.broadcast %260 : vector<1x512xf32> to vector<16x512xf32>
    %262 = arith.mulf %259, %261 : vector<16x512xf32>
    %263 = arith.truncf %262 : vector<16x512xf32> to vector<16x512xbf16>
    %c80_198 = arith.constant 80 : index
    %c0_199 = arith.constant 0 : index
    %264 = vector.load %arg15[%c80_198, %c0_199] : memref<288x512xbf16, #tpu.memory_space<vmem>>, vector<16x512xbf16>
    tpu.vector_store %arg15[%c80_198, %c0_199], %263 {strides = array<i32>} : memref<288x512xbf16, #tpu.memory_space<vmem>>, vector<16x512xbf16>,
    %c497_i32_200 = arith.constant 497 : i32
    %265 = tpu.dynamic_rotate %232 by %c497_i32_200 dim 1 : vector<16x512xf32>, i32 -> vector<16x512xf32>
    %c6_201 = arith.constant 6 : index
    %c0_202 = arith.constant 0 : index
    %266 = vector.load %arg3[%c6_201, %c0_202] : memref<9x512xf32, #tpu.memory_space<vmem>>, vector<1x512xf32>
    %267 = vector.broadcast %266 : vector<1x512xf32> to vector<16x512xf32>
    %268 = arith.mulf %265, %267 : vector<16x512xf32>
    %269 = arith.truncf %268 : vector<16x512xf32> to vector<16x512xbf16>
    %c96_203 = arith.constant 96 : index
    %c0_204 = arith.constant 0 : index
    %270 = vector.load %arg15[%c96_203, %c0_204] : memref<288x512xbf16, #tpu.memory_space<vmem>>, vector<16x512xbf16>
    tpu.vector_store %arg15[%c96_203, %c0_204], %269 {strides = array<i32>} : memref<288x512xbf16, #tpu.memory_space<vmem>>, vector<16x512xbf16>,
    %c496_i32_205 = arith.constant 496 : i32
    %271 = tpu.dynamic_rotate %232 by %c496_i32_205 dim 1 : vector<16x512xf32>, i32 -> vector<16x512xf32>
    %c7_206 = arith.constant 7 : index
    %c0_207 = arith.constant 0 : index
    %272 = vector.load %arg3[%c7_206, %c0_207] : memref<9x512xf32, #tpu.memory_space<vmem>>, vector<1x512xf32>
    %273 = vector.broadcast %272 : vector<1x512xf32> to vector<16x512xf32>
    %274 = arith.mulf %271, %273 : vector<16x512xf32>
    %275 = arith.truncf %274 : vector<16x512xf32> to vector<16x512xbf16>
    %c112_208 = arith.constant 112 : index
    %c0_209 = arith.constant 0 : index
    %276 = vector.load %arg15[%c112_208, %c0_209] : memref<288x512xbf16, #tpu.memory_space<vmem>>, vector<16x512xbf16>
    tpu.vector_store %arg15[%c112_208, %c0_209], %275 {strides = array<i32>} : memref<288x512xbf16, #tpu.memory_space<vmem>>, vector<16x512xbf16>,
    %c495_i32_210 = arith.constant 495 : i32
    %277 = tpu.dynamic_rotate %232 by %c495_i32_210 dim 1 : vector<16x512xf32>, i32 -> vector<16x512xf32>
    %c8_211 = arith.constant 8 : index
    %c0_212 = arith.constant 0 : index
    %278 = vector.load %arg3[%c8_211, %c0_212] : memref<9x512xf32, #tpu.memory_space<vmem>>, vector<1x512xf32>
    %279 = vector.broadcast %278 : vector<1x512xf32> to vector<16x512xf32>
    %280 = arith.mulf %277, %279 : vector<16x512xf32>
    %281 = arith.truncf %280 : vector<16x512xf32> to vector<16x512xbf16>
    %c128_213 = arith.constant 128 : index
    %c0_214 = arith.constant 0 : index
    %282 = vector.load %arg15[%c128_213, %c0_214] : memref<288x512xbf16, #tpu.memory_space<vmem>>, vector<16x512xbf16>
    tpu.vector_store %arg15[%c128_213, %c0_214], %281 {strides = array<i32>} : memref<288x512xbf16, #tpu.memory_space<vmem>>, vector<16x512xbf16>,
    %c0_215 = arith.constant 0 : index
    %c0_216 = arith.constant 0 : index
    %283 = vector.load %arg8[%c0_215, %c0_216] : memref<16x144xbf16, #tpu.memory_space<vmem>>, vector<16x144xbf16>
    %c0_217 = arith.constant 0 : index
    %c0_218 = arith.constant 0 : index
    %284 = vector.load %arg15[%c0_217, %c0_218] : memref<288x512xbf16, #tpu.memory_space<vmem>>, vector<144x512xbf16>
    %cst_219 = arith.constant dense<0.000000e+00> : vector<16x512xf32>
    %285 = tpu.matmul %283, %284, %cst_219 {dimension_numbers = #tpu.dot_dimension_numbers<[1], [0], [0], [1], [0, 0, 1, 1], [], []>} : vector<16x144xbf16>, vector<144x512xbf16>, vector<16x512xf32> -> vector<16x512xf32>
    %c0_220 = arith.constant 0 : index
    %c0_221 = arith.constant 0 : index
    %286 = vector.load %arg13[%c0_220, %c0_221] : memref<16x1xf32, #tpu.memory_space<vmem>>, vector<16x1xf32>
    %287 = vector.broadcast %286 : vector<16x1xf32> to vector<16x512xf32>
    %288 = arith.addf %285, %287 : vector<16x512xf32>
    %289 = tpu.iota {dimensions = array<i32: 1>} : vector<1x128xi32>
    %290 = vector.extract_strided_slice %288 {offsets = [0, 0], sizes = [2, 256], strides = [1, 1]} : vector<16x512xf32> to vector<2x256xf32>
    %cst_222 = arith.constant dense<0xFF800000> : vector<2xf32>
    %291 = vector.multi_reduction <maximumf>, %290, %cst_222 [1] : vector<2x256xf32> to vector<2xf32>
    %292 = vector.shape_cast %291 : vector<2xf32> to vector<2x1xf32>
    %293 = vector.broadcast %292 : vector<2x1xf32> to vector<2x256xf32>
    %294 = arith.subf %290, %293 : vector<2x256xf32>
    %295 = math.exp %294 : vector<2x256xf32>
    %cst_223 = arith.constant dense<0.000000e+00> : vector<2xf32>
    %296 = vector.multi_reduction <add>, %295, %cst_223 [1] : vector<2x256xf32> to vector<2xf32>
    %297 = vector.shape_cast %296 : vector<2xf32> to vector<2x1xf32>
    %298 = tpu.reciprocal %297 {approx = true} : vector<2x1xf32> -> vector<2x1xf32>
    %c0_224 = arith.constant 0 : index
    %c0_225 = arith.constant 0 : index
    %299 = vector.load %arg2[%c0_224, %c0_225] : memref<2x256xf32, #tpu.memory_space<vmem>>, vector<1x256xf32>
    %300 = vector.broadcast %299 : vector<1x256xf32> to vector<2x256xf32>
    %301 = arith.mulf %295, %300 : vector<2x256xf32>
    %cst_226 = arith.constant dense<0.000000e+00> : vector<2xf32>
    %302 = vector.multi_reduction <add>, %301, %cst_226 [1] : vector<2x256xf32> to vector<2xf32>
    %303 = vector.shape_cast %302 : vector<2xf32> to vector<2x1xf32>
    %304 = arith.mulf %303, %298 : vector<2x1xf32>
    %c1_227 = arith.constant 1 : index
    %c0_228 = arith.constant 0 : index
    %305 = vector.load %arg2[%c1_227, %c0_228] : memref<2x256xf32, #tpu.memory_space<vmem>>, vector<1x256xf32>
    %306 = vector.broadcast %305 : vector<1x256xf32> to vector<2x256xf32>
    %307 = arith.mulf %295, %306 : vector<2x256xf32>
    %cst_229 = arith.constant dense<0.000000e+00> : vector<2xf32>
    %308 = vector.multi_reduction <add>, %307, %cst_229 [1] : vector<2x256xf32> to vector<2xf32>
    %309 = vector.shape_cast %308 : vector<2xf32> to vector<2x1xf32>
    %310 = arith.mulf %309, %298 : vector<2x1xf32>
    %311 = vector.extract_strided_slice %304 {offsets = [0, 0], sizes = [1, 1], strides = [1, 1]} : vector<2x1xf32> to vector<1x1xf32>
    %312 = vector.extract_strided_slice %310 {offsets = [0, 0], sizes = [1, 1], strides = [1, 1]} : vector<2x1xf32> to vector<1x1xf32>
    %313 = vector.extract_strided_slice %304 {offsets = [1, 0], sizes = [1, 1], strides = [1, 1]} : vector<2x1xf32> to vector<1x1xf32>
    %314 = vector.extract_strided_slice %310 {offsets = [1, 0], sizes = [1, 1], strides = [1, 1]} : vector<2x1xf32> to vector<1x1xf32>
    %cst_230 = arith.constant 0.000000e+00 : f32
    %315 = vector.broadcast %cst_230 : f32 to vector<1x128xf32>
    %c0_i32 = arith.constant 0 : i32
    %316 = vector.broadcast %c0_i32 : i32 to vector<1x128xi32>
    %317 = arith.cmpi eq, %289, %316 : vector<1x128xi32>
    %318 = vector.shape_cast %311 : vector<1x1xf32> to vector<1x1xf32>
    %319 = vector.broadcast %318 : vector<1x1xf32> to vector<1x128xf32>
    %320 = arith.select %317, %319, %315 : vector<1x128xi1>, vector<1x128xf32>
    %c1_i32_231 = arith.constant 1 : i32
    %321 = vector.broadcast %c1_i32_231 : i32 to vector<1x128xi32>
    %322 = arith.cmpi eq, %289, %321 : vector<1x128xi32>
    %323 = vector.shape_cast %312 : vector<1x1xf32> to vector<1x1xf32>
    %324 = vector.broadcast %323 : vector<1x1xf32> to vector<1x128xf32>
    %325 = arith.select %322, %324, %320 : vector<1x128xi1>, vector<1x128xf32>
    %c2_i32 = arith.constant 2 : i32
    %326 = vector.broadcast %c2_i32 : i32 to vector<1x128xi32>
    %327 = arith.cmpi eq, %289, %326 : vector<1x128xi32>
    %328 = vector.shape_cast %313 : vector<1x1xf32> to vector<1x1xf32>
    %329 = vector.broadcast %328 : vector<1x1xf32> to vector<1x128xf32>
    %330 = arith.select %327, %329, %325 : vector<1x128xi1>, vector<1x128xf32>
    %c3_i32 = arith.constant 3 : i32
    %331 = vector.broadcast %c3_i32 : i32 to vector<1x128xi32>
    %332 = arith.cmpi eq, %289, %331 : vector<1x128xi32>
    %333 = vector.shape_cast %314 : vector<1x1xf32> to vector<1x1xf32>
    %334 = vector.broadcast %333 : vector<1x1xf32> to vector<1x128xf32>
    %335 = arith.select %332, %334, %330 : vector<1x128xi1>, vector<1x128xf32>
    %cst_232 = arith.constant 3.906250e-03 : f32
    %336 = vector.broadcast %cst_232 : f32 to vector<1x128xf32>
    %337 = arith.mulf %335, %336 : vector<1x128xf32>
    %338 = vector.extract_strided_slice %288 {offsets = [0, 256], sizes = [2, 256], strides = [1, 1]} : vector<16x512xf32> to vector<2x256xf32>
    %cst_233 = arith.constant dense<0xFF800000> : vector<2xf32>
    %339 = vector.multi_reduction <maximumf>, %338, %cst_233 [1] : vector<2x256xf32> to vector<2xf32>
    %340 = vector.shape_cast %339 : vector<2xf32> to vector<2x1xf32>
    %341 = vector.broadcast %340 : vector<2x1xf32> to vector<2x256xf32>
    %342 = arith.subf %338, %341 : vector<2x256xf32>
    %343 = math.exp %342 : vector<2x256xf32>
    %cst_234 = arith.constant dense<0.000000e+00> : vector<2xf32>
    %344 = vector.multi_reduction <add>, %343, %cst_234 [1] : vector<2x256xf32> to vector<2xf32>
    %345 = vector.shape_cast %344 : vector<2xf32> to vector<2x1xf32>
    %346 = tpu.reciprocal %345 {approx = true} : vector<2x1xf32> -> vector<2x1xf32>
    %c0_235 = arith.constant 0 : index
    %c0_236 = arith.constant 0 : index
    %347 = vector.load %arg2[%c0_235, %c0_236] : memref<2x256xf32, #tpu.memory_space<vmem>>, vector<1x256xf32>
    %348 = vector.broadcast %347 : vector<1x256xf32> to vector<2x256xf32>
    %349 = arith.mulf %343, %348 : vector<2x256xf32>
    %cst_237 = arith.constant dense<0.000000e+00> : vector<2xf32>
    %350 = vector.multi_reduction <add>, %349, %cst_237 [1] : vector<2x256xf32> to vector<2xf32>
    %351 = vector.shape_cast %350 : vector<2xf32> to vector<2x1xf32>
    %352 = arith.mulf %351, %346 : vector<2x1xf32>
    %c1_238 = arith.constant 1 : index
    %c0_239 = arith.constant 0 : index
    %353 = vector.load %arg2[%c1_238, %c0_239] : memref<2x256xf32, #tpu.memory_space<vmem>>, vector<1x256xf32>
    %354 = vector.broadcast %353 : vector<1x256xf32> to vector<2x256xf32>
    %355 = arith.mulf %343, %354 : vector<2x256xf32>
    %cst_240 = arith.constant dense<0.000000e+00> : vector<2xf32>
    %356 = vector.multi_reduction <add>, %355, %cst_240 [1] : vector<2x256xf32> to vector<2xf32>
    %357 = vector.shape_cast %356 : vector<2xf32> to vector<2x1xf32>
    %358 = arith.mulf %357, %346 : vector<2x1xf32>
    %359 = vector.extract_strided_slice %352 {offsets = [0, 0], sizes = [1, 1], strides = [1, 1]} : vector<2x1xf32> to vector<1x1xf32>
    %360 = vector.extract_strided_slice %358 {offsets = [0, 0], sizes = [1, 1], strides = [1, 1]} : vector<2x1xf32> to vector<1x1xf32>
    %361 = vector.extract_strided_slice %352 {offsets = [1, 0], sizes = [1, 1], strides = [1, 1]} : vector<2x1xf32> to vector<1x1xf32>
    %362 = vector.extract_strided_slice %358 {offsets = [1, 0], sizes = [1, 1], strides = [1, 1]} : vector<2x1xf32> to vector<1x1xf32>
    %cst_241 = arith.constant 0.000000e+00 : f32
    %363 = vector.broadcast %cst_241 : f32 to vector<1x128xf32>
    %c0_i32_242 = arith.constant 0 : i32
    %364 = vector.broadcast %c0_i32_242 : i32 to vector<1x128xi32>
    %365 = arith.cmpi eq, %289, %364 : vector<1x128xi32>
    %366 = vector.shape_cast %359 : vector<1x1xf32> to vector<1x1xf32>
    %367 = vector.broadcast %366 : vector<1x1xf32> to vector<1x128xf32>
    %368 = arith.select %365, %367, %363 : vector<1x128xi1>, vector<1x128xf32>
    %c1_i32_243 = arith.constant 1 : i32
    %369 = vector.broadcast %c1_i32_243 : i32 to vector<1x128xi32>
    %370 = arith.cmpi eq, %289, %369 : vector<1x128xi32>
    %371 = vector.shape_cast %360 : vector<1x1xf32> to vector<1x1xf32>
    %372 = vector.broadcast %371 : vector<1x1xf32> to vector<1x128xf32>
    %373 = arith.select %370, %372, %368 : vector<1x128xi1>, vector<1x128xf32>
    %c2_i32_244 = arith.constant 2 : i32
    %374 = vector.broadcast %c2_i32_244 : i32 to vector<1x128xi32>
    %375 = arith.cmpi eq, %289, %374 : vector<1x128xi32>
    %376 = vector.shape_cast %361 : vector<1x1xf32> to vector<1x1xf32>
    %377 = vector.broadcast %376 : vector<1x1xf32> to vector<1x128xf32>
    %378 = arith.select %375, %377, %373 : vector<1x128xi1>, vector<1x128xf32>
    %c3_i32_245 = arith.constant 3 : i32
    %379 = vector.broadcast %c3_i32_245 : i32 to vector<1x128xi32>
    %380 = arith.cmpi eq, %289, %379 : vector<1x128xi32>
    %381 = vector.shape_cast %362 : vector<1x1xf32> to vector<1x1xf32>
    %382 = vector.broadcast %381 : vector<1x1xf32> to vector<1x128xf32>
    %383 = arith.select %380, %382, %378 : vector<1x128xi1>, vector<1x128xf32>
    %cst_246 = arith.constant 3.906250e-03 : f32
    %384 = vector.broadcast %cst_246 : f32 to vector<1x128xf32>
    %385 = arith.mulf %383, %384 : vector<1x128xf32>
    %cst_247 = arith.constant 0.000000e+00 : f32
    %386 = vector.broadcast %cst_247 : f32 to vector<6x128xf32>
    %387 = tpu.concatenate %337, %385, %386 in 0 : vector<1x128xf32>, vector<1x128xf32>, vector<6x128xf32> -> vector<8x128xf32>
    %c0_248 = arith.constant 0 : index
    %c0_249 = arith.constant 0 : index
    %c0_250 = arith.constant 0 : index
    %388 = vector.load %arg14[%c0_248, %c0_249, %c0_250] : memref<1x8x128xf32, #tpu.memory_space<vmem>>, vector<1x8x128xf32>
    %389 = vector.shape_cast %388 : vector<1x8x128xf32> to vector<8x128xf32>
    %390 = vector.shape_cast %387 : vector<8x128xf32> to vector<1x8x128xf32>
    tpu.vector_store %arg14[%c0_248, %c0_249, %c0_250], %390 {strides = array<i32>} : memref<1x8x128xf32, #tpu.memory_space<vmem>>, vector<1x8x128xf32>,
    return
  }
  func.func @transform_0(%arg0: i32) -> (i32, i32) {
    %c0_i32 = arith.constant 0 : i32
    %c0_i32_0 = arith.constant 0 : i32
    return %c0_i32, %arg0 : i32, i32
  }
  func.func @transform_1(%arg0: i32) -> (i32, i32) {
    %c0_i32 = arith.constant 0 : i32
    %c0_i32_0 = arith.constant 0 : i32
    %c0_i32_1 = arith.constant 0 : i32
    return %c0_i32, %c0_i32_0 : i32, i32
  }
  func.func @transform_2(%arg0: i32) -> (i32, i32) {
    %c0_i32 = arith.constant 0 : i32
    %c0_i32_0 = arith.constant 0 : i32
    %c0_i32_1 = arith.constant 0 : i32
    return %c0_i32, %c0_i32_0 : i32, i32
  }
  func.func @transform_3(%arg0: i32) -> (i32, i32) {
    %c0_i32 = arith.constant 0 : i32
    %c0_i32_0 = arith.constant 0 : i32
    %c0_i32_1 = arith.constant 0 : i32
    return %c0_i32, %c0_i32_0 : i32, i32
  }
  func.func @transform_4(%arg0: i32) -> (i32, i32) {
    %c0_i32 = arith.constant 0 : i32
    %c0_i32_0 = arith.constant 0 : i32
    %c0_i32_1 = arith.constant 0 : i32
    return %c0_i32, %c0_i32_0 : i32, i32
  }
  func.func @transform_5(%arg0: i32) -> (i32, i32) {
    %c0_i32 = arith.constant 0 : i32
    %c0_i32_0 = arith.constant 0 : i32
    %c0_i32_1 = arith.constant 0 : i32
    return %c0_i32, %c0_i32_0 : i32, i32
  }
  func.func @transform_6(%arg0: i32) -> (i32, i32) {
    %c0_i32 = arith.constant 0 : i32
    %c0_i32_0 = arith.constant 0 : i32
    %c0_i32_1 = arith.constant 0 : i32
    return %c0_i32, %c0_i32_0 : i32, i32
  }
  func.func @transform_7(%arg0: i32) -> (i32, i32) {
    %c0_i32 = arith.constant 0 : i32
    %c0_i32_0 = arith.constant 0 : i32
    %c0_i32_1 = arith.constant 0 : i32
    return %c0_i32, %c0_i32_0 : i32, i32
  }
  func.func @transform_8(%arg0: i32) -> (i32, i32) {
    %c0_i32 = arith.constant 0 : i32
    %c0_i32_0 = arith.constant 0 : i32
    %c0_i32_1 = arith.constant 0 : i32
    return %c0_i32, %c0_i32_0 : i32, i32
  }
  func.func @transform_9(%arg0: i32) -> (i32, i32) {
    %c0_i32 = arith.constant 0 : i32
    %c0_i32_0 = arith.constant 0 : i32
    %c0_i32_1 = arith.constant 0 : i32
    return %c0_i32, %c0_i32_0 : i32, i32
  }
  func.func @transform_10(%arg0: i32) -> (i32, i32) {
    %c0_i32 = arith.constant 0 : i32
    %c0_i32_0 = arith.constant 0 : i32
    %c0_i32_1 = arith.constant 0 : i32
    return %c0_i32, %c0_i32_0 : i32, i32
  }
  func.func @transform_11(%arg0: i32) -> (i32, i32) {
    %c0_i32 = arith.constant 0 : i32
    %c0_i32_0 = arith.constant 0 : i32
    %c0_i32_1 = arith.constant 0 : i32
    return %c0_i32, %c0_i32_0 : i32, i32
  }
  func.func @transform_12(%arg0: i32) -> (i32, i32) {
    %c0_i32 = arith.constant 0 : i32
    %c0_i32_0 = arith.constant 0 : i32
    %c0_i32_1 = arith.constant 0 : i32
    return %c0_i32, %c0_i32_0 : i32, i32
  }
  func.func @transform_13(%arg0: i32) -> (i32, i32, i32) {
    %c0_i32 = arith.constant 0 : i32
    %c0_i32_0 = arith.constant 0 : i32
    %c0_i32_1 = arith.constant 0 : i32
    return %arg0, %c0_i32, %c0_i32_0 : i32, i32, i32
  }
}

</mosaic_0001>

<llo_original>
// kernel: corner_predictor_lite_forward.1
$region0: #{corner_predictor_lite_forward.1}
  #allocation0 [shape = 'u32[]', space=smem, size = 0x4, offset = 0x4, fixed_abs, tag = 'smem constant byte address 0x4 - core index']
  #allocation1 [shape = 'u32[144,128]{1,0:T(1,128)}', space=vmem, size = 0x12000, scoped, tag = 'internal scratch']
  #allocation2 [shape = 'bf16[288,512]{1,0:T(16,128)(2,1)}', space=vmem, size = 0x48000, scoped, tag = 'scratch operand']
  %s0 = inlined_call_operand.vmem [shape: f32[16,512], index: 0, kind: input, shape index: {}]
  %s1 = inlined_call_operand.vmem [shape: f32[2,256], index: 1, kind: input, shape index: {}]
  %s2 = inlined_call_operand.vmem [shape: f32[9,512], index: 2, kind: input, shape index: {}]
  %s3 = inlined_call_operand.vmem [shape: bf16[32,144], index: 3, kind: input, shape index: {}]
  %s4 = inlined_call_operand.vmem [shape: bf16[16,288], index: 4, kind: input, shape index: {}]
  %s5 = inlined_call_operand.vmem [shape: bf16[16,144], index: 5, kind: input, shape index: {}]
  %s6 = inlined_call_operand.vmem [shape: bf16[16,144], index: 6, kind: input, shape index: {}]
  %s7 = inlined_call_operand.vmem [shape: bf16[16,144], index: 7, kind: input, shape index: {}]
  %s8 = inlined_call_operand.vmem [shape: f32[32,1], index: 8, kind: input, shape index: {}]
  %s9 = inlined_call_operand.vmem [shape: f32[16,1], index: 9, kind: input, shape index: {}]
  %s10 = inlined_call_operand.vmem [shape: f32[16,1], index: 10, kind: input, shape index: {}]
  %s11 = inlined_call_operand.vmem [shape: f32[16,1], index: 11, kind: input, shape index: {}]
  %s12 = inlined_call_operand.vmem [shape: f32[16,1], index: 12, kind: input, shape index: {}]
  %s13 = inlined_call_operand.vmem [shape: f32[1,8,128], index: 13, kind: output, shape index: {}]
  %s14 = sld [smem:[#allocation0]]
  $region62: #{corner_predictor_lite_forward.1} parent=0
    _
  %s16 = ssub.s32 1, %s14
  %s17 = scalar_select 0, %s16, %s14
  // Predicated region
  $region2: #{corner_predictor_lite_forward.1} parent=0 // pred_check
    _
  $region3: #{corner_predictor_lite_forward.1} parent=0 // pred_check_branch
    %19 = sbr.rel (0) target = $region5
  $region4: #{corner_predictor_lite_forward.1} parent=0 // pred_region
    _
  $region5: #{corner_predictor_lite_forward.1} parent=0 // pred_fallthru
    _
  // Predicated region
  $region6: #{corner_predictor_lite_forward.1} parent=0 // pred_check
    _
  $region7: #{corner_predictor_lite_forward.1} parent=0 // pred_check_branch
    %21 = sbr.rel (0) target = $region9
  $region8: #{corner_predictor_lite_forward.1} parent=0 // pred_region
    _
  $region9: #{corner_predictor_lite_forward.1} parent=0 // pred_fallthru
    _
  // Predicated region
  $region10: #{corner_predictor_lite_forward.1} parent=0 // pred_check
    _
  $region11: #{corner_predictor_lite_forward.1} parent=0 // pred_check_branch
    %23 = sbr.rel (0) target = $region13
  $region12: #{corner_predictor_lite_forward.1} parent=0 // pred_region
    _
  $region13: #{corner_predictor_lite_forward.1} parent=0 // pred_fallthru
    _
  // Predicated region
  $region14: #{corner_predictor_lite_forward.1} parent=0 // pred_check
    _
  $region15: #{corner_predictor_lite_forward.1} parent=0 // pred_check_branch
    %25 = sbr.rel (0) target = $region17
  $region16: #{corner_predictor_lite_forward.1} parent=0 // pred_region
    _
  $region17: #{corner_predictor_lite_forward.1} parent=0 // pred_fallthru
    _
  // Predicated region
  $region18: #{corner_predictor_lite_forward.1} parent=0 // pred_check
    _
  $region19: #{corner_predictor_lite_forward.1} parent=0 // pred_check_branch
    %27 = sbr.rel (0) target = $region21
  $region20: #{corner_predictor_lite_forward.1} parent=0 // pred_region
    _
  $region21: #{corner_predictor_lite_forward.1} parent=0 // pred_fallthru
    _
  // Predicated region
  $region22: #{corner_predictor_lite_forward.1} parent=0 // pred_check
    _
  $region23: #{corner_predictor_lite_forward.1} parent=0 // pred_check_branch
    %29 = sbr.rel (0) target = $region25
  $region24: #{corner_predictor_lite_forward.1} parent=0 // pred_region
    _
  $region25: #{corner_predictor_lite_forward.1} parent=0 // pred_fallthru
    _
  // Predicated region
  $region26: #{corner_predictor_lite_forward.1} parent=0 // pred_check
    _
  $region27: #{corner_predictor_lite_forward.1} parent=0 // pred_check_branch
    %31 = sbr.rel (0) target = $region29
  $region28: #{corner_predictor_lite_forward.1} parent=0 // pred_region
    _
  $region29: #{corner_predictor_lite_forward.1} parent=0 // pred_fallthru
    _
  // Predicated region
  $region30: #{corner_predictor_lite_forward.1} parent=0 // pred_check
    _
  $region31: #{corner_predictor_lite_forward.1} parent=0 // pred_check_branch
    %33 = sbr.rel (0) target = $region33
  $region32: #{corner_predictor_lite_forward.1} parent=0 // pred_region
    _
  $region33: #{corner_predictor_lite_forward.1} parent=0 // pred_fallthru
    _
  // Predicated region
  $region34: #{corner_predictor_lite_forward.1} parent=0 // pred_check
    _
  $region35: #{corner_predictor_lite_forward.1} parent=0 // pred_check_branch
    %35 = sbr.rel (0) target = $region37
  $region36: #{corner_predictor_lite_forward.1} parent=0 // pred_region
    _
  $region37: #{corner_predictor_lite_forward.1} parent=0 // pred_fallthru
    _
  // Predicated region
  $region38: #{corner_predictor_lite_forward.1} parent=0 // pred_check
    _
  $region39: #{corner_predictor_lite_forward.1} parent=0 // pred_check_branch
    %37 = sbr.rel (0) target = $region41
  $region40: #{corner_predictor_lite_forward.1} parent=0 // pred_region
    _
  $region41: #{corner_predictor_lite_forward.1} parent=0 // pred_fallthru
    _
  // Predicated region
  $region42: #{corner_predictor_lite_forward.1} parent=0 // pred_check
    _
  $region43: #{corner_predictor_lite_forward.1} parent=0 // pred_check_branch
    %39 = sbr.rel (0) target = $region45
  $region44: #{corner_predictor_lite_forward.1} parent=0 // pred_region
    _
  $region45: #{corner_predictor_lite_forward.1} parent=0 // pred_fallthru
    _
  // Predicated region
  $region46: #{corner_predictor_lite_forward.1} parent=0 // pred_check
    _
  $region47: #{corner_predictor_lite_forward.1} parent=0 // pred_check_branch
    %41 = sbr.rel (0) target = $region49
  $region48: #{corner_predictor_lite_forward.1} parent=0 // pred_region
    _
  $region49: #{corner_predictor_lite_forward.1} parent=0 // pred_fallthru
    _
  // Predicated region
  $region50: #{corner_predictor_lite_forward.1} parent=0 // pred_check
    _
  $region51: #{corner_predictor_lite_forward.1} parent=0 // pred_check_branch
    %43 = sbr.rel (0) target = $region53
  $region52: #{corner_predictor_lite_forward.1} parent=0 // pred_region
    _
  $region53: #{corner_predictor_lite_forward.1} parent=0 // pred_fallthru
    _
  %v45 = vld [vmem:[%s0] sm:$0xff]
  %v46 = vld [vmem:[%s0 + $0x8] sm:$0xff]
  %v47 = vld [vmem:[%s0 + $0x10] sm:$0xff]
  %v48 = vld [vmem:[%s0 + $0x18] sm:$0xff]
  %v49 = vld [vmem:[%s0 + $0x20] sm:$0xff]
  %v50 = vld [vmem:[%s0 + $0x28] sm:$0xff]
  %v51 = vld [vmem:[%s0 + $0x30] sm:$0xff]
  %v52 = vld [vmem:[%s0 + $0x38] sm:$0xff]
  %53 = vrot.lane.b32.xlu0 %v45, 17
  %v54 = vpop.permute.xlu0 %53
  %55 = vrot.lane.b32.xlu0 %v49, 17
  %v56 = vpop.permute.xlu0 %55
  %57 = vrot.lane.b32.xlu0 %v46, 17
  %v58 = vpop.permute.xlu0 %57
  %59 = vrot.lane.b32.xlu0 %v50, 17
  %v60 = vpop.permute.xlu0 %59
  %61 = vrot.lane.b32.xlu0 %v47, 17
  %v62 = vpop.permute.xlu0 %61
  %63 = vrot.lane.b32.xlu0 %v51, 17
  %v64 = vpop.permute.xlu0 %63
  %65 = vrot.lane.b32.xlu0 %v48, 17
  %v66 = vpop.permute.xlu0 %65
  %67 = vrot.lane.b32.xlu0 %v52, 17
  %v68 = vpop.permute.xlu0 %67
  %v69 = vlaneseq
  %v70 = vand.u32 %v69, 127
  %vm71 = vcmp.lt.s32.totalorder %v70, 17
  %v72 = vsel %vm71, %v62, %v66
  %v73 = vsel %vm71, %v64, %v68
  %v74 = vsel %vm71, %v58, %v62
  %v75 = vsel %vm71, %v60, %v64
  %v76 = vsel %vm71, %v54, %v58
  %v77 = vsel %vm71, %v56, %v60
  %v78 = vsel %vm71, %v66, %v54
  %v79 = vsel %vm71, %v68, %v56
  %v80 = vld [vmem:[%s2] ss:$8 sm:$0xf]
  %v82 = vlaneseq
  %v83 = vshrl.u32 %v82, 7
  %v84 = vsub.s32 0, %v83
  %v85 = vrot.slane %v80, %v84
  %v86 = vlaneseq
  %v87 = vshrl.u32 %v86, 7
  %v88 = vsub.s32 1, %v87
  %v89 = vrot.slane %v80, %v88
  %v90 = vlaneseq
  %v91 = vshrl.u32 %v90, 7
  %v92 = vsub.s32 2, %v91
  %v93 = vrot.slane %v80, %v92
  %v94 = vlaneseq
  %v95 = vshrl.u32 %v94, 7
  %v96 = vsub.s32 3, %v95
  %v97 = vrot.slane %v80, %v96
  %v102 = vmul.f32 %v78, %v85
  %v103 = vmul.f32 %v76, %v89
  %v104 = vmul.f32 %v74, %v93
  %v105 = vmul.f32 %v72, %v97
  %v106 = vmul.f32 %v79, %v85
  %v107 = vmul.f32 %v77, %v89
  %v108 = vmul.f32 %v75, %v93
  %v109 = vmul.f32 %v73, %v97
  %v110 = vpack.c.bf16 %v106, %v102
  %v111 = vpack.c.bf16 %v107, %v103
  %v112 = vpack.c.bf16 %v108, %v104
  %v113 = vpack.c.bf16 %v109, %v105
  %114 = vst [vmem:[#allocation2] sm:$0xff] %v110
  %115 = vst [vmem:[#allocation2 + $0x8] sm:$0xff] %v111
  %116 = vst [vmem:[#allocation2 + $0x10] sm:$0xff] %v112
  %117 = vst [vmem:[#allocation2 + $0x18] sm:$0xff] %v113
  %118 = vrot.lane.b32.xlu0 %v45, 16
  %v119 = vpop.permute.xlu0 %118
  %120 = vrot.lane.b32.xlu0 %v49, 16
  %v121 = vpop.permute.xlu0 %120
  %122 = vrot.lane.b32.xlu0 %v46, 16
  %v123 = vpop.permute.xlu0 %122
  %124 = vrot.lane.b32.xlu0 %v50, 16
  %v125 = vpop.permute.xlu0 %124
  %126 = vrot.lane.b32.xlu0 %v47, 16
  %v127 = vpop.permute.xlu0 %126
  %128 = vrot.lane.b32.xlu0 %v51, 16
  %v129 = vpop.permute.xlu0 %128
  %130 = vrot.lane.b32.xlu0 %v48, 16
  %v131 = vpop.permute.xlu0 %130
  %132 = vrot.lane.b32.xlu0 %v52, 16
  %v133 = vpop.permute.xlu0 %132
  %vm134 = vcmp.lt.s32.totalorder %v70, 16
  %v135 = vsel %vm134, %v127, %v131
  %v136 = vsel %vm134, %v129, %v133
  %v137 = vsel %vm134, %v123, %v127
  %v138 = vsel %vm134, %v125, %v129
  %v139 = vsel %vm134, %v119, %v123
  %v140 = vsel %vm134, %v121, %v125
  %v141 = vsel %vm134, %v131, %v119
  %v142 = vsel %vm134, %v133, %v121
  %s143 = scalar_lea.vmem %s2, 1
  %v144 = vld [vmem:[%s143] ss:$8 sm:$0xf]
  %v146 = vlaneseq
  %v147 = vshrl.u32 %v146, 7
  %v148 = vsub.s32 0, %v147
  %v149 = vrot.slane %v144, %v148
  %v150 = vlaneseq
  %v151 = vshrl.u32 %v150, 7
  %v152 = vsub.s32 1, %v151
  %v153 = vrot.slane %v144, %v152
  %v154 = vlaneseq
  %v155 = vshrl.u32 %v154, 7
  %v156 = vsub.s32 2, %v155
  %v157 = vrot.slane %v144, %v156
  %v158 = vlaneseq
  %v159 = vshrl.u32 %v158, 7
  %v160 = vsub.s32 3, %v159
  %v161 = vrot.slane %v144, %v160
  %v166 = vmul.f32 %v141, %v149
  %v167 = vmul.f32 %v139, %v153
  %v168 = vmul.f32 %v137, %v157
  %v169 = vmul.f32 %v135, %v161
  %v170 = vmul.f32 %v142, %v149
  %v171 = vmul.f32 %v140, %v153
  %v172 = vmul.f32 %v138, %v157
  %v173 = vmul.f32 %v136, %v161
  %v174 = vpack.c.bf16 %v170, %v166
  %v175 = vpack.c.bf16 %v171, %v167
  %v176 = vpack.c.bf16 %v172, %v168
  %v177 = vpack.c.bf16 %v173, %v169
  %178 = vst [vmem:[#allocation2 + $0x20] sm:$0xff] %v174
  %179 = vst [vmem:[#allocation2 + $0x28] sm:$0xff] %v175
  %180 = vst [vmem:[#allocation2 + $0x30] sm:$0xff] %v176
  %181 = vst [vmem:[#allocation2 + $0x38] sm:$0xff] %v177
  %182 = vrot.lane.b32.xlu0 %v45, 15
  %v183 = vpop.permute.xlu0 %182
  %184 = vrot.lane.b32.xlu0 %v49, 15
  %v185 = vpop.permute.xlu0 %184
  %186 = vrot.lane.b32.xlu0 %v46, 15
  %v187 = vpop.permute.xlu0 %186
  %188 = vrot.lane.b32.xlu0 %v50, 15
  %v189 = vpop.permute.xlu0 %188
  %190 = vrot.lane.b32.xlu0 %v47, 15
  %v191 = vpop.permute.xlu0 %190
  %192 = vrot.lane.b32.xlu0 %v51, 15
  %v193 = vpop.permute.xlu0 %192
  %194 = vrot.lane.b32.xlu0 %v48, 15
  %v195 = vpop.permute.xlu0 %194
  %196 = vrot.lane.b32.xlu0 %v52, 15
  %v197 = vpop.permute.xlu0 %196
  %vm198 = vcmp.lt.s32.totalorder %v70, 15
  %v199 = vsel %vm198, %v191, %v195
  %v200 = vsel %vm198, %v193, %v197
  %v201 = vsel %vm198, %v187, %v191
  %v202 = vsel %vm198, %v189, %v193
  %v203 = vsel %vm198, %v183, %v187
  %v204 = vsel %vm198, %v185, %v189
  %v205 = vsel %vm198, %v195, %v183
  %v206 = vsel %vm198, %v197, %v185
  %s207 = scalar_lea.vmem %s2, 2
  %v208 = vld [vmem:[%s207] ss:$8 sm:$0xf]
  %v210 = vlaneseq
  %v211 = vshrl.u32 %v210, 7
  %v212 = vsub.s32 0, %v211
  %v213 = vrot.slane %v208, %v212
  %v214 = vlaneseq
  %v215 = vshrl.u32 %v214, 7
  %v216 = vsub.s32 1, %v215
  %v217 = vrot.slane %v208, %v216
  %v218 = vlaneseq
  %v219 = vshrl.u32 %v218, 7
  %v220 = vsub.s32 2, %v219
  %v221 = vrot.slane %v208, %v220
  %v222 = vlaneseq
  %v223 = vshrl.u32 %v222, 7
  %v224 = vsub.s32 3, %v223
  %v225 = vrot.slane %v208, %v224
  %v230 = vmul.f32 %v205, %v213
  %v231 = vmul.f32 %v203, %v217
  %v232 = vmul.f32 %v201, %v221
  %v233 = vmul.f32 %v199, %v225
  %v234 = vmul.f32 %v206, %v213
  %v235 = vmul.f32 %v204, %v217
  %v236 = vmul.f32 %v202, %v221
  %v237 = vmul.f32 %v200, %v225
  %v238 = vpack.c.bf16 %v234, %v230
  %v239 = vpack.c.bf16 %v235, %v231
  %v240 = vpack.c.bf16 %v236, %v232
  %v241 = vpack.c.bf16 %v237, %v233
  %242 = vst [vmem:[#allocation2 + $0x40] sm:$0xff] %v238
  %243 = vst [vmem:[#allocation2 + $0x48] sm:$0xff] %v239
  %244 = vst [vmem:[#allocation2 + $0x50] sm:$0xff] %v240
  %245 = vst [vmem:[#allocation2 + $0x58] sm:$0xff] %v241
  %246 = vrot.lane.b32.xlu0 %v45, 1
  %v247 = vpop.permute.xlu0 %246
  %248 = vrot.lane.b32.xlu0 %v49, 1
  %v249 = vpop.permute.xlu0 %248
  %250 = vrot.lane.b32.xlu0 %v46, 1
  %v251 = vpop.permute.xlu0 %250
  %252 = vrot.lane.b32.xlu0 %v50, 1
  %v253 = vpop.permute.xlu0 %252
  %254 = vrot.lane.b32.xlu0 %v47, 1
  %v255 = vpop.permute.xlu0 %254
  %256 = vrot.lane.b32.xlu0 %v51, 1
  %v257 = vpop.permute.xlu0 %256
  %258 = vrot.lane.b32.xlu0 %v48, 1
  %v259 = vpop.permute.xlu0 %258
  %260 = vrot.lane.b32.xlu0 %v52, 1
  %v261 = vpop.permute.xlu0 %260
  %vm262 = vcmp.lt.s32.totalorder %v70, 1
  %v263 = vsel %vm262, %v255, %v259
  %v264 = vsel %vm262, %v257, %v261
  %v265 = vsel %vm262, %v251, %v255
  %v266 = vsel %vm262, %v253, %v257
  %v267 = vsel %vm262, %v247, %v251
  %v268 = vsel %vm262, %v249, %v253
  %v269 = vsel %vm262, %v259, %v247
  %v270 = vsel %vm262, %v261, %v249
  %s271 = scalar_lea.vmem %s2, 3
  %v272 = vld [vmem:[%s271] ss:$8 sm:$0xf]
  %v274 = vlaneseq
  %v275 = vshrl.u32 %v274, 7
  %v276 = vsub.s32 0, %v275
  %v277 = vrot.slane %v272, %v276
  %v278 = vlaneseq
  %v279 = vshrl.u32 %v278, 7
  %v280 = vsub.s32 1, %v279
  %v281 = vrot.slane %v272, %v280
  %v282 = vlaneseq
  %v283 = vshrl.u32 %v282, 7
  %v284 = vsub.s32 2, %v283
  %v285 = vrot.slane %v272, %v284
  %v286 = vlaneseq
  %v287 = vshrl.u32 %v286, 7
  %v288 = vsub.s32 3, %v287
  %v289 = vrot.slane %v272, %v288
  %v294 = vmul.f32 %v269, %v277
  %v295 = vmul.f32 %v267, %v281
  %v296 = vmul.f32 %v265, %v285
  %v297 = vmul.f32 %v263, %v289
  %v298 = vmul.f32 %v270, %v277
  %v299 = vmul.f32 %v268, %v281
  %v300 = vmul.f32 %v266, %v285
  %v301 = vmul.f32 %v264, %v289
  %v302 = vpack.c.bf16 %v298, %v294
  %v303 = vpack.c.bf16 %v299, %v295
  %v304 = vpack.c.bf16 %v300, %v296
  %v305 = vpack.c.bf16 %v301, %v297
  %306 = vst [vmem:[#allocation2 + $0x60] sm:$0xff] %v302
  %307 = vst [vmem:[#allocation2 + $0x68] sm:$0xff] %v303
  %308 = vst [vmem:[#allocation2 + $0x70] sm:$0xff] %v304
  %309 = vst [vmem:[#allocation2 + $0x78] sm:$0xff] %v305
  %v310 = vpack.c.bf16 %v49, %v45
  %v311 = vpack.c.bf16 %v50, %v46
  %v312 = vpack.c.bf16 %v51, %v47
  %v313 = vpack.c.bf16 %v52, %v48
  %314 = vst [vmem:[#allocation2 + $0x80] sm:$0xff] %v310
  %315 = vst [vmem:[#allocation2 + $0x88] sm:$0xff] %v311
  %316 = vst [vmem:[#allocation2 + $0x90] sm:$0xff] %v312
  %317 = vst [vmem:[#allocation2 + $0x98] sm:$0xff] %v313
  %318 = vrot.lane.b32.xlu0 %v45, 127
  %v319 = vpop.permute.xlu0 %318
  %320 = vrot.lane.b32.xlu0 %v49, 127
  %v321 = vpop.permute.xlu0 %320
  %322 = vrot.lane.b32.xlu0 %v46, 127
  %v323 = vpop.permute.xlu0 %322
  %324 = vrot.lane.b32.xlu0 %v50, 127
  %v325 = vpop.permute.xlu0 %324
  %326 = vrot.lane.b32.xlu0 %v47, 127
  %v327 = vpop.permute.xlu0 %326
  %328 = vrot.lane.b32.xlu0 %v51, 127
  %v329 = vpop.permute.xlu0 %328
  %330 = vrot.lane.b32.xlu0 %v48, 127
  %v331 = vpop.permute.xlu0 %330
  %332 = vrot.lane.b32.xlu0 %v52, 127
  %v333 = vpop.permute.xlu0 %332
  %vm334 = vcmp.lt.s32.totalorder %v70, 127
  %v335 = vsel %vm334, %v327, %v331
  %v336 = vsel %vm334, %v329, %v333
  %v337 = vsel %vm334, %v323, %v327
  %v338 = vsel %vm334, %v325, %v329
  %v339 = vsel %vm334, %v319, %v323
  %v340 = vsel %vm334, %v321, %v325
  %v341 = vsel %vm334, %v331, %v319
  %v342 = vsel %vm334, %v333, %v321
  %s343 = scalar_lea.vmem %s2, 5
  %v344 = vld [vmem:[%s343] ss:$8 sm:$0xf]
  %v346 = vlaneseq
  %v347 = vshrl.u32 %v346, 7
  %v348 = vsub.s32 0, %v347
  %v349 = vrot.slane %v344, %v348
  %v350 = vlaneseq
  %v351 = vshrl.u32 %v350, 7
  %v352 = vsub.s32 1, %v351
  %v353 = vrot.slane %v344, %v352
  %v354 = vlaneseq
  %v355 = vshrl.u32 %v354, 7
  %v356 = vsub.s32 2, %v355
  %v357 = vrot.slane %v344, %v356
  %v358 = vlaneseq
  %v359 = vshrl.u32 %v358, 7
  %v360 = vsub.s32 3, %v359
  %v361 = vrot.slane %v344, %v360
  %v366 = vmul.f32 %v339, %v349
  %v367 = vmul.f32 %v337, %v353
  %v368 = vmul.f32 %v335, %v357
  %v369 = vmul.f32 %v341, %v361
  %v370 = vmul.f32 %v340, %v349
  %v371 = vmul.f32 %v338, %v353
  %v372 = vmul.f32 %v336, %v357
  %v373 = vmul.f32 %v342, %v361
  %v374 = vpack.c.bf16 %v370, %v366
  %v375 = vpack.c.bf16 %v371, %v367
  %v376 = vpack.c.bf16 %v372, %v368
  %v377 = vpack.c.bf16 %v373, %v369
  %378 = vst [vmem:[#allocation2 + $0xa0] sm:$0xff] %v374
  %379 = vst [vmem:[#allocation2 + $0xa8] sm:$0xff] %v375
  %380 = vst [vmem:[#allocation2 + $0xb0] sm:$0xff] %v376
  %381 = vst [vmem:[#allocation2 + $0xb8] sm:$0xff] %v377
  %382 = vrot.lane.b32.xlu0 %v45, 113
  %v383 = vpop.permute.xlu0 %382
  %384 = vrot.lane.b32.xlu0 %v49, 113
  %v385 = vpop.permute.xlu0 %384
  %386 = vrot.lane.b32.xlu0 %v46, 113
  %v387 = vpop.permute.xlu0 %386
  %388 = vrot.lane.b32.xlu0 %v50, 113
  %v389 = vpop.permute.xlu0 %388
  %390 = vrot.lane.b32.xlu0 %v47, 113
  %v391 = vpop.permute.xlu0 %390
  %392 = vrot.lane.b32.xlu0 %v51, 113
  %v393 = vpop.permute.xlu0 %392
  %394 = vrot.lane.b32.xlu0 %v48, 113
  %v395 = vpop.permute.xlu0 %394
  %396 = vrot.lane.b32.xlu0 %v52, 113
  %v397 = vpop.permute.xlu0 %396
  %vm398 = vcmp.lt.s32.totalorder %v70, 113
  %v399 = vsel %vm398, %v391, %v395
  %v400 = vsel %vm398, %v393, %v397
  %v401 = vsel %vm398, %v387, %v391
  %v402 = vsel %vm398, %v389, %v393
  %v403 = vsel %vm398, %v383, %v387
  %v404 = vsel %vm398, %v385, %v389
  %v405 = vsel %vm398, %v395, %v383
  %v406 = vsel %vm398, %v397, %v385
  %s407 = scalar_lea.vmem %s2, 6
  %v408 = vld [vmem:[%s407] ss:$8 sm:$0xf]
  %v410 = vlaneseq
  %v411 = vshrl.u32 %v410, 7
  %v412 = vsub.s32 0, %v411
  %v413 = vrot.slane %v408, %v412
  %v414 = vlaneseq
  %v415 = vshrl.u32 %v414, 7
  %v416 = vsub.s32 1, %v415
  %v417 = vrot.slane %v408, %v416
  %v418 = vlaneseq
  %v419 = vshrl.u32 %v418, 7
  %v420 = vsub.s32 2, %v419
  %v421 = vrot.slane %v408, %v420
  %v422 = vlaneseq
  %v423 = vshrl.u32 %v422, 7
  %v424 = vsub.s32 3, %v423
  %v425 = vrot.slane %v408, %v424
  %v430 = vmul.f32 %v403, %v413
  %v431 = vmul.f32 %v401, %v417
  %v432 = vmul.f32 %v399, %v421
  %v433 = vmul.f32 %v405, %v425
  %v434 = vmul.f32 %v404, %v413
  %v435 = vmul.f32 %v402, %v417
  %v436 = vmul.f32 %v400, %v421
  %v437 = vmul.f32 %v406, %v425
  %v438 = vpack.c.bf16 %v434, %v430
  %v439 = vpack.c.bf16 %v435, %v431
  %v440 = vpack.c.bf16 %v436, %v432
  %v441 = vpack.c.bf16 %v437, %v433
  %442 = vst [vmem:[#allocation2 + $0xc0] sm:$0xff] %v438
  %443 = vst [vmem:[#allocation2 + $0xc8] sm:$0xff] %v439
  %444 = vst [vmem:[#allocation2 + $0xd0] sm:$0xff] %v440
  %445 = vst [vmem:[#allocation2 + $0xd8] sm:$0xff] %v441
  %446 = vrot.lane.b32.xlu0 %v45, 112
  %v447 = vpop.permute.xlu0 %446
  %448 = vrot.lane.b32.xlu0 %v49, 112
  %v449 = vpop.permute.xlu0 %448
  %450 = vrot.lane.b32.xlu0 %v46, 112
  %v451 = vpop.permute.xlu0 %450
  %452 = vrot.lane.b32.xlu0 %v50, 112
  %v453 = vpop.permute.xlu0 %452
  %454 = vrot.lane.b32.xlu0 %v47, 112
  %v455 = vpop.permute.xlu0 %454
  %456 = vrot.lane.b32.xlu0 %v51, 112
  %v457 = vpop.permute.xlu0 %456
  %458 = vrot.lane.b32.xlu0 %v48, 112
  %v459 = vpop.permute.xlu0 %458
  %460 = vrot.lane.b32.xlu0 %v52, 112
  %v461 = vpop.permute.xlu0 %460
  %vm462 = vcmp.lt.s32.totalorder %v70, 112
  %v463 = vsel %vm462, %v455, %v459
  %v464 = vsel %vm462, %v457, %v461
  %v465 = vsel %vm462, %v451, %v455
  %v466 = vsel %vm462, %v453, %v457
  %v467 = vsel %vm462, %v447, %v451
  %v468 = vsel %vm462, %v449, %v453
  %v469 = vsel %vm462, %v459, %v447
  %v470 = vsel %vm462, %v461, %v449
  %s471 = scalar_lea.vmem %s2, 7
  %v472 = vld [vmem:[%s471] ss:$8 sm:$0xf]
  %v474 = vlaneseq
  %v475 = vshrl.u32 %v474, 7
  %v476 = vsub.s32 0, %v475
  %v477 = vrot.slane %v472, %v476
  %v478 = vlaneseq
  %v479 = vshrl.u32 %v478, 7
  %v480 = vsub.s32 1, %v479
  %v481 = vrot.slane %v472, %v480
  %v482 = vlaneseq
  %v483 = vshrl.u32 %v482, 7
  %v484 = vsub.s32 2, %v483
  %v485 = vrot.slane %v472, %v484
  %v486 = vlaneseq
  %v487 = vshrl.u32 %v486, 7
  %v488 = vsub.s32 3, %v487
  %v489 = vrot.slane %v472, %v488
  %v494 = vmul.f32 %v467, %v477
  %v495 = vmul.f32 %v465, %v481
  %v496 = vmul.f32 %v463, %v485
  %v497 = vmul.f32 %v469, %v489
  %v498 = vmul.f32 %v468, %v477
  %v499 = vmul.f32 %v466, %v481
  %v500 = vmul.f32 %v464, %v485
  %v501 = vmul.f32 %v470, %v489
  %v502 = vpack.c.bf16 %v498, %v494
  %v503 = vpack.c.bf16 %v499, %v495
  %v504 = vpack.c.bf16 %v500, %v496
  %v505 = vpack.c.bf16 %v501, %v497
  %506 = vst [vmem:[#allocation2 + $0xe0] sm:$0xff] %v502
  %507 = vst [vmem:[#allocation2 + $0xe8] sm:$0xff] %v503
  %508 = vst [vmem:[#allocation2 + $0xf0] sm:$0xff] %v504
  %509 = vst [vmem:[#allocation2 + $0xf8] sm:$0xff] %v505
  %510 = vrot.lane.b32.xlu0 %v45, 111
  %v511 = vpop.permute.xlu0 %510
  %512 = vrot.lane.b32.xlu0 %v49, 111
  %v513 = vpop.permute.xlu0 %512
  %514 = vrot.lane.b32.xlu0 %v46, 111
  %v515 = vpop.permute.xlu0 %514
  %516 = vrot.lane.b32.xlu0 %v50, 111
  %v517 = vpop.permute.xlu0 %516
  %518 = vrot.lane.b32.xlu0 %v47, 111
  %v519 = vpop.permute.xlu0 %518
  %520 = vrot.lane.b32.xlu0 %v51, 111
  %v521 = vpop.permute.xlu0 %520
  %522 = vrot.lane.b32.xlu0 %v48, 111
  %v523 = vpop.permute.xlu0 %522
  %524 = vrot.lane.b32.xlu0 %v52, 111
  %v525 = vpop.permute.xlu0 %524
  %vm526 = vcmp.lt.s32.totalorder %v70, 111
  %v527 = vsel %vm526, %v519, %v523
  %v528 = vsel %vm526, %v521, %v525
  %v529 = vsel %vm526, %v515, %v519
  %v530 = vsel %vm526, %v517, %v521
  %v531 = vsel %vm526, %v511, %v515
  %v532 = vsel %vm526, %v513, %v517
  %v533 = vsel %vm526, %v523, %v511
  %v534 = vsel %vm526, %v525, %v513
  %s535 = scalar_lea.vmem %s2, 32
  %v536 = vld [vmem:[%s535] ss:$8 sm:$0xf]
  %v538 = vlaneseq
  %v539 = vshrl.u32 %v538, 7
  %v540 = vsub.s32 0, %v539
  %v541 = vrot.slane %v536, %v540
  %v542 = vlaneseq
  %v543 = vshrl.u32 %v542, 7
  %v544 = vsub.s32 1, %v543
  %v545 = vrot.slane %v536, %v544
  %v546 = vlaneseq
  %v547 = vshrl.u32 %v546, 7
  %v548 = vsub.s32 2, %v547
  %v549 = vrot.slane %v536, %v548
  %v550 = vlaneseq
  %v551 = vshrl.u32 %v550, 7
  %v552 = vsub.s32 3, %v551
  %v553 = vrot.slane %v536, %v552
  %v558 = vmul.f32 %v531, %v541
  %v559 = vmul.f32 %v529, %v545
  %v560 = vmul.f32 %v527, %v549
  %v561 = vmul.f32 %v533, %v553
  %v562 = vmul.f32 %v532, %v541
  %v563 = vmul.f32 %v530, %v545
  %v564 = vmul.f32 %v528, %v549
  %v565 = vmul.f32 %v534, %v553
  %v566 = vpack.c.bf16 %v562, %v558
  %v567 = vpack.c.bf16 %v563, %v559
  %v568 = vpack.c.bf16 %v564, %v560
  %v569 = vpack.c.bf16 %v565, %v561
  %570 = vst [vmem:[#allocation2 + $0x100] sm:$0xff] %v566
  %571 = vst [vmem:[#allocation2 + $0x108] sm:$0xff] %v567
  %572 = vst [vmem:[#allocation2 + $0x110] sm:$0xff] %v568
  %573 = vst [vmem:[#allocation2 + $0x118] sm:$0xff] %v569
  %v574 = vld [vmem:[%s3] sm:$0xff]
  %v575 = vld [vmem:[%s3 + $0x8] sm:$0xff]
  %v576 = vld [vmem:[%s3 + $0x10] sm:$0xff]
  %v577 = vld [vmem:[%s3 + $0x18] sm:$0xff]
  %v578 = vld [vmem:[#allocation2] sm:$0xff]
  %v579 = vld [vmem:[#allocation2 + $0x8] sm:$0xff]
  %v580 = vld [vmem:[#allocation2 + $0x10] sm:$0xff]
  %v581 = vld [vmem:[#allocation2 + $0x18] sm:$0xff]
  %v582 = vld [vmem:[#allocation2 + $0x20] sm:$0xff]
  %v583 = vld [vmem:[#allocation2 + $0x28] sm:$0xff]
  %v584 = vld [vmem:[#allocation2 + $0x30] sm:$0xff]
  %v585 = vld [vmem:[#allocation2 + $0x38] sm:$0xff]
  %v586 = vld [vmem:[#allocation2 + $0x40] sm:$0xff]
  %v587 = vld [vmem:[#allocation2 + $0x48] sm:$0xff]
  %v588 = vld [vmem:[#allocation2 + $0x50] sm:$0xff]
  %v589 = vld [vmem:[#allocation2 + $0x58] sm:$0xff]
  %v590 = vld [vmem:[#allocation2 + $0x60] sm:$0xff]
  %v591 = vld [vmem:[#allocation2 + $0x68] sm:$0xff]
  %v592 = vld [vmem:[#allocation2 + $0x70] sm:$0xff]
  %v593 = vld [vmem:[#allocation2 + $0x78] sm:$0xff]
  %v594 = vld [vmem:[#allocation2 + $0x80] sm:$0xff]
  %v595 = vld [vmem:[#allocation2 + $0x88] sm:$0xff]
  %v596 = vld [vmem:[#allocation2 + $0x90] sm:$0xff]
  %v597 = vld [vmem:[#allocation2 + $0x98] sm:$0xff]
  %v598 = vld [vmem:[#allocation2 + $0xa0] sm:$0xff]
  %v599 = vld [vmem:[#allocation2 + $0xa8] sm:$0xff]
  %v600 = vld [vmem:[#allocation2 + $0xb0] sm:$0xff]
  %v601 = vld [vmem:[#allocation2 + $0xb8] sm:$0xff]
  %v602 = vld [vmem:[#allocation2 + $0xc0] sm:$0xff]
  %v603 = vld [vmem:[#allocation2 + $0xc8] sm:$0xff]
  %v604 = vld [vmem:[#allocation2 + $0xd0] sm:$0xff]
  %v605 = vld [vmem:[#allocation2 + $0xd8] sm:$0xff]
  %v606 = vld [vmem:[#allocation2 + $0xe0] sm:$0xff]
  %v607 = vld [vmem:[#allocation2 + $0xe8] sm:$0xff]
  %v608 = vld [vmem:[#allocation2 + $0xf0] sm:$0xff]
  %v609 = vld [vmem:[#allocation2 + $0xf8] sm:$0xff]
  %v610 = vld [vmem:[#allocation2 + $0x100] sm:$0xff]
  %v611 = vld [vmem:[#allocation2 + $0x108] sm:$0xff]
  %v612 = vld [vmem:[#allocation2 + $0x110] sm:$0xff]
  %v613 = vld [vmem:[#allocation2 + $0x118] sm:$0xff]
  %v614 = vld [vmem:[%s8] sm:$0xff]
  %v615 = vld [vmem:[%s8 + $0x8] sm:$0xff]
  %v616 = vld [vmem:[%s8 + $0x10] sm:$0xff]
  %v617 = vld [vmem:[%s8 + $0x18] sm:$0xff]
  %619 = vset.pattern.permute.xlu0 0
  %620 = vperm.xlu0 %619, %v614
  %v621 = vpop.permute.xlu0 %620
  %624 = vset.pattern.permute.xlu0 0
  %625 = vperm.xlu0 %624, %v615
  %v626 = vpop.permute.xlu0 %625
  %629 = vset.pattern.permute.xlu0 0
  %630 = vperm.xlu0 %629, %v616
  %v631 = vpop.permute.xlu0 %630
  %634 = vset.pattern.permute.xlu0 0
  %635 = vperm.xlu0 %634, %v617
  %v636 = vpop.permute.xlu0 %635
  %v642 = vunpack.c.l.b16 %v574
  %v643 = vunpack.c.h.b16 %v574
  %v644 = vunpack.c.l.b16 %v575
  %v645 = vunpack.c.h.b16 %v575
  %v646 = vunpack.c.l.b16 %v576
  %v647 = vunpack.c.h.b16 %v576
  %v648 = vunpack.c.l.b16 %v577
  %v649 = vunpack.c.h.b16 %v577
  %v650 = vpack.c.b16 %v644, %v642
  %v651 = vpack.c.b16 %v645, %v643
  %v652 = vpack.c.b16 %v648, %v646
  %v653 = vpack.c.b16 %v649, %v647
  %vm656 = vcmask 130048
  %v658 = vsel %vm656, %v651, 0
  %v661 = vsel %vm656, %v653, 0
  %663 = vmatprep.subr.bf16.mxu0 %v579
  %664 = vmatpush1.bf16.msra.mxu0 %v578
  %665 = vmatprep.subr.bf16.mxu0 %v583
  %666 = vmatpush1.bf16.msra.mxu0 %v582
  %667 = vmatprep.subr.bf16.mxu0 %v587
  %668 = vmatpush1.bf16.msra.mxu0 %v586
  %669 = vmatprep.subr.bf16.mxu0 %v591
  %670 = vmatpush1.bf16.msra.mxu0 %v590
  %671 = vmatprep.subr.bf16.mxu0 %v595
  %672 = vmatpush1.bf16.msra.mxu0 %v594
  %673 = vmatprep.subr.bf16.mxu0 %v599
  %674 = vmatpush1.bf16.msra.mxu0 %v598
  %675 = vmatprep.subr.bf16.mxu0 %v603
  %676 = vmatpush1.bf16.msra.mxu0 %v602
  %677 = vmatprep.subr.bf16.mxu0 %v607
  %678 = vmatpush1.bf16.msra.mxu0 %v606
  %679 = vmatprep.subr.bf16.mxu0 %v611
  %680 = vmatpush1.bf16.msra.mxu0 %v610
  %681 = vmatprep.subr.bf16.mxu0 0
  %682 = vmatpush1.bf16.msra.mxu0 0
  %683 = vmatprep.subr.bf16.mxu0 0
  %684 = vmatpush1.bf16.msra.mxu0 0
  %685 = vmatprep.subr.bf16.mxu0 0
  %686 = vmatpush1.bf16.msra.mxu0 0
  %687 = vmatprep.subr.bf16.mxu0 0
  %688 = vmatpush1.bf16.msra.mxu0 0
  %689 = vmatprep.subr.bf16.mxu0 0
  %690 = vmatpush1.bf16.msra.mxu0 0
  %691 = vmatprep.subr.bf16.mxu0 0
  %692 = vmatpush1.bf16.msra.mxu0 0
  %693 = vmatprep.subr.bf16.mxu0 0
  %694 = vmatpush1.bf16.msra.mxu0 0
  %695 = vmatprep.mubr.bf16.mxu0 %v658
  %696 = vmatmul.mubr.bf16.gmra.mrb[0].mxu0 %v650
  %v697 = vpop.f32.mrb[0].mxu0
  %v698 = vadd.f32 %v621, %v697
  %v699 = vpop.f32.mrb[0].mxu0
  %v700 = vadd.f32 %v621, %v699
  %v701 = vpop.f32.mrb[0].mxu0
  %v702 = vadd.f32 %v626, %v701
  %v703 = vpop.f32.mrb[0].mxu0
  %v704 = vadd.f32 %v626, %v703
  %705 = vmatprep.mubr.bf16.mxu0 %v661
  %706 = vmatmul.mubr.bf16.gmra.mrb[0].mxu0 %v652
  %v707 = vpop.f32.mrb[0].mxu0
  %v708 = vadd.f32 %v631, %v707
  %v709 = vpop.f32.mrb[0].mxu0
  %v710 = vadd.f32 %v631, %v709
  %v711 = vpop.f32.mrb[0].mxu0
  %v712 = vadd.f32 %v636, %v711
  %v713 = vpop.f32.mrb[0].mxu0
  %v714 = vadd.f32 %v636, %v713
  %715 = vdwg.mxu0
  %716 = vmatprep.subr.bf16.mxu0 %v581
  %717 = vmatpush1.bf16.msra.mxu0 %v580
  %718 = vmatprep.subr.bf16.mxu0 %v585
  %719 = vmatpush1.bf16.msra.mxu0 %v584
  %720 = vmatprep.subr.bf16.mxu0 %v589
  %721 = vmatpush1.bf16.msra.mxu0 %v588
  %722 = vmatprep.subr.bf16.mxu0 %v593
  %723 = vmatpush1.bf16.msra.mxu0 %v592
  %724 = vmatprep.subr.bf16.mxu0 %v597
  %725 = vmatpush1.bf16.msra.mxu0 %v596
  %726 = vmatprep.subr.bf16.mxu0 %v601
  %727 = vmatpush1.bf16.msra.mxu0 %v600
  %728 = vmatprep.subr.bf16.mxu0 %v605
  %729 = vmatpush1.bf16.msra.mxu0 %v604
  %730 = vmatprep.subr.bf16.mxu0 %v609
  %731 = vmatpush1.bf16.msra.mxu0 %v608
  %732 = vmatprep.subr.bf16.mxu0 %v613
  %733 = vmatpush1.bf16.msra.mxu0 %v612
  %734 = vmatprep.subr.bf16.mxu0 0
  %735 = vmatpush1.bf16.msra.mxu0 0
  %736 = vmatprep.subr.bf16.mxu0 0
  %737 = vmatpush1.bf16.msra.mxu0 0
  %738 = vmatprep.subr.bf16.mxu0 0
  %739 = vmatpush1.bf16.msra.mxu0 0
  %740 = vmatprep.subr.bf16.mxu0 0
  %741 = vmatpush1.bf16.msra.mxu0 0
  %742 = vmatprep.subr.bf16.mxu0 0
  %743 = vmatpush1.bf16.msra.mxu0 0
  %744 = vmatprep.subr.bf16.mxu0 0
  %745 = vmatpush1.bf16.msra.mxu0 0
  %746 = vmatprep.subr.bf16.mxu0 0
  %747 = vmatpush1.bf16.msra.mxu0 0
  %748 = vmatprep.mubr.bf16.mxu0 %v658
  %749 = vmatmul.mubr.bf16.gmra.mrb[0].mxu0 %v650
  %v750 = vpop.f32.mrb[0].mxu0
  %v751 = vadd.f32 %v621, %v750
  %v752 = vpop.f32.mrb[0].mxu0
  %v753 = vadd.f32 %v621, %v752
  %v754 = vpop.f32.mrb[0].mxu0
  %v755 = vadd.f32 %v626, %v754
  %v756 = vpop.f32.mrb[0].mxu0
  %v757 = vadd.f32 %v626, %v756
  %758 = vmatprep.mubr.bf16.mxu0 %v661
  %759 = vmatmul.mubr.bf16.gmra.mrb[0].mxu0 %v652
  %v760 = vpop.f32.mrb[0].mxu0
  %v761 = vadd.f32 %v631, %v760
  %v762 = vpop.f32.mrb[0].mxu0
  %v763 = vadd.f32 %v631, %v762
  %v764 = vpop.f32.mrb[0].mxu0
  %v765 = vadd.f32 %v636, %v764
  %v766 = vpop.f32.mrb[0].mxu0
  %v767 = vadd.f32 %v636, %v766
  %768 = vdwg.mxu0
  %v769 = vmax.f32 %v698, 0.0
  %v770 = vmax.f32 %v700, 0.0
  %v771 = vmax.f32 %v751, 0.0
  %v772 = vmax.f32 %v753, 0.0
  %v773 = vmax.f32 %v702, 0.0
  %v774 = vmax.f32 %v704, 0.0
  %v775 = vmax.f32 %v755, 0.0
  %v776 = vmax.f32 %v757, 0.0
  %v777 = vmax.f32 %v708, 0.0
  %v778 = vmax.f32 %v710, 0.0
  %v779 = vmax.f32 %v761, 0.0
  %v780 = vmax.f32 %v763, 0.0
  %v781 = vmax.f32 %v712, 0.0
  %v782 = vmax.f32 %v714, 0.0
  %v783 = vmax.f32 %v765, 0.0
  %v784 = vmax.f32 %v767, 0.0
  %785 = vrot.lane.b32.xlu0 %v769, 17
  %v786 = vpop.permute.xlu0 %785
  %787 = vrot.lane.b32.xlu0 %v773, 17
  %v788 = vpop.permute.xlu0 %787
  %789 = vrot.lane.b32.xlu0 %v777, 17
  %v790 = vpop.permute.xlu0 %789
  %791 = vrot.lane.b32.xlu0 %v781, 17
  %v792 = vpop.permute.xlu0 %791
  %793 = vrot.lane.b32.xlu0 %v770, 17
  %v794 = vpop.permute.xlu0 %793
  %795 = vrot.lane.b32.xlu0 %v774, 17
  %v796 = vpop.permute.xlu0 %795
  %797 = vrot.lane.b32.xlu0 %v778, 17
  %v798 = vpop.permute.xlu0 %797
  %799 = vrot.lane.b32.xlu0 %v782, 17
  %v800 = vpop.permute.xlu0 %799
  %801 = vrot.lane.b32.xlu0 %v771, 17
  %v802 = vpop.permute.xlu0 %801
  %803 = vrot.lane.b32.xlu0 %v775, 17
  %v804 = vpop.permute.xlu0 %803
  %805 = vrot.lane.b32.xlu0 %v779, 17
  %v806 = vpop.permute.xlu0 %805
  %807 = vrot.lane.b32.xlu0 %v783, 17
  %v808 = vpop.permute.xlu0 %807
  %809 = vrot.lane.b32.xlu0 %v772, 17
  %v810 = vpop.permute.xlu0 %809
  %811 = vrot.lane.b32.xlu0 %v776, 17
  %v812 = vpop.permute.xlu0 %811
  %813 = vrot.lane.b32.xlu0 %v780, 17
  %v814 = vpop.permute.xlu0 %813
  %815 = vrot.lane.b32.xlu0 %v784, 17
  %v816 = vpop.permute.xlu0 %815
  %v817 = vsel %vm71, %v802, %v810
  %v818 = vsel %vm71, %v804, %v812
  %v819 = vsel %vm71, %v806, %v814
  %v820 = vsel %vm71, %v808, %v816
  %v821 = vsel %vm71, %v794, %v802
  %v822 = vsel %vm71, %v796, %v804
  %v823 = vsel %vm71, %v798, %v806
  %v824 = vsel %vm71, %v800, %v808
  %v825 = vsel %vm71, %v786, %v794
  %v826 = vsel %vm71, %v788, %v796
  %v827 = vsel %vm71, %v790, %v798
  %v828 = vsel %vm71, %v792, %v800
  %v829 = vsel %vm71, %v810, %v786
  %v830 = vsel %vm71, %v812, %v788
  %v831 = vsel %vm71, %v814, %v790
  %v832 = vsel %vm71, %v816, %v792
  %v833 = vld [vmem:[%s2] ss:$8 sm:$0xf]
  %v835 = vlaneseq
  %v836 = vshrl.u32 %v835, 7
  %v837 = vsub.s32 0, %v836
  %v838 = vrot.slane %v833, %v837
  %v839 = vlaneseq
  %v840 = vshrl.u32 %v839, 7
  %v841 = vsub.s32 1, %v840
  %v842 = vrot.slane %v833, %v841
  %v843 = vlaneseq
  %v844 = vshrl.u32 %v843, 7
  %v845 = vsub.s32 2, %v844
  %v846 = vrot.slane %v833, %v845
  %v847 = vlaneseq
  %v848 = vshrl.u32 %v847, 7
  %v849 = vsub.s32 3, %v848
  %v850 = vrot.slane %v833, %v849
  %v855 = vmul.f32 %v829, %v838
  %v856 = vmul.f32 %v825, %v842
  %v857 = vmul.f32 %v821, %v846
  %v858 = vmul.f32 %v817, %v850
  %v859 = vmul.f32 %v830, %v838
  %v860 = vmul.f32 %v826, %v842
  %v861 = vmul.f32 %v822, %v846
  %v862 = vmul.f32 %v818, %v850
  %v863 = vmul.f32 %v831, %v838
  %v864 = vmul.f32 %v827, %v842
  %v865 = vmul.f32 %v823, %v846
  %v866 = vmul.f32 %v819, %v850
  %v867 = vmul.f32 %v832, %v838
  %v868 = vmul.f32 %v828, %v842
  %v869 = vmul.f32 %v824, %v846
  %v870 = vmul.f32 %v820, %v850
  %v871 = vpack.c.bf16 %v859, %v855
  %v872 = vpack.c.bf16 %v860, %v856
  %v873 = vpack.c.bf16 %v861, %v857
  %v874 = vpack.c.bf16 %v862, %v858
  %v875 = vpack.c.bf16 %v867, %v863
  %v876 = vpack.c.bf16 %v868, %v864
  %v877 = vpack.c.bf16 %v869, %v865
  %v878 = vpack.c.bf16 %v870, %v866
  %879 = vst [vmem:[#allocation2] sm:$0xff] %v871
  %880 = vst [vmem:[#allocation2 + $0x8] sm:$0xff] %v872
  %881 = vst [vmem:[#allocation2 + $0x10] sm:$0xff] %v873
  %882 = vst [vmem:[#allocation2 + $0x18] sm:$0xff] %v874
  %883 = vst [vmem:[#allocation2 + $0x20] sm:$0xff] %v875
  %884 = vst [vmem:[#allocation2 + $0x28] sm:$0xff] %v876
  %885 = vst [vmem:[#allocation2 + $0x30] sm:$0xff] %v877
  %886 = vst [vmem:[#allocation2 + $0x38] sm:$0xff] %v878
  %887 = vrot.lane.b32.xlu0 %v769, 16
  %v888 = vpop.permute.xlu0 %887
  %889 = vrot.lane.b32.xlu0 %v773, 16
  %v890 = vpop.permute.xlu0 %889
  %891 = vrot.lane.b32.xlu0 %v777, 16
  %v892 = vpop.permute.xlu0 %891
  %893 = vrot.lane.b32.xlu0 %v781, 16
  %v894 = vpop.permute.xlu0 %893
  %895 = vrot.lane.b32.xlu0 %v770, 16
  %v896 = vpop.permute.xlu0 %895
  %897 = vrot.lane.b32.xlu0 %v774, 16
  %v898 = vpop.permute.xlu0 %897
  %899 = vrot.lane.b32.xlu0 %v778, 16
  %v900 = vpop.permute.xlu0 %899
  %901 = vrot.lane.b32.xlu0 %v782, 16
  %v902 = vpop.permute.xlu0 %901
  %903 = vrot.lane.b32.xlu0 %v771, 16
  %v904 = vpop.permute.xlu0 %903
  %905 = vrot.lane.b32.xlu0 %v775, 16
  %v906 = vpop.permute.xlu0 %905
  %907 = vrot.lane.b32.xlu0 %v779, 16
  %v908 = vpop.permute.xlu0 %907
  %909 = vrot.lane.b32.xlu0 %v783, 16
  %v910 = vpop.permute.xlu0 %909
  %911 = vrot.lane.b32.xlu0 %v772, 16
  %v912 = vpop.permute.xlu0 %911
  %913 = vrot.lane.b32.xlu0 %v776, 16
  %v914 = vpop.permute.xlu0 %913
  %915 = vrot.lane.b32.xlu0 %v780, 16
  %v916 = vpop.permute.xlu0 %915
  %917 = vrot.lane.b32.xlu0 %v784, 16
  %v918 = vpop.permute.xlu0 %917
  %v919 = vsel %vm134, %v904, %v912
  %v920 = vsel %vm134, %v906, %v914
  %v921 = vsel %vm134, %v908, %v916
  %v922 = vsel %vm134, %v910, %v918
  %v923 = vsel %vm134, %v896, %v904
  %v924 = vsel %vm134, %v898, %v906
  %v925 = vsel %vm134, %v900, %v908
  %v926 = vsel %vm134, %v902, %v910
  %v927 = vsel %vm134, %v888, %v896
  %v928 = vsel %vm134, %v890, %v898
  %v929 = vsel %vm134, %v892, %v900
  %v930 = vsel %vm134, %v894, %v902
  %v931 = vsel %vm134, %v912, %v888
  %v932 = vsel %vm134, %v914, %v890
  %v933 = vsel %vm134, %v916, %v892
  %v934 = vsel %vm134, %v918, %v894
  %v935 = vld [vmem:[%s143] ss:$8 sm:$0xf]
  %v937 = vlaneseq
  %v938 = vshrl.u32 %v937, 7
  %v939 = vsub.s32 0, %v938
  %v940 = vrot.slane %v935, %v939
  %v941 = vlaneseq
  %v942 = vshrl.u32 %v941, 7
  %v943 = vsub.s32 1, %v942
  %v944 = vrot.slane %v935, %v943
  %v945 = vlaneseq
  %v946 = vshrl.u32 %v945, 7
  %v947 = vsub.s32 2, %v946
  %v948 = vrot.slane %v935, %v947
  %v949 = vlaneseq
  %v950 = vshrl.u32 %v949, 7
  %v951 = vsub.s32 3, %v950
  %v952 = vrot.slane %v935, %v951
  %v957 = vmul.f32 %v931, %v940
  %v958 = vmul.f32 %v927, %v944
  %v959 = vmul.f32 %v923, %v948
  %v960 = vmul.f32 %v919, %v952
  %v961 = vmul.f32 %v932, %v940
  %v962 = vmul.f32 %v928, %v944
  %v963 = vmul.f32 %v924, %v948
  %v964 = vmul.f32 %v920, %v952
  %v965 = vmul.f32 %v933, %v940
  %v966 = vmul.f32 %v929, %v944
  %v967 = vmul.f32 %v925, %v948
  %v968 = vmul.f32 %v921, %v952
  %v969 = vmul.f32 %v934, %v940
  %v970 = vmul.f32 %v930, %v944
  %v971 = vmul.f32 %v926, %v948
  %v972 = vmul.f32 %v922, %v952
  %v973 = vpack.c.bf16 %v961, %v957
  %v974 = vpack.c.bf16 %v962, %v958
  %v975 = vpack.c.bf16 %v963, %v959
  %v976 = vpack.c.bf16 %v964, %v960
  %v977 = vpack.c.bf16 %v969, %v965
  %v978 = vpack.c.bf16 %v970, %v966
  %v979 = vpack.c.bf16 %v971, %v967
  %v980 = vpack.c.bf16 %v972, %v968
  %981 = vst [vmem:[#allocation2 + $0x40] sm:$0xff] %v973
  %982 = vst [vmem:[#allocation2 + $0x48] sm:$0xff] %v974
  %983 = vst [vmem:[#allocation2 + $0x50] sm:$0xff] %v975
  %984 = vst [vmem:[#allocation2 + $0x58] sm:$0xff] %v976
  %985 = vst [vmem:[#allocation2 + $0x60] sm:$0xff] %v977
  %986 = vst [vmem:[#allocation2 + $0x68] sm:$0xff] %v978
  %987 = vst [vmem:[#allocation2 + $0x70] sm:$0xff] %v979
  %988 = vst [vmem:[#allocation2 + $0x78] sm:$0xff] %v980
  %989 = vrot.lane.b32.xlu0 %v769, 15
  %v990 = vpop.permute.xlu0 %989
  %991 = vrot.lane.b32.xlu0 %v773, 15
  %v992 = vpop.permute.xlu0 %991
  %993 = vrot.lane.b32.xlu0 %v777, 15
  %v994 = vpop.permute.xlu0 %993
  %995 = vrot.lane.b32.xlu0 %v781, 15
  %v996 = vpop.permute.xlu0 %995
  %997 = vrot.lane.b32.xlu0 %v770, 15
  %v998 = vpop.permute.xlu0 %997
  %999 = vrot.lane.b32.xlu0 %v774, 15
  %v1000 = vpop.permute.xlu0 %999
  %1001 = vrot.lane.b32.xlu0 %v778, 15
  %v1002 = vpop.permute.xlu0 %1001
  %1003 = vrot.lane.b32.xlu0 %v782, 15
  %v1004 = vpop.permute.xlu0 %1003
  %1005 = vrot.lane.b32.xlu0 %v771, 15
  %v1006 = vpop.permute.xlu0 %1005
  %1007 = vrot.lane.b32.xlu0 %v775, 15
  %v1008 = vpop.permute.xlu0 %1007
  %1009 = vrot.lane.b32.xlu0 %v779, 15
  %v1010 = vpop.permute.xlu0 %1009
  %1011 = vrot.lane.b32.xlu0 %v783, 15
  %v1012 = vpop.permute.xlu0 %1011
  %1013 = vrot.lane.b32.xlu0 %v772, 15
  %v1014 = vpop.permute.xlu0 %1013
  %1015 = vrot.lane.b32.xlu0 %v776, 15
  %v1016 = vpop.permute.xlu0 %1015
  %1017 = vrot.lane.b32.xlu0 %v780, 15
  %v1018 = vpop.permute.xlu0 %1017
  %1019 = vrot.lane.b32.xlu0 %v784, 15
  %v1020 = vpop.permute.xlu0 %1019
  %v1021 = vsel %vm198, %v1006, %v1014
  %v1022 = vsel %vm198, %v1008, %v1016
  %v1023 = vsel %vm198, %v1010, %v1018
  %v1024 = vsel %vm198, %v1012, %v1020
  %v1025 = vsel %vm198, %v998, %v1006
  %v1026 = vsel %vm198, %v1000, %v1008
  %v1027 = vsel %vm198, %v1002, %v1010
  %v1028 = vsel %vm198, %v1004, %v1012
  %v1029 = vsel %vm198, %v990, %v998
  %v1030 = vsel %vm198, %v992, %v1000
  %v1031 = vsel %vm198, %v994, %v1002
  %v1032 = vsel %vm198, %v996, %v1004
  %v1033 = vsel %vm198, %v1014, %v990
  %v1034 = vsel %vm198, %v1016, %v992
  %v1035 = vsel %vm198, %v1018, %v994
  %v1036 = vsel %vm198, %v1020, %v996
  %v1037 = vld [vmem:[%s207] ss:$8 sm:$0xf]
  %v1039 = vlaneseq
  %v1040 = vshrl.u32 %v1039, 7
  %v1041 = vsub.s32 0, %v1040
  %v1042 = vrot.slane %v1037, %v1041
  %v1043 = vlaneseq
  %v1044 = vshrl.u32 %v1043, 7
  %v1045 = vsub.s32 1, %v1044
  %v1046 = vrot.slane %v1037, %v1045
  %v1047 = vlaneseq
  %v1048 = vshrl.u32 %v1047, 7
  %v1049 = vsub.s32 2, %v1048
  %v1050 = vrot.slane %v1037, %v1049
  %v1051 = vlaneseq
  %v1052 = vshrl.u32 %v1051, 7
  %v1053 = vsub.s32 3, %v1052
  %v1054 = vrot.slane %v1037, %v1053
  %v1059 = vmul.f32 %v1033, %v1042
  %v1060 = vmul.f32 %v1029, %v1046
  %v1061 = vmul.f32 %v1025, %v1050
  %v1062 = vmul.f32 %v1021, %v1054
  %v1063 = vmul.f32 %v1034, %v1042
  %v1064 = vmul.f32 %v1030, %v1046
  %v1065 = vmul.f32 %v1026, %v1050
  %v1066 = vmul.f32 %v1022, %v1054
  %v1067 = vmul.f32 %v1035, %v1042
  %v1068 = vmul.f32 %v1031, %v1046
  %v1069 = vmul.f32 %v1027, %v1050
  %v1070 = vmul.f32 %v1023, %v1054
  %v1071 = vmul.f32 %v1036, %v1042
  %v1072 = vmul.f32 %v1032, %v1046
  %v1073 = vmul.f32 %v1028, %v1050
  %v1074 = vmul.f32 %v1024, %v1054
  %v1075 = vpack.c.bf16 %v1063, %v1059
  %v1076 = vpack.c.bf16 %v1064, %v1060
  %v1077 = vpack.c.bf16 %v1065, %v1061
  %v1078 = vpack.c.bf16 %v1066, %v1062
  %v1079 = vpack.c.bf16 %v1071, %v1067
  %v1080 = vpack.c.bf16 %v1072, %v1068
  %v1081 = vpack.c.bf16 %v1073, %v1069
  %v1082 = vpack.c.bf16 %v1074, %v1070
  %1083 = vst [vmem:[#allocation2 + $0x80] sm:$0xff] %v1075
  %1084 = vst [vmem:[#allocation2 + $0x88] sm:$0xff] %v1076
  %1085 = vst [vmem:[#allocation2 + $0x90] sm:$0xff] %v1077
  %1086 = vst [vmem:[#allocation2 + $0x98] sm:$0xff] %v1078
  %1087 = vst [vmem:[#allocation2 + $0xa0] sm:$0xff] %v1079
  %1088 = vst [vmem:[#allocation2 + $0xa8] sm:$0xff] %v1080
  %1089 = vst [vmem:[#allocation2 + $0xb0] sm:$0xff] %v1081
  %1090 = vst [vmem:[#allocation2 + $0xb8] sm:$0xff] %v1082
  %1091 = vrot.lane.b32.xlu0 %v769, 1
  %v1092 = vpop.permute.xlu0 %1091
  %1093 = vrot.lane.b32.xlu0 %v773, 1
  %v1094 = vpop.permute.xlu0 %1093
  %1095 = vrot.lane.b32.xlu0 %v777, 1
  %v1096 = vpop.permute.xlu0 %1095
  %1097 = vrot.lane.b32.xlu0 %v781, 1
  %v1098 = vpop.permute.xlu0 %1097
  %1099 = vrot.lane.b32.xlu0 %v770, 1
  %v1100 = vpop.permute.xlu0 %1099
  %1101 = vrot.lane.b32.xlu0 %v774, 1
  %v1102 = vpop.permute.xlu0 %1101
  %1103 = vrot.lane.b32.xlu0 %v778, 1
  %v1104 = vpop.permute.xlu0 %1103
  %1105 = vrot.lane.b32.xlu0 %v782, 1
  %v1106 = vpop.permute.xlu0 %1105
  %1107 = vrot.lane.b32.xlu0 %v771, 1
  %v1108 = vpop.permute.xlu0 %1107
  %1109 = vrot.lane.b32.xlu0 %v775, 1
  %v1110 = vpop.permute.xlu0 %1109
  %1111 = vrot.lane.b32.xlu0 %v779, 1
  %v1112 = vpop.permute.xlu0 %1111
  %1113 = vrot.lane.b32.xlu0 %v783, 1
  %v1114 = vpop.permute.xlu0 %1113
  %1115 = vrot.lane.b32.xlu0 %v772, 1
  %v1116 = vpop.permute.xlu0 %1115
  %1117 = vrot.lane.b32.xlu0 %v776, 1
  %v1118 = vpop.permute.xlu0 %1117
  %1119 = vrot.lane.b32.xlu0 %v780, 1
  %v1120 = vpop.permute.xlu0 %1119
  %1121 = vrot.lane.b32.xlu0 %v784, 1
  %v1122 = vpop.permute.xlu0 %1121
  %v1123 = vsel %vm262, %v1108, %v1116
  %v1124 = vsel %vm262, %v1110, %v1118
  %v1125 = vsel %vm262, %v1112, %v1120
  %v1126 = vsel %vm262, %v1114, %v1122
  %v1127 = vsel %vm262, %v1100, %v1108
  %v1128 = vsel %vm262, %v1102, %v1110
  %v1129 = vsel %vm262, %v1104, %v1112
  %v1130 = vsel %vm262, %v1106, %v1114
  %v1131 = vsel %vm262, %v1092, %v1100
  %v1132 = vsel %vm262, %v1094, %v1102
  %v1133 = vsel %vm262, %v1096, %v1104
  %v1134 = vsel %vm262, %v1098, %v1106
  %v1135 = vsel %vm262, %v1116, %v1092
  %v1136 = vsel %vm262, %v1118, %v1094
  %v1137 = vsel %vm262, %v1120, %v1096
  %v1138 = vsel %vm262, %v1122, %v1098
  %v1139 = vld [vmem:[%s271] ss:$8 sm:$0xf]
  %v1141 = vlaneseq
  %v1142 = vshrl.u32 %v1141, 7
  %v1143 = vsub.s32 0, %v1142
  %v1144 = vrot.slane %v1139, %v1143
  %v1145 = vlaneseq
  %v1146 = vshrl.u32 %v1145, 7
  %v1147 = vsub.s32 1, %v1146
  %v1148 = vrot.slane %v1139, %v1147
  %v1149 = vlaneseq
  %v1150 = vshrl.u32 %v1149, 7
  %v1151 = vsub.s32 2, %v1150
  %v1152 = vrot.slane %v1139, %v1151
  %v1153 = vlaneseq
  %v1154 = vshrl.u32 %v1153, 7
  %v1155 = vsub.s32 3, %v1154
  %v1156 = vrot.slane %v1139, %v1155
  %v1161 = vmul.f32 %v1135, %v1144
  %v1162 = vmul.f32 %v1131, %v1148
  %v1163 = vmul.f32 %v1127, %v1152
  %v1164 = vmul.f32 %v1123, %v1156
  %v1165 = vmul.f32 %v1136, %v1144
  %v1166 = vmul.f32 %v1132, %v1148
  %v1167 = vmul.f32 %v1128, %v1152
  %v1168 = vmul.f32 %v1124, %v1156
  %v1169 = vmul.f32 %v1137, %v1144
  %v1170 = vmul.f32 %v1133, %v1148
  %v1171 = vmul.f32 %v1129, %v1152
  %v1172 = vmul.f32 %v1125, %v1156
  %v1173 = vmul.f32 %v1138, %v1144
  %v1174 = vmul.f32 %v1134, %v1148
  %v1175 = vmul.f32 %v1130, %v1152
  %v1176 = vmul.f32 %v1126, %v1156
  %v1177 = vpack.c.bf16 %v1165, %v1161
  %v1178 = vpack.c.bf16 %v1166, %v1162
  %v1179 = vpack.c.bf16 %v1167, %v1163
  %v1180 = vpack.c.bf16 %v1168, %v1164
  %v1181 = vpack.c.bf16 %v1173, %v1169
  %v1182 = vpack.c.bf16 %v1174, %v1170
  %v1183 = vpack.c.bf16 %v1175, %v1171
  %v1184 = vpack.c.bf16 %v1176, %v1172
  %1185 = vst [vmem:[#allocation2 + $0xc0] sm:$0xff] %v1177
  %1186 = vst [vmem:[#allocation2 + $0xc8] sm:$0xff] %v1178
  %1187 = vst [vmem:[#allocation2 + $0xd0] sm:$0xff] %v1179
  %1188 = vst [vmem:[#allocation2 + $0xd8] sm:$0xff] %v1180
  %1189 = vst [vmem:[#allocation2 + $0xe0] sm:$0xff] %v1181
  %1190 = vst [vmem:[#allocation2 + $0xe8] sm:$0xff] %v1182
  %1191 = vst [vmem:[#allocation2 + $0xf0] sm:$0xff] %v1183
  %1192 = vst [vmem:[#allocation2 + $0xf8] sm:$0xff] %v1184
  %v1193 = vpack.c.bf16 %v773, %v769
  %v1194 = vpack.c.bf16 %v774, %v770
  %v1195 = vpack.c.bf16 %v775, %v771
  %v1196 = vpack.c.bf16 %v776, %v772
  %v1197 = vpack.c.bf16 %v781, %v777
  %v1198 = vpack.c.bf16 %v782, %v778
  %v1199 = vpack.c.bf16 %v783, %v779
  %v1200 = vpack.c.bf16 %v784, %v780
  %1201 = vst [vmem:[#allocation2 + $0x100] sm:$0xff] %v1193
  %1202 = vst [vmem:[#allocation2 + $0x108] sm:$0xff] %v1194
  %1203 = vst [vmem:[#allocation2 + $0x110] sm:$0xff] %v1195
  %1204 = vst [vmem:[#allocation2 + $0x118] sm:$0xff] %v1196
  %1205 = vst [vmem:[#allocation2 + $0x120] sm:$0xff] %v1197
  %1206 = vst [vmem:[#allocation2 + $0x128] sm:$0xff] %v1198
  %1207 = vst [vmem:[#allocation2 + $0x130] sm:$0xff] %v1199
  %1208 = vst [vmem:[#allocation2 + $0x138] sm:$0xff] %v1200
  %1209 = vrot.lane.b32.xlu0 %v769, 127
  %v1210 = vpop.permute.xlu0 %1209
  %1211 = vrot.lane.b32.xlu0 %v773, 127
  %v1212 = vpop.permute.xlu0 %1211
  %1213 = vrot.lane.b32.xlu0 %v777, 127
  %v1214 = vpop.permute.xlu0 %1213
  %1215 = vrot.lane.b32.xlu0 %v781, 127
  %v1216 = vpop.permute.xlu0 %1215
  %1217 = vrot.lane.b32.xlu0 %v770, 127
  %v1218 = vpop.permute.xlu0 %1217
  %1219 = vrot.lane.b32.xlu0 %v774, 127
  %v1220 = vpop.permute.xlu0 %1219
  %1221 = vrot.lane.b32.xlu0 %v778, 127
  %v1222 = vpop.permute.xlu0 %1221
  %1223 = vrot.lane.b32.xlu0 %v782, 127
  %v1224 = vpop.permute.xlu0 %1223
  %1225 = vrot.lane.b32.xlu0 %v771, 127
  %v1226 = vpop.permute.xlu0 %1225
  %1227 = vrot.lane.b32.xlu0 %v775, 127
  %v1228 = vpop.permute.xlu0 %1227
  %1229 = vrot.lane.b32.xlu0 %v779, 127
  %v1230 = vpop.permute.xlu0 %1229
  %1231 = vrot.lane.b32.xlu0 %v783, 127
  %v1232 = vpop.permute.xlu0 %1231
  %1233 = vrot.lane.b32.xlu0 %v772, 127
  %v1234 = vpop.permute.xlu0 %1233
  %1235 = vrot.lane.b32.xlu0 %v776, 127
  %v1236 = vpop.permute.xlu0 %1235
  %1237 = vrot.lane.b32.xlu0 %v780, 127
  %v1238 = vpop.permute.xlu0 %1237
  %1239 = vrot.lane.b32.xlu0 %v784, 127
  %v1240 = vpop.permute.xlu0 %1239
  %v1241 = vsel %vm334, %v1226, %v1234
  %v1242 = vsel %vm334, %v1228, %v1236
  %v1243 = vsel %vm334, %v1230, %v1238
  %v1244 = vsel %vm334, %v1232, %v1240
  %v1245 = vsel %vm334, %v1218, %v1226
  %v1246 = vsel %vm334, %v1220, %v1228
  %v1247 = vsel %vm334, %v1222, %v1230
  %v1248 = vsel %vm334, %v1224, %v1232
  %v1249 = vsel %vm334, %v1210, %v1218
  %v1250 = vsel %vm334, %v1212, %v1220
  %v1251 = vsel %vm334, %v1214, %v1222
  %v1252 = vsel %vm334, %v1216, %v1224
  %v1253 = vsel %vm334, %v1234, %v1210
  %v1254 = vsel %vm334, %v1236, %v1212
  %v1255 = vsel %vm334, %v1238, %v1214
  %v1256 = vsel %vm334, %v1240, %v1216
  %v1257 = vld [vmem:[%s343] ss:$8 sm:$0xf]
  %v1259 = vlaneseq
  %v1260 = vshrl.u32 %v1259, 7
  %v1261 = vsub.s32 0, %v1260
  %v1262 = vrot.slane %v1257, %v1261
  %v1263 = vlaneseq
  %v1264 = vshrl.u32 %v1263, 7
  %v1265 = vsub.s32 1, %v1264
  %v1266 = vrot.slane %v1257, %v1265
  %v1267 = vlaneseq
  %v1268 = vshrl.u32 %v1267, 7
  %v1269 = vsub.s32 2, %v1268
  %v1270 = vrot.slane %v1257, %v1269
  %v1271 = vlaneseq
  %v1272 = vshrl.u32 %v1271, 7
  %v1273 = vsub.s32 3, %v1272
  %v1274 = vrot.slane %v1257, %v1273
  %v1279 = vmul.f32 %v1249, %v1262
  %v1280 = vmul.f32 %v1245, %v1266
  %v1281 = vmul.f32 %v1241, %v1270
  %v1282 = vmul.f32 %v1253, %v1274
  %v1283 = vmul.f32 %v1250, %v1262
  %v1284 = vmul.f32 %v1246, %v1266
  %v1285 = vmul.f32 %v1242, %v1270
  %v1286 = vmul.f32 %v1254, %v1274
  %v1287 = vmul.f32 %v1251, %v1262
  %v1288 = vmul.f32 %v1247, %v1266
  %v1289 = vmul.f32 %v1243, %v1270
  %v1290 = vmul.f32 %v1255, %v1274
  %v1291 = vmul.f32 %v1252, %v1262
  %v1292 = vmul.f32 %v1248, %v1266
  %v1293 = vmul.f32 %v1244, %v1270
  %v1294 = vmul.f32 %v1256, %v1274
  %v1295 = vpack.c.bf16 %v1283, %v1279
  %v1296 = vpack.c.bf16 %v1284, %v1280
  %v1297 = vpack.c.bf16 %v1285, %v1281
  %v1298 = vpack.c.bf16 %v1286, %v1282
  %v1299 = vpack.c.bf16 %v1291, %v1287
  %v1300 = vpack.c.bf16 %v1292, %v1288
  %v1301 = vpack.c.bf16 %v1293, %v1289
  %v1302 = vpack.c.bf16 %v1294, %v1290
  %1303 = vst [vmem:[#allocation2 + $0x140] sm:$0xff] %v1295
  %1304 = vst [vmem:[#allocation2 + $0x148] sm:$0xff] %v1296
  %1305 = vst [vmem:[#allocation2 + $0x150] sm:$0xff] %v1297
  %1306 = vst [vmem:[#allocation2 + $0x158] sm:$0xff] %v1298
  %1307 = vst [vmem:[#allocation2 + $0x160] sm:$0xff] %v1299
  %1308 = vst [vmem:[#allocation2 + $0x168] sm:$0xff] %v1300
  %1309 = vst [vmem:[#allocation2 + $0x170] sm:$0xff] %v1301
  %1310 = vst [vmem:[#allocation2 + $0x178] sm:$0xff] %v1302
  %1311 = vrot.lane.b32.xlu0 %v769, 113
  %v1312 = vpop.permute.xlu0 %1311
  %1313 = vrot.lane.b32.xlu0 %v773, 113
  %v1314 = vpop.permute.xlu0 %1313
  %1315 = vrot.lane.b32.xlu0 %v777, 113
  %v1316 = vpop.permute.xlu0 %1315
  %1317 = vrot.lane.b32.xlu0 %v781, 113
  %v1318 = vpop.permute.xlu0 %1317
  %1319 = vrot.lane.b32.xlu0 %v770, 113
  %v1320 = vpop.permute.xlu0 %1319
  %1321 = vrot.lane.b32.xlu0 %v774, 113
  %v1322 = vpop.permute.xlu0 %1321
  %1323 = vrot.lane.b32.xlu0 %v778, 113
  %v1324 = vpop.permute.xlu0 %1323
  %1325 = vrot.lane.b32.xlu0 %v782, 113
  %v1326 = vpop.permute.xlu0 %1325
  %1327 = vrot.lane.b32.xlu0 %v771, 113
  %v1328 = vpop.permute.xlu0 %1327
  %1329 = vrot.lane.b32.xlu0 %v775, 113
  %v1330 = vpop.permute.xlu0 %1329
  %1331 = vrot.lane.b32.xlu0 %v779, 113
  %v1332 = vpop.permute.xlu0 %1331
  %1333 = vrot.lane.b32.xlu0 %v783, 113
  %v1334 = vpop.permute.xlu0 %1333
  %1335 = vrot.lane.b32.xlu0 %v772, 113
  %v1336 = vpop.permute.xlu0 %1335
  %1337 = vrot.lane.b32.xlu0 %v776, 113
  %v1338 = vpop.permute.xlu0 %1337
  %1339 = vrot.lane.b32.xlu0 %v780, 113
  %v1340 = vpop.permute.xlu0 %1339
  %1341 = vrot.lane.b32.xlu0 %v784, 113
  %v1342 = vpop.permute.xlu0 %1341
  %v1343 = vsel %vm398, %v1328, %v1336
  %v1344 = vsel %vm398, %v1330, %v1338
  %v1345 = vsel %vm398, %v1332, %v1340
  %v1346 = vsel %vm398, %v1334, %v1342
  %v1347 = vsel %vm398, %v1320, %v1328
  %v1348 = vsel %vm398, %v1322, %v1330
  %v1349 = vsel %vm398, %v1324, %v1332
  %v1350 = vsel %vm398, %v1326, %v1334
  %v1351 = vsel %vm398, %v1312, %v1320
  %v1352 = vsel %vm398, %v1314, %v1322
  %v1353 = vsel %vm398, %v1316, %v1324
  %v1354 = vsel %vm398, %v1318, %v1326
  %v1355 = vsel %vm398, %v1336, %v1312
  %v1356 = vsel %vm398, %v1338, %v1314
  %v1357 = vsel %vm398, %v1340, %v1316
  %v1358 = vsel %vm398, %v1342, %v1318
  %v1359 = vld [vmem:[%s407] ss:$8 sm:$0xf]
  %v1361 = vlaneseq
  %v1362 = vshrl.u32 %v1361, 7
  %v1363 = vsub.s32 0, %v1362
  %v1364 = vrot.slane %v1359, %v1363
  %v1365 = vlaneseq
  %v1366 = vshrl.u32 %v1365, 7
  %v1367 = vsub.s32 1, %v1366
  %v1368 = vrot.slane %v1359, %v1367
  %v1369 = vlaneseq
  %v1370 = vshrl.u32 %v1369, 7
  %v1371 = vsub.s32 2, %v1370
  %v1372 = vrot.slane %v1359, %v1371
  %v1373 = vlaneseq
  %v1374 = vshrl.u32 %v1373, 7
  %v1375 = vsub.s32 3, %v1374
  %v1376 = vrot.slane %v1359, %v1375
  %v1381 = vmul.f32 %v1351, %v1364
  %v1382 = vmul.f32 %v1347, %v1368
  %v1383 = vmul.f32 %v1343, %v1372
  %v1384 = vmul.f32 %v1355, %v1376
  %v1385 = vmul.f32 %v1352, %v1364
  %v1386 = vmul.f32 %v1348, %v1368
  %v1387 = vmul.f32 %v1344, %v1372
  %v1388 = vmul.f32 %v1356, %v1376
  %v1389 = vmul.f32 %v1353, %v1364
  %v1390 = vmul.f32 %v1349, %v1368
  %v1391 = vmul.f32 %v1345, %v1372
  %v1392 = vmul.f32 %v1357, %v1376
  %v1393 = vmul.f32 %v1354, %v1364
  %v1394 = vmul.f32 %v1350, %v1368
  %v1395 = vmul.f32 %v1346, %v1372
  %v1396 = vmul.f32 %v1358, %v1376
  %v1397 = vpack.c.bf16 %v1385, %v1381
  %v1398 = vpack.c.bf16 %v1386, %v1382
  %v1399 = vpack.c.bf16 %v1387, %v1383
  %v1400 = vpack.c.bf16 %v1388, %v1384
  %v1401 = vpack.c.bf16 %v1393, %v1389
  %v1402 = vpack.c.bf16 %v1394, %v1390
  %v1403 = vpack.c.bf16 %v1395, %v1391
  %v1404 = vpack.c.bf16 %v1396, %v1392
  %1405 = vst [vmem:[#allocation2 + $0x180] sm:$0xff] %v1397
  %1406 = vst [vmem:[#allocation2 + $0x188] sm:$0xff] %v1398
  %1407 = vst [vmem:[#allocation2 + $0x190] sm:$0xff] %v1399
  %1408 = vst [vmem:[#allocation2 + $0x198] sm:$0xff] %v1400
  %1409 = vst [vmem:[#allocation2 + $0x1a0] sm:$0xff] %v1401
  %1410 = vst [vmem:[#allocation2 + $0x1a8] sm:$0xff] %v1402
  %1411 = vst [vmem:[#allocation2 + $0x1b0] sm:$0xff] %v1403
  %1412 = vst [vmem:[#allocation2 + $0x1b8] sm:$0xff] %v1404
  %1413 = vrot.lane.b32.xlu0 %v769, 112
  %v1414 = vpop.permute.xlu0 %1413
  %1415 = vrot.lane.b32.xlu0 %v773, 112
  %v1416 = vpop.permute.xlu0 %1415
  %1417 = vrot.lane.b32.xlu0 %v777, 112
  %v1418 = vpop.permute.xlu0 %1417
  %1419 = vrot.lane.b32.xlu0 %v781, 112
  %v1420 = vpop.permute.xlu0 %1419
  %1421 = vrot.lane.b32.xlu0 %v770, 112
  %v1422 = vpop.permute.xlu0 %1421
  %1423 = vrot.lane.b32.xlu0 %v774, 112
  %v1424 = vpop.permute.xlu0 %1423
  %1425 = vrot.lane.b32.xlu0 %v778, 112
  %v1426 = vpop.permute.xlu0 %1425
  %1427 = vrot.lane.b32.xlu0 %v782, 112
  %v1428 = vpop.permute.xlu0 %1427
  %1429 = vrot.lane.b32.xlu0 %v771, 112
  %v1430 = vpop.permute.xlu0 %1429
  %1431 = vrot.lane.b32.xlu0 %v775, 112
  %v1432 = vpop.permute.xlu0 %1431
  %1433 = vrot.lane.b32.xlu0 %v779, 112
  %v1434 = vpop.permute.xlu0 %1433
  %1435 = vrot.lane.b32.xlu0 %v783, 112
  %v1436 = vpop.permute.xlu0 %1435
  %1437 = vrot.lane.b32.xlu0 %v772, 112
  %v1438 = vpop.permute.xlu0 %1437
  %1439 = vrot.lane.b32.xlu0 %v776, 112
  %v1440 = vpop.permute.xlu0 %1439
  %1441 = vrot.lane.b32.xlu0 %v780, 112
  %v1442 = vpop.permute.xlu0 %1441
  %1443 = vrot.lane.b32.xlu0 %v784, 112
  %v1444 = vpop.permute.xlu0 %1443
  %v1445 = vsel %vm462, %v1430, %v1438
  %v1446 = vsel %vm462, %v1432, %v1440
  %v1447 = vsel %vm462, %v1434, %v1442
  %v1448 = vsel %vm462, %v1436, %v1444
  %v1449 = vsel %vm462, %v1422, %v1430
  %v1450 = vsel %vm462, %v1424, %v1432
  %v1451 = vsel %vm462, %v1426, %v1434
  %v1452 = vsel %vm462, %v1428, %v1436
  %v1453 = vsel %vm462, %v1414, %v1422
  %v1454 = vsel %vm462, %v1416, %v1424
  %v1455 = vsel %vm462, %v1418, %v1426
  %v1456 = vsel %vm462, %v1420, %v1428
  %v1457 = vsel %vm462, %v1438, %v1414
  %v1458 = vsel %vm462, %v1440, %v1416
  %v1459 = vsel %vm462, %v1442, %v1418
  %v1460 = vsel %vm462, %v1444, %v1420
  %v1461 = vld [vmem:[%s471] ss:$8 sm:$0xf]
  %v1463 = vlaneseq
  %v1464 = vshrl.u32 %v1463, 7
  %v1465 = vsub.s32 0, %v1464
  %v1466 = vrot.slane %v1461, %v1465
  %v1467 = vlaneseq
  %v1468 = vshrl.u32 %v1467, 7
  %v1469 = vsub.s32 1, %v1468
  %v1470 = vrot.slane %v1461, %v1469
  %v1471 = vlaneseq
  %v1472 = vshrl.u32 %v1471, 7
  %v1473 = vsub.s32 2, %v1472
  %v1474 = vrot.slane %v1461, %v1473
  %v1475 = vlaneseq
  %v1476 = vshrl.u32 %v1475, 7
  %v1477 = vsub.s32 3, %v1476
  %v1478 = vrot.slane %v1461, %v1477
  %v1483 = vmul.f32 %v1453, %v1466
  %v1484 = vmul.f32 %v1449, %v1470
  %v1485 = vmul.f32 %v1445, %v1474
  %v1486 = vmul.f32 %v1457, %v1478
  %v1487 = vmul.f32 %v1454, %v1466
  %v1488 = vmul.f32 %v1450, %v1470
  %v1489 = vmul.f32 %v1446, %v1474
  %v1490 = vmul.f32 %v1458, %v1478
  %v1491 = vmul.f32 %v1455, %v1466
  %v1492 = vmul.f32 %v1451, %v1470
  %v1493 = vmul.f32 %v1447, %v1474
  %v1494 = vmul.f32 %v1459, %v1478
  %v1495 = vmul.f32 %v1456, %v1466
  %v1496 = vmul.f32 %v1452, %v1470
  %v1497 = vmul.f32 %v1448, %v1474
  %v1498 = vmul.f32 %v1460, %v1478
  %v1499 = vpack.c.bf16 %v1487, %v1483
  %v1500 = vpack.c.bf16 %v1488, %v1484
  %v1501 = vpack.c.bf16 %v1489, %v1485
  %v1502 = vpack.c.bf16 %v1490, %v1486
  %v1503 = vpack.c.bf16 %v1495, %v1491
  %v1504 = vpack.c.bf16 %v1496, %v1492
  %v1505 = vpack.c.bf16 %v1497, %v1493
  %v1506 = vpack.c.bf16 %v1498, %v1494
  %1507 = vst [vmem:[#allocation2 + $0x1c0] sm:$0xff] %v1499
  %1508 = vst [vmem:[#allocation2 + $0x1c8] sm:$0xff] %v1500
  %1509 = vst [vmem:[#allocation2 + $0x1d0] sm:$0xff] %v1501
  %1510 = vst [vmem:[#allocation2 + $0x1d8] sm:$0xff] %v1502
  %1511 = vst [vmem:[#allocation2 + $0x1e0] sm:$0xff] %v1503
  %1512 = vst [vmem:[#allocation2 + $0x1e8] sm:$0xff] %v1504
  %1513 = vst [vmem:[#allocation2 + $0x1f0] sm:$0xff] %v1505
  %1514 = vst [vmem:[#allocation2 + $0x1f8] sm:$0xff] %v1506
  %1515 = vrot.lane.b32.xlu0 %v769, 111
  %v1516 = vpop.permute.xlu0 %1515
  %1517 = vrot.lane.b32.xlu0 %v773, 111
  %v1518 = vpop.permute.xlu0 %1517
  %1519 = vrot.lane.b32.xlu0 %v777, 111
  %v1520 = vpop.permute.xlu0 %1519
  %1521 = vrot.lane.b32.xlu0 %v781, 111
  %v1522 = vpop.permute.xlu0 %1521
  %1523 = vrot.lane.b32.xlu0 %v770, 111
  %v1524 = vpop.permute.xlu0 %1523
  %1525 = vrot.lane.b32.xlu0 %v774, 111
  %v1526 = vpop.permute.xlu0 %1525
  %1527 = vrot.lane.b32.xlu0 %v778, 111
  %v1528 = vpop.permute.xlu0 %1527
  %1529 = vrot.lane.b32.xlu0 %v782, 111
  %v1530 = vpop.permute.xlu0 %1529
  %1531 = vrot.lane.b32.xlu0 %v771, 111
  %v1532 = vpop.permute.xlu0 %1531
  %1533 = vrot.lane.b32.xlu0 %v775, 111
  %v1534 = vpop.permute.xlu0 %1533
  %1535 = vrot.lane.b32.xlu0 %v779, 111
  %v1536 = vpop.permute.xlu0 %1535
  %1537 = vrot.lane.b32.xlu0 %v783, 111
  %v1538 = vpop.permute.xlu0 %1537
  %1539 = vrot.lane.b32.xlu0 %v772, 111
  %v1540 = vpop.permute.xlu0 %1539
  %1541 = vrot.lane.b32.xlu0 %v776, 111
  %v1542 = vpop.permute.xlu0 %1541
  %1543 = vrot.lane.b32.xlu0 %v780, 111
  %v1544 = vpop.permute.xlu0 %1543
  %1545 = vrot.lane.b32.xlu0 %v784, 111
  %v1546 = vpop.permute.xlu0 %1545
  %v1547 = vsel %vm526, %v1532, %v1540
  %v1548 = vsel %vm526, %v1534, %v1542
  %v1549 = vsel %vm526, %v1536, %v1544
  %v1550 = vsel %vm526, %v1538, %v1546
  %v1551 = vsel %vm526, %v1524, %v1532
  %v1552 = vsel %vm526, %v1526, %v1534
  %v1553 = vsel %vm526, %v1528, %v1536
  %v1554 = vsel %vm526, %v1530, %v1538
  %v1555 = vsel %vm526, %v1516, %v1524
  %v1556 = vsel %vm526, %v1518, %v1526
  %v1557 = vsel %vm526, %v1520, %v1528
  %v1558 = vsel %vm526, %v1522, %v1530
  %v1559 = vsel %vm526, %v1540, %v1516
  %v1560 = vsel %vm526, %v1542, %v1518
  %v1561 = vsel %vm526, %v1544, %v1520
  %v1562 = vsel %vm526, %v1546, %v1522
  %v1563 = vld [vmem:[%s535] ss:$8 sm:$0xf]
  %v1565 = vlaneseq
  %v1566 = vshrl.u32 %v1565, 7
  %v1567 = vsub.s32 0, %v1566
  %v1568 = vrot.slane %v1563, %v1567
  %v1569 = vlaneseq
  %v1570 = vshrl.u32 %v1569, 7
  %v1571 = vsub.s32 1, %v1570
  %v1572 = vrot.slane %v1563, %v1571
  %v1573 = vlaneseq
  %v1574 = vshrl.u32 %v1573, 7
  %v1575 = vsub.s32 2, %v1574
  %v1576 = vrot.slane %v1563, %v1575
  %v1577 = vlaneseq
  %v1578 = vshrl.u32 %v1577, 7
  %v1579 = vsub.s32 3, %v1578
  %v1580 = vrot.slane %v1563, %v1579
  %v1585 = vmul.f32 %v1555, %v1568
  %v1586 = vmul.f32 %v1551, %v1572
  %v1587 = vmul.f32 %v1547, %v1576
  %v1588 = vmul.f32 %v1559, %v1580
  %v1589 = vmul.f32 %v1556, %v1568
  %v1590 = vmul.f32 %v1552, %v1572
  %v1591 = vmul.f32 %v1548, %v1576
  %v1592 = vmul.f32 %v1560, %v1580
  %v1593 = vmul.f32 %v1557, %v1568
  %v1594 = vmul.f32 %v1553, %v1572
  %v1595 = vmul.f32 %v1549, %v1576
  %v1596 = vmul.f32 %v1561, %v1580
  %v1597 = vmul.f32 %v1558, %v1568
  %v1598 = vmul.f32 %v1554, %v1572
  %v1599 = vmul.f32 %v1550, %v1576
  %v1600 = vmul.f32 %v1562, %v1580
  %v1601 = vpack.c.bf16 %v1589, %v1585
  %v1602 = vpack.c.bf16 %v1590, %v1586
  %v1603 = vpack.c.bf16 %v1591, %v1587
  %v1604 = vpack.c.bf16 %v1592, %v1588
  %v1605 = vpack.c.bf16 %v1597, %v1593
  %v1606 = vpack.c.bf16 %v1598, %v1594
  %v1607 = vpack.c.bf16 %v1599, %v1595
  %v1608 = vpack.c.bf16 %v1600, %v1596
  %1609 = vst [vmem:[#allocation2 + $0x200] sm:$0xff] %v1601
  %1610 = vst [vmem:[#allocation2 + $0x208] sm:$0xff] %v1602
  %1611 = vst [vmem:[#allocation2 + $0x210] sm:$0xff] %v1603
  %1612 = vst [vmem:[#allocation2 + $0x218] sm:$0xff] %v1604
  %1613 = vst [vmem:[#allocation2 + $0x220] sm:$0xff] %v1605
  %1614 = vst [vmem:[#allocation2 + $0x228] sm:$0xff] %v1606
  %1615 = vst [vmem:[#allocation2 + $0x230] sm:$0xff] %v1607
  %1616 = vst [vmem:[#allocation2 + $0x238] sm:$0xff] %v1608
  %v1617 = vld [vmem:[%s4] sm:$0xff]
  %v1618 = vld [vmem:[%s4 + $0x8] sm:$0xf]
  %v1619 = vld [vmem:[%s4 + $0xc] sm:$0xff]
  %v1620 = vld [vmem:[%s4 + $0x14] sm:$0xf]
  %v1621 = vld [vmem:[#allocation2] sm:$0xff]
  %v1622 = vld [vmem:[#allocation2 + $0x8] sm:$0xff]
  %v1623 = vld [vmem:[#allocation2 + $0x10] sm:$0xff]
  %v1624 = vld [vmem:[#allocation2 + $0x18] sm:$0xff]
  %v1625 = vld [vmem:[#allocation2 + $0x20] sm:$0xff]
  %v1626 = vld [vmem:[#allocation2 + $0x28] sm:$0xff]
  %v1627 = vld [vmem:[#allocation2 + $0x30] sm:$0xff]
  %v1628 = vld [vmem:[#allocation2 + $0x38] sm:$0xff]
  %v1629 = vld [vmem:[#allocation2 + $0x40] sm:$0xff]
  %v1630 = vld [vmem:[#allocation2 + $0x48] sm:$0xff]
  %v1631 = vld [vmem:[#allocation2 + $0x50] sm:$0xff]
  %v1632 = vld [vmem:[#allocation2 + $0x58] sm:$0xff]
  %v1633 = vld [vmem:[#allocation2 + $0x60] sm:$0xff]
  %v1634 = vld [vmem:[#allocation2 + $0x68] sm:$0xff]
  %v1635 = vld [vmem:[#allocation2 + $0x70] sm:$0xff]
  %v1636 = vld [vmem:[#allocation2 + $0x78] sm:$0xff]
  %v1637 = vld [vmem:[#allocation2 + $0x80] sm:$0xff]
  %v1638 = vld [vmem:[#allocation2 + $0x88] sm:$0xff]
  %v1639 = vld [vmem:[#allocation2 + $0x90] sm:$0xff]
  %v1640 = vld [vmem:[#allocation2 + $0x98] sm:$0xff]
  %v1641 = vld [vmem:[#allocation2 + $0xa0] sm:$0xff]
  %v1642 = vld [vmem:[#allocation2 + $0xa8] sm:$0xff]
  %v1643 = vld [vmem:[#allocation2 + $0xb0] sm:$0xff]
  %v1644 = vld [vmem:[#allocation2 + $0xb8] sm:$0xff]
  %v1645 = vld [vmem:[#allocation2 + $0xc0] sm:$0xff]
  %v1646 = vld [vmem:[#allocation2 + $0xc8] sm:$0xff]
  %v1647 = vld [vmem:[#allocation2 + $0xd0] sm:$0xff]
  %v1648 = vld [vmem:[#allocation2 + $0xd8] sm:$0xff]
  %v1649 = vld [vmem:[#allocation2 + $0xe0] sm:$0xff]
  %v1650 = vld [vmem:[#allocation2 + $0xe8] sm:$0xff]
  %v1651 = vld [vmem:[#allocation2 + $0xf0] sm:$0xff]
  %v1652 = vld [vmem:[#allocation2 + $0xf8] sm:$0xff]
  %v1653 = vld [vmem:[#allocation2 + $0x100] sm:$0xff]
  %v1654 = vld [vmem:[#allocation2 + $0x108] sm:$0xff]
  %v1655 = vld [vmem:[#allocation2 + $0x110] sm:$0xff]
  %v1656 = vld [vmem:[#allocation2 + $0x118] sm:$0xff]
  %v1657 = vld [vmem:[#allocation2 + $0x120] sm:$0xff]
  %v1658 = vld [vmem:[#allocation2 + $0x128] sm:$0xff]
  %v1659 = vld [vmem:[#allocation2 + $0x130] sm:$0xff]
  %v1660 = vld [vmem:[#allocation2 + $0x138] sm:$0xff]
  %v1661 = vld [vmem:[#allocation2 + $0x140] sm:$0xff]
  %v1662 = vld [vmem:[#allocation2 + $0x148] sm:$0xff]
  %v1663 = vld [vmem:[#allocation2 + $0x150] sm:$0xff]
  %v1664 = vld [vmem:[#allocation2 + $0x158] sm:$0xff]
  %v1665 = vld [vmem:[#allocation2 + $0x160] sm:$0xff]
  %v1666 = vld [vmem:[#allocation2 + $0x168] sm:$0xff]
  %v1667 = vld [vmem:[#allocation2 + $0x170] sm:$0xff]
  %v1668 = vld [vmem:[#allocation2 + $0x178] sm:$0xff]
  %v1669 = vld [vmem:[#allocation2 + $0x180] sm:$0xff]
  %v1670 = vld [vmem:[#allocation2 + $0x188] sm:$0xff]
  %v1671 = vld [vmem:[#allocation2 + $0x190] sm:$0xff]
  %v1672 = vld [vmem:[#allocation2 + $0x198] sm:$0xff]
  %v1673 = vld [vmem:[#allocation2 + $0x1a0] sm:$0xff]
  %v1674 = vld [vmem:[#allocation2 + $0x1a8] sm:$0xff]
  %v1675 = vld [vmem:[#allocation2 + $0x1b0] sm:$0xff]
  %v1676 = vld [vmem:[#allocation2 + $0x1b8] sm:$0xff]
  %v1677 = vld [vmem:[#allocation2 + $0x1c0] sm:$0xff]
  %v1678 = vld [vmem:[#allocation2 + $0x1c8] sm:$0xff]
  %v1679 = vld [vmem:[#allocation2 + $0x1d0] sm:$0xff]
  %v1680 = vld [vmem:[#allocation2 + $0x1d8] sm:$0xff]
  %v1681 = vld [vmem:[#allocation2 + $0x1e0] sm:$0xff]
  %v1682 = vld [vmem:[#allocation2 + $0x1e8] sm:$0xff]
  %v1683 = vld [vmem:[#allocation2 + $0x1f0] sm:$0xff]
  %v1684 = vld [vmem:[#allocation2 + $0x1f8] sm:$0xff]
  %v1685 = vld [vmem:[#allocation2 + $0x200] sm:$0xff]
  %v1686 = vld [vmem:[#allocation2 + $0x208] sm:$0xff]
  %v1687 = vld [vmem:[#allocation2 + $0x210] sm:$0xff]
  %v1688 = vld [vmem:[#allocation2 + $0x218] sm:$0xff]
  %v1689 = vld [vmem:[#allocation2 + $0x220] sm:$0xff]
  %v1690 = vld [vmem:[#allocation2 + $0x228] sm:$0xff]
  %v1691 = vld [vmem:[#allocation2 + $0x230] sm:$0xff]
  %v1692 = vld [vmem:[#allocation2 + $0x238] sm:$0xff]
  %v1693 = vld [vmem:[%s9] sm:$0xff]
  %v1694 = vld [vmem:[%s9 + $0x8] sm:$0xff]
  %1696 = vset.pattern.permute.xlu0 0
  %1697 = vperm.xlu0 %1696, %v1693
  %v1698 = vpop.permute.xlu0 %1697
  %1701 = vset.pattern.permute.xlu0 0
  %1702 = vperm.xlu0 %1701, %v1694
  %v1703 = vpop.permute.xlu0 %1702
  %v1709 = vunpack.c.l.b16 %v1617
  %v1710 = vunpack.c.h.b16 %v1617
  %v1711 = vunpack.c.l.b16 %v1618
  %v1712 = vunpack.c.l.b16 %v1619
  %v1713 = vunpack.c.h.b16 %v1619
  %v1714 = vunpack.c.l.b16 %v1620
  %v1715 = vpack.c.b16 %v1712, %v1709
  %v1716 = vpack.c.b16 %v1713, %v1710
  %v1717 = vpack.c.b16 %v1714, %v1711
  %vm1720 = vcmask 261120
  %v1722 = vsel %vm1720, %v1717, 0
  %1724 = vmatprep.subr.bf16.mxu0 %v1622
  %1725 = vmatpush1.bf16.msra.mxu0 %v1621
  %1726 = vmatprep.subr.bf16.mxu0 %v1626
  %1727 = vmatpush1.bf16.msra.mxu0 %v1625
  %1728 = vmatprep.subr.bf16.mxu0 %v1630
  %1729 = vmatpush1.bf16.msra.mxu0 %v1629
  %1730 = vmatprep.subr.bf16.mxu0 %v1634
  %1731 = vmatpush1.bf16.msra.mxu0 %v1633
  %1732 = vmatprep.subr.bf16.mxu0 %v1638
  %1733 = vmatpush1.bf16.msra.mxu0 %v1637
  %1734 = vmatprep.subr.bf16.mxu0 %v1642
  %1735 = vmatpush1.bf16.msra.mxu0 %v1641
  %1736 = vmatprep.subr.bf16.mxu0 %v1646
  %1737 = vmatpush1.bf16.msra.mxu0 %v1645
  %1738 = vmatprep.subr.bf16.mxu0 %v1650
  %1739 = vmatpush1.bf16.msra.mxu0 %v1649
  %1740 = vmatprep.subr.bf16.mxu0 %v1654
  %1741 = vmatpush1.bf16.msra.mxu0 %v1653
  %1742 = vmatprep.subr.bf16.mxu0 %v1658
  %1743 = vmatpush1.bf16.msra.mxu0 %v1657
  %1744 = vmatprep.subr.bf16.mxu0 %v1662
  %1745 = vmatpush1.bf16.msra.mxu0 %v1661
  %1746 = vmatprep.subr.bf16.mxu0 %v1666
  %1747 = vmatpush1.bf16.msra.mxu0 %v1665
  %1748 = vmatprep.subr.bf16.mxu0 %v1670
  %1749 = vmatpush1.bf16.msra.mxu0 %v1669
  %1750 = vmatprep.subr.bf16.mxu0 %v1674
  %1751 = vmatpush1.bf16.msra.mxu0 %v1673
  %1752 = vmatprep.subr.bf16.mxu0 %v1678
  %1753 = vmatpush1.bf16.msra.mxu0 %v1677
  %1754 = vmatprep.subr.bf16.mxu0 %v1682
  %1755 = vmatpush1.bf16.msra.mxu0 %v1681
  %1756 = vmatprep.mubr.bf16.mxu0 %v1716
  %1757 = vmatmul.mubr.bf16.gmra.mrb[0].mxu0 %v1715
  %v1758 = vpop.f32.mrb[0].mxu0
  %v1759 = vadd.f32 %v1698, %v1758
  %v1760 = vpop.f32.mrb[0].mxu0
  %v1761 = vadd.f32 %v1698, %v1760
  %v1762 = vpop.f32.mrb[0].mxu0
  %v1763 = vadd.f32 %v1703, %v1762
  %v1764 = vpop.f32.mrb[0].mxu0
  %v1765 = vadd.f32 %v1703, %v1764
  %1766 = vdwg.mxu0
  %1767 = vmatprep.subr.bf16.mxu0 %v1686
  %1768 = vmatpush1.bf16.msra.mxu0 %v1685
  %1769 = vmatprep.subr.bf16.mxu0 %v1690
  %1770 = vmatpush1.bf16.msra.mxu0 %v1689
  %1771 = vmatprep.subr.bf16.mxu0 0
  %1772 = vmatpush1.bf16.msra.mxu0 0
  %1773 = vmatprep.subr.bf16.mxu0 0
  %1774 = vmatpush1.bf16.msra.mxu0 0
  %1775 = vmatprep.subr.bf16.mxu0 0
  %1776 = vmatpush1.bf16.msra.mxu0 0
  %1777 = vmatprep.subr.bf16.mxu0 0
  %1778 = vmatpush1.bf16.msra.mxu0 0
  %1779 = vmatprep.subr.bf16.mxu0 0
  %1780 = vmatpush1.bf16.msra.mxu0 0
  %1781 = vmatprep.subr.bf16.mxu0 0
  %1782 = vmatpush1.bf16.msra.mxu0 0
  %1783 = vmatprep.subr.bf16.mxu0 0
  %1784 = vmatpush1.bf16.msra.mxu0 0
  %1785 = vmatprep.subr.bf16.mxu0 0
  %1786 = vmatpush1.bf16.msra.mxu0 0
  %1787 = vmatprep.subr.bf16.mxu0 0
  %1788 = vmatpush1.bf16.msra.mxu0 0
  %1789 = vmatprep.subr.bf16.mxu0 0
  %1790 = vmatpush1.bf16.msra.mxu0 0
  %1791 = vmatprep.subr.bf16.mxu0 0
  %1792 = vmatpush1.bf16.msra.mxu0 0
  %1793 = vmatprep.subr.bf16.mxu0 0
  %1794 = vmatpush1.bf16.msra.mxu0 0
  %1795 = vmatprep.subr.bf16.mxu0 0
  %1796 = vmatpush1.bf16.msra.mxu0 0
  %1797 = vmatprep.subr.bf16.mxu0 0
  %1798 = vmatpush1.bf16.msra.mxu0 0
  %1799 = vmatprep.mubr.bf16.mxu0 0
  %1800 = vmatmul.mubr.bf16.gmra.mrb[0].mxu0 %v1722
  %v1801 = vpop.f32.mrb[0].mxu0
  %v1802 = vadd.f32 %v1759, %v1801
  %v1803 = vpop.f32.mrb[0].mxu0
  %v1804 = vadd.f32 %v1761, %v1803
  %v1805 = vpop.f32.mrb[0].mxu0
  %v1806 = vadd.f32 %v1763, %v1805
  %v1807 = vpop.f32.mrb[0].mxu0
  %v1808 = vadd.f32 %v1765, %v1807
  %1809 = vdwg.mxu0
  %1810 = vmatprep.subr.bf16.mxu0 %v1624
  %1811 = vmatpush1.bf16.msra.mxu0 %v1623
  %1812 = vmatprep.subr.bf16.mxu0 %v1628
  %1813 = vmatpush1.bf16.msra.mxu0 %v1627
  %1814 = vmatprep.subr.bf16.mxu0 %v1632
  %1815 = vmatpush1.bf16.msra.mxu0 %v1631
  %1816 = vmatprep.subr.bf16.mxu0 %v1636
  %1817 = vmatpush1.bf16.msra.mxu0 %v1635
  %1818 = vmatprep.subr.bf16.mxu0 %v1640
  %1819 = vmatpush1.bf16.msra.mxu0 %v1639
  %1820 = vmatprep.subr.bf16.mxu0 %v1644
  %1821 = vmatpush1.bf16.msra.mxu0 %v1643
  %1822 = vmatprep.subr.bf16.mxu0 %v1648
  %1823 = vmatpush1.bf16.msra.mxu0 %v1647
  %1824 = vmatprep.subr.bf16.mxu0 %v1652
  %1825 = vmatpush1.bf16.msra.mxu0 %v1651
  %1826 = vmatprep.subr.bf16.mxu0 %v1656
  %1827 = vmatpush1.bf16.msra.mxu0 %v1655
  %1828 = vmatprep.subr.bf16.mxu0 %v1660
  %1829 = vmatpush1.bf16.msra.mxu0 %v1659
  %1830 = vmatprep.subr.bf16.mxu0 %v1664
  %1831 = vmatpush1.bf16.msra.mxu0 %v1663
  %1832 = vmatprep.subr.bf16.mxu0 %v1668
  %1833 = vmatpush1.bf16.msra.mxu0 %v1667
  %1834 = vmatprep.subr.bf16.mxu0 %v1672
  %1835 = vmatpush1.bf16.msra.mxu0 %v1671
  %1836 = vmatprep.subr.bf16.mxu0 %v1676
  %1837 = vmatpush1.bf16.msra.mxu0 %v1675
  %1838 = vmatprep.subr.bf16.mxu0 %v1680
  %1839 = vmatpush1.bf16.msra.mxu0 %v1679
  %1840 = vmatprep.subr.bf16.mxu0 %v1684
  %1841 = vmatpush1.bf16.msra.mxu0 %v1683
  %1842 = vmatprep.mubr.bf16.mxu0 %v1716
  %1843 = vmatmul.mubr.bf16.gmra.mrb[0].mxu0 %v1715
  %v1844 = vpop.f32.mrb[0].mxu0
  %v1845 = vadd.f32 %v1698, %v1844
  %v1846 = vpop.f32.mrb[0].mxu0
  %v1847 = vadd.f32 %v1698, %v1846
  %v1848 = vpop.f32.mrb[0].mxu0
  %v1849 = vadd.f32 %v1703, %v1848
  %v1850 = vpop.f32.mrb[0].mxu0
  %v1851 = vadd.f32 %v1703, %v1850
  %1852 = vdwg.mxu0
  %1853 = vmatprep.subr.bf16.mxu0 %v1688
  %1854 = vmatpush1.bf16.msra.mxu0 %v1687
  %1855 = vmatprep.subr.bf16.mxu0 %v1692
  %1856 = vmatpush1.bf16.msra.mxu0 %v1691
  %1857 = vmatprep.subr.bf16.mxu0 0
  %1858 = vmatpush1.bf16.msra.mxu0 0
  %1859 = vmatprep.subr.bf16.mxu0 0
  %1860 = vmatpush1.bf16.msra.mxu0 0
  %1861 = vmatprep.subr.bf16.mxu0 0
  %1862 = vmatpush1.bf16.msra.mxu0 0
  %1863 = vmatprep.subr.bf16.mxu0 0
  %1864 = vmatpush1.bf16.msra.mxu0 0
  %1865 = vmatprep.subr.bf16.mxu0 0
  %1866 = vmatpush1.bf16.msra.mxu0 0
  %1867 = vmatprep.subr.bf16.mxu0 0
  %1868 = vmatpush1.bf16.msra.mxu0 0
  %1869 = vmatprep.subr.bf16.mxu0 0
  %1870 = vmatpush1.bf16.msra.mxu0 0
  %1871 = vmatprep.subr.bf16.mxu0 0
  %1872 = vmatpush1.bf16.msra.mxu0 0
  %1873 = vmatprep.subr.bf16.mxu0 0
  %1874 = vmatpush1.bf16.msra.mxu0 0
  %1875 = vmatprep.subr.bf16.mxu0 0
  %1876 = vmatpush1.bf16.msra.mxu0 0
  %1877 = vmatprep.subr.bf16.mxu0 0
  %1878 = vmatpush1.bf16.msra.mxu0 0
  %1879 = vmatprep.subr.bf16.mxu0 0
  %1880 = vmatpush1.bf16.msra.mxu0 0
  %1881 = vmatprep.subr.bf16.mxu0 0
  %1882 = vmatpush1.bf16.msra.mxu0 0
  %1883 = vmatprep.subr.bf16.mxu0 0
  %1884 = vmatpush1.bf16.msra.mxu0 0
  %1885 = vmatprep.mubr.bf16.mxu0 0
  %1886 = vmatmul.mubr.bf16.gmra.mrb[0].mxu0 %v1722
  %v1887 = vpop.f32.mrb[0].mxu0
  %v1888 = vadd.f32 %v1845, %v1887
  %v1889 = vpop.f32.mrb[0].mxu0
  %v1890 = vadd.f32 %v1847, %v1889
  %v1891 = vpop.f32.mrb[0].mxu0
  %v1892 = vadd.f32 %v1849, %v1891
  %v1893 = vpop.f32.mrb[0].mxu0
  %v1894 = vadd.f32 %v1851, %v1893
  %1895 = vdwg.mxu0
  %v1896 = vmax.f32 %v1802, 0.0
  %v1897 = vmax.f32 %v1804, 0.0
  %v1898 = vmax.f32 %v1888, 0.0
  %v1899 = vmax.f32 %v1890, 0.0
  %v1900 = vmax.f32 %v1806, 0.0
  %v1901 = vmax.f32 %v1808, 0.0
  %v1902 = vmax.f32 %v1892, 0.0
  %v1903 = vmax.f32 %v1894, 0.0
  %1904 = vrot.lane.b32.xlu0 %v1896, 17
  %v1905 = vpop.permute.xlu0 %1904
  %1906 = vrot.lane.b32.xlu0 %v1900, 17
  %v1907 = vpop.permute.xlu0 %1906
  %1908 = vrot.lane.b32.xlu0 %v1897, 17
  %v1909 = vpop.permute.xlu0 %1908
  %1910 = vrot.lane.b32.xlu0 %v1901, 17
  %v1911 = vpop.permute.xlu0 %1910
  %1912 = vrot.lane.b32.xlu0 %v1898, 17
  %v1913 = vpop.permute.xlu0 %1912
  %1914 = vrot.lane.b32.xlu0 %v1902, 17
  %v1915 = vpop.permute.xlu0 %1914
  %1916 = vrot.lane.b32.xlu0 %v1899, 17
  %v1917 = vpop.permute.xlu0 %1916
  %1918 = vrot.lane.b32.xlu0 %v1903, 17
  %v1919 = vpop.permute.xlu0 %1918
  %v1920 = vsel %vm71, %v1913, %v1917
  %v1921 = vsel %vm71, %v1915, %v1919
  %v1922 = vsel %vm71, %v1909, %v1913
  %v1923 = vsel %vm71, %v1911, %v1915
  %v1924 = vsel %vm71, %v1905, %v1909
  %v1925 = vsel %vm71, %v1907, %v1911
  %v1926 = vsel %vm71, %v1917, %v1905
  %v1927 = vsel %vm71, %v1919, %v1907
  %v1928 = vld [vmem:[%s2] ss:$8 sm:$0xf]
  %v1930 = vlaneseq
  %v1931 = vshrl.u32 %v1930, 7
  %v1932 = vsub.s32 0, %v1931
  %v1933 = vrot.slane %v1928, %v1932
  %v1934 = vlaneseq
  %v1935 = vshrl.u32 %v1934, 7
  %v1936 = vsub.s32 1, %v1935
  %v1937 = vrot.slane %v1928, %v1936
  %v1938 = vlaneseq
  %v1939 = vshrl.u32 %v1938, 7
  %v1940 = vsub.s32 2, %v1939
  %v1941 = vrot.slane %v1928, %v1940
  %v1942 = vlaneseq
  %v1943 = vshrl.u32 %v1942, 7
  %v1944 = vsub.s32 3, %v1943
  %v1945 = vrot.slane %v1928, %v1944
  %v1950 = vmul.f32 %v1926, %v1933
  %v1951 = vmul.f32 %v1924, %v1937
  %v1952 = vmul.f32 %v1922, %v1941
  %v1953 = vmul.f32 %v1920, %v1945
  %v1954 = vmul.f32 %v1927, %v1933
  %v1955 = vmul.f32 %v1925, %v1937
  %v1956 = vmul.f32 %v1923, %v1941
  %v1957 = vmul.f32 %v1921, %v1945
  %v1958 = vpack.c.bf16 %v1954, %v1950
  %v1959 = vpack.c.bf16 %v1955, %v1951
  %v1960 = vpack.c.bf16 %v1956, %v1952
  %v1961 = vpack.c.bf16 %v1957, %v1953
  %1962 = vst [vmem:[#allocation2] sm:$0xff] %v1958
  %1963 = vst [vmem:[#allocation2 + $0x8] sm:$0xff] %v1959
  %1964 = vst [vmem:[#allocation2 + $0x10] sm:$0xff] %v1960
  %1965 = vst [vmem:[#allocation2 + $0x18] sm:$0xff] %v1961
  %1966 = vrot.lane.b32.xlu0 %v1896, 16
  %v1967 = vpop.permute.xlu0 %1966
  %1968 = vrot.lane.b32.xlu0 %v1900, 16
  %v1969 = vpop.permute.xlu0 %1968
  %1970 = vrot.lane.b32.xlu0 %v1897, 16
  %v1971 = vpop.permute.xlu0 %1970
  %1972 = vrot.lane.b32.xlu0 %v1901, 16
  %v1973 = vpop.permute.xlu0 %1972
  %1974 = vrot.lane.b32.xlu0 %v1898, 16
  %v1975 = vpop.permute.xlu0 %1974
  %1976 = vrot.lane.b32.xlu0 %v1902, 16
  %v1977 = vpop.permute.xlu0 %1976
  %1978 = vrot.lane.b32.xlu0 %v1899, 16
  %v1979 = vpop.permute.xlu0 %1978
  %1980 = vrot.lane.b32.xlu0 %v1903, 16
  %v1981 = vpop.permute.xlu0 %1980
  %v1982 = vsel %vm134, %v1975, %v1979
  %v1983 = vsel %vm134, %v1977, %v1981
  %v1984 = vsel %vm134, %v1971, %v1975
  %v1985 = vsel %vm134, %v1973, %v1977
  %v1986 = vsel %vm134, %v1967, %v1971
  %v1987 = vsel %vm134, %v1969, %v1973
  %v1988 = vsel %vm134, %v1979, %v1967
  %v1989 = vsel %vm134, %v1981, %v1969
  %v1990 = vld [vmem:[%s143] ss:$8 sm:$0xf]
  %v1992 = vlaneseq
  %v1993 = vshrl.u32 %v1992, 7
  %v1994 = vsub.s32 0, %v1993
  %v1995 = vrot.slane %v1990, %v1994
  %v1996 = vlaneseq
  %v1997 = vshrl.u32 %v1996, 7
  %v1998 = vsub.s32 1, %v1997
  %v1999 = vrot.slane %v1990, %v1998
  %v2000 = vlaneseq
  %v2001 = vshrl.u32 %v2000, 7
  %v2002 = vsub.s32 2, %v2001
  %v2003 = vrot.slane %v1990, %v2002
  %v2004 = vlaneseq
  %v2005 = vshrl.u32 %v2004, 7
  %v2006 = vsub.s32 3, %v2005
  %v2007 = vrot.slane %v1990, %v2006
  %v2012 = vmul.f32 %v1988, %v1995
  %v2013 = vmul.f32 %v1986, %v1999
  %v2014 = vmul.f32 %v1984, %v2003
  %v2015 = vmul.f32 %v1982, %v2007
  %v2016 = vmul.f32 %v1989, %v1995
  %v2017 = vmul.f32 %v1987, %v1999
  %v2018 = vmul.f32 %v1985, %v2003
  %v2019 = vmul.f32 %v1983, %v2007
  %v2020 = vpack.c.bf16 %v2016, %v2012
  %v2021 = vpack.c.bf16 %v2017, %v2013
  %v2022 = vpack.c.bf16 %v2018, %v2014
  %v2023 = vpack.c.bf16 %v2019, %v2015
  %2024 = vst [vmem:[#allocation2 + $0x20] sm:$0xff] %v2020
  %2025 = vst [vmem:[#allocation2 + $0x28] sm:$0xff] %v2021
  %2026 = vst [vmem:[#allocation2 + $0x30] sm:$0xff] %v2022
  %2027 = vst [vmem:[#allocation2 + $0x38] sm:$0xff] %v2023
  %2028 = vrot.lane.b32.xlu0 %v1896, 15
  %v2029 = vpop.permute.xlu0 %2028
  %2030 = vrot.lane.b32.xlu0 %v1900, 15
  %v2031 = vpop.permute.xlu0 %2030
  %2032 = vrot.lane.b32.xlu0 %v1897, 15
  %v2033 = vpop.permute.xlu0 %2032
  %2034 = vrot.lane.b32.xlu0 %v1901, 15
  %v2035 = vpop.permute.xlu0 %2034
  %2036 = vrot.lane.b32.xlu0 %v1898, 15
  %v2037 = vpop.permute.xlu0 %2036
  %2038 = vrot.lane.b32.xlu0 %v1902, 15
  %v2039 = vpop.permute.xlu0 %2038
  %2040 = vrot.lane.b32.xlu0 %v1899, 15
  %v2041 = vpop.permute.xlu0 %2040
  %2042 = vrot.lane.b32.xlu0 %v1903, 15
  %v2043 = vpop.permute.xlu0 %2042
  %v2044 = vsel %vm198, %v2037, %v2041
  %v2045 = vsel %vm198, %v2039, %v2043
  %v2046 = vsel %vm198, %v2033, %v2037
  %v2047 = vsel %vm198, %v2035, %v2039
  %v2048 = vsel %vm198, %v2029, %v2033
  %v2049 = vsel %vm198, %v2031, %v2035
  %v2050 = vsel %vm198, %v2041, %v2029
  %v2051 = vsel %vm198, %v2043, %v2031
  %v2052 = vld [vmem:[%s207] ss:$8 sm:$0xf]
  %v2054 = vlaneseq
  %v2055 = vshrl.u32 %v2054, 7
  %v2056 = vsub.s32 0, %v2055
  %v2057 = vrot.slane %v2052, %v2056
  %v2058 = vlaneseq
  %v2059 = vshrl.u32 %v2058, 7
  %v2060 = vsub.s32 1, %v2059
  %v2061 = vrot.slane %v2052, %v2060
  %v2062 = vlaneseq
  %v2063 = vshrl.u32 %v2062, 7
  %v2064 = vsub.s32 2, %v2063
  %v2065 = vrot.slane %v2052, %v2064
  %v2066 = vlaneseq
  %v2067 = vshrl.u32 %v2066, 7
  %v2068 = vsub.s32 3, %v2067
  %v2069 = vrot.slane %v2052, %v2068
  %v2074 = vmul.f32 %v2050, %v2057
  %v2075 = vmul.f32 %v2048, %v2061
  %v2076 = vmul.f32 %v2046, %v2065
  %v2077 = vmul.f32 %v2044, %v2069
  %v2078 = vmul.f32 %v2051, %v2057
  %v2079 = vmul.f32 %v2049, %v2061
  %v2080 = vmul.f32 %v2047, %v2065
  %v2081 = vmul.f32 %v2045, %v2069
  %v2082 = vpack.c.bf16 %v2078, %v2074
  %v2083 = vpack.c.bf16 %v2079, %v2075
  %v2084 = vpack.c.bf16 %v2080, %v2076
  %v2085 = vpack.c.bf16 %v2081, %v2077
  %2086 = vst [vmem:[#allocation2 + $0x40] sm:$0xff] %v2082
  %2087 = vst [vmem:[#allocation2 + $0x48] sm:$0xff] %v2083
  %2088 = vst [vmem:[#allocation2 + $0x50] sm:$0xff] %v2084
  %2089 = vst [vmem:[#allocation2 + $0x58] sm:$0xff] %v2085
  %2090 = vrot.lane.b32.xlu0 %v1896, 1
  %v2091 = vpop.permute.xlu0 %2090
  %2092 = vrot.lane.b32.xlu0 %v1900, 1
  %v2093 = vpop.permute.xlu0 %2092
  %2094 = vrot.lane.b32.xlu0 %v1897, 1
  %v2095 = vpop.permute.xlu0 %2094
  %2096 = vrot.lane.b32.xlu0 %v1901, 1
  %v2097 = vpop.permute.xlu0 %2096
  %2098 = vrot.lane.b32.xlu0 %v1898, 1
  %v2099 = vpop.permute.xlu0 %2098
  %2100 = vrot.lane.b32.xlu0 %v1902, 1
  %v2101 = vpop.permute.xlu0 %2100
  %2102 = vrot.lane.b32.xlu0 %v1899, 1
  %v2103 = vpop.permute.xlu0 %2102
  %2104 = vrot.lane.b32.xlu0 %v1903, 1
  %v2105 = vpop.permute.xlu0 %2104
  %v2106 = vsel %vm262, %v2099, %v2103
  %v2107 = vsel %vm262, %v2101, %v2105
  %v2108 = vsel %vm262, %v2095, %v2099
  %v2109 = vsel %vm262, %v2097, %v2101
  %v2110 = vsel %vm262, %v2091, %v2095
  %v2111 = vsel %vm262, %v2093, %v2097
  %v2112 = vsel %vm262, %v2103, %v2091
  %v2113 = vsel %vm262, %v2105, %v2093
  %v2114 = vld [vmem:[%s271] ss:$8 sm:$0xf]
  %v2116 = vlaneseq
  %v2117 = vshrl.u32 %v2116, 7
  %v2118 = vsub.s32 0, %v2117
  %v2119 = vrot.slane %v2114, %v2118
  %v2120 = vlaneseq
  %v2121 = vshrl.u32 %v2120, 7
  %v2122 = vsub.s32 1, %v2121
  %v2123 = vrot.slane %v2114, %v2122
  %v2124 = vlaneseq
  %v2125 = vshrl.u32 %v2124, 7
  %v2126 = vsub.s32 2, %v2125
  %v2127 = vrot.slane %v2114, %v2126
  %v2128 = vlaneseq
  %v2129 = vshrl.u32 %v2128, 7
  %v2130 = vsub.s32 3, %v2129
  %v2131 = vrot.slane %v2114, %v2130
  %v2136 = vmul.f32 %v2112, %v2119
  %v2137 = vmul.f32 %v2110, %v2123
  %v2138 = vmul.f32 %v2108, %v2127
  %v2139 = vmul.f32 %v2106, %v2131
  %v2140 = vmul.f32 %v2113, %v2119
  %v2141 = vmul.f32 %v2111, %v2123
  %v2142 = vmul.f32 %v2109, %v2127
  %v2143 = vmul.f32 %v2107, %v2131
  %v2144 = vpack.c.bf16 %v2140, %v2136
  %v2145 = vpack.c.bf16 %v2141, %v2137
  %v2146 = vpack.c.bf16 %v2142, %v2138
  %v2147 = vpack.c.bf16 %v2143, %v2139
  %2148 = vst [vmem:[#allocation2 + $0x60] sm:$0xff] %v2144
  %2149 = vst [vmem:[#allocation2 + $0x68] sm:$0xff] %v2145
  %2150 = vst [vmem:[#allocation2 + $0x70] sm:$0xff] %v2146
  %2151 = vst [vmem:[#allocation2 + $0x78] sm:$0xff] %v2147
  %v2152 = vpack.c.bf16 %v1900, %v1896
  %v2153 = vpack.c.bf16 %v1901, %v1897
  %v2154 = vpack.c.bf16 %v1902, %v1898
  %v2155 = vpack.c.bf16 %v1903, %v1899
  %2156 = vst [vmem:[#allocation2 + $0x80] sm:$0xff] %v2152
  %2157 = vst [vmem:[#allocation2 + $0x88] sm:$0xff] %v2153
  %2158 = vst [vmem:[#allocation2 + $0x90] sm:$0xff] %v2154
  %2159 = vst [vmem:[#allocation2 + $0x98] sm:$0xff] %v2155
  %2160 = vrot.lane.b32.xlu0 %v1896, 127
  %v2161 = vpop.permute.xlu0 %2160
  %2162 = vrot.lane.b32.xlu0 %v1900, 127
  %v2163 = vpop.permute.xlu0 %2162
  %2164 = vrot.lane.b32.xlu0 %v1897, 127
  %v2165 = vpop.permute.xlu0 %2164
  %2166 = vrot.lane.b32.xlu0 %v1901, 127
  %v2167 = vpop.permute.xlu0 %2166
  %2168 = vrot.lane.b32.xlu0 %v1898, 127
  %v2169 = vpop.permute.xlu0 %2168
  %2170 = vrot.lane.b32.xlu0 %v1902, 127
  %v2171 = vpop.permute.xlu0 %2170
  %2172 = vrot.lane.b32.xlu0 %v1899, 127
  %v2173 = vpop.permute.xlu0 %2172
  %2174 = vrot.lane.b32.xlu0 %v1903, 127
  %v2175 = vpop.permute.xlu0 %2174
  %v2176 = vsel %vm334, %v2169, %v2173
  %v2177 = vsel %vm334, %v2171, %v2175
  %v2178 = vsel %vm334, %v2165, %v2169
  %v2179 = vsel %vm334, %v2167, %v2171
  %v2180 = vsel %vm334, %v2161, %v2165
  %v2181 = vsel %vm334, %v2163, %v2167
  %v2182 = vsel %vm334, %v2173, %v2161
  %v2183 = vsel %vm334, %v2175, %v2163
  %v2184 = vld [vmem:[%s343] ss:$8 sm:$0xf]
  %v2186 = vlaneseq
  %v2187 = vshrl.u32 %v2186, 7
  %v2188 = vsub.s32 0, %v2187
  %v2189 = vrot.slane %v2184, %v2188
  %v2190 = vlaneseq
  %v2191 = vshrl.u32 %v2190, 7
  %v2192 = vsub.s32 1, %v2191
  %v2193 = vrot.slane %v2184, %v2192
  %v2194 = vlaneseq
  %v2195 = vshrl.u32 %v2194, 7
  %v2196 = vsub.s32 2, %v2195
  %v2197 = vrot.slane %v2184, %v2196
  %v2198 = vlaneseq
  %v2199 = vshrl.u32 %v2198, 7
  %v2200 = vsub.s32 3, %v2199
  %v2201 = vrot.slane %v2184, %v2200
  %v2206 = vmul.f32 %v2180, %v2189
  %v2207 = vmul.f32 %v2178, %v2193
  %v2208 = vmul.f32 %v2176, %v2197
  %v2209 = vmul.f32 %v2182, %v2201
  %v2210 = vmul.f32 %v2181, %v2189
  %v2211 = vmul.f32 %v2179, %v2193
  %v2212 = vmul.f32 %v2177, %v2197
  %v2213 = vmul.f32 %v2183, %v2201
  %v2214 = vpack.c.bf16 %v2210, %v2206
  %v2215 = vpack.c.bf16 %v2211, %v2207
  %v2216 = vpack.c.bf16 %v2212, %v2208
  %v2217 = vpack.c.bf16 %v2213, %v2209
  %2218 = vst [vmem:[#allocation2 + $0xa0] sm:$0xff] %v2214
  %2219 = vst [vmem:[#allocation2 + $0xa8] sm:$0xff] %v2215
  %2220 = vst [vmem:[#allocation2 + $0xb0] sm:$0xff] %v2216
  %2221 = vst [vmem:[#allocation2 + $0xb8] sm:$0xff] %v2217
  %2222 = vrot.lane.b32.xlu0 %v1896, 113
  %v2223 = vpop.permute.xlu0 %2222
  %2224 = vrot.lane.b32.xlu0 %v1900, 113
  %v2225 = vpop.permute.xlu0 %2224
  %2226 = vrot.lane.b32.xlu0 %v1897, 113
  %v2227 = vpop.permute.xlu0 %2226
  %2228 = vrot.lane.b32.xlu0 %v1901, 113
  %v2229 = vpop.permute.xlu0 %2228
  %2230 = vrot.lane.b32.xlu0 %v1898, 113
  %v2231 = vpop.permute.xlu0 %2230
  %2232 = vrot.lane.b32.xlu0 %v1902, 113
  %v2233 = vpop.permute.xlu0 %2232
  %2234 = vrot.lane.b32.xlu0 %v1899, 113
  %v2235 = vpop.permute.xlu0 %2234
  %2236 = vrot.lane.b32.xlu0 %v1903, 113
  %v2237 = vpop.permute.xlu0 %2236
  %v2238 = vsel %vm398, %v2231, %v2235
  %v2239 = vsel %vm398, %v2233, %v2237
  %v2240 = vsel %vm398, %v2227, %v2231
  %v2241 = vsel %vm398, %v2229, %v2233
  %v2242 = vsel %vm398, %v2223, %v2227
  %v2243 = vsel %vm398, %v2225, %v2229
  %v2244 = vsel %vm398, %v2235, %v2223
  %v2245 = vsel %vm398, %v2237, %v2225
  %v2246 = vld [vmem:[%s407] ss:$8 sm:$0xf]
  %v2248 = vlaneseq
  %v2249 = vshrl.u32 %v2248, 7
  %v2250 = vsub.s32 0, %v2249
  %v2251 = vrot.slane %v2246, %v2250
  %v2252 = vlaneseq
  %v2253 = vshrl.u32 %v2252, 7
  %v2254 = vsub.s32 1, %v2253
  %v2255 = vrot.slane %v2246, %v2254
  %v2256 = vlaneseq
  %v2257 = vshrl.u32 %v2256, 7
  %v2258 = vsub.s32 2, %v2257
  %v2259 = vrot.slane %v2246, %v2258
  %v2260 = vlaneseq
  %v2261 = vshrl.u32 %v2260, 7
  %v2262 = vsub.s32 3, %v2261
  %v2263 = vrot.slane %v2246, %v2262
  %v2268 = vmul.f32 %v2242, %v2251
  %v2269 = vmul.f32 %v2240, %v2255
  %v2270 = vmul.f32 %v2238, %v2259
  %v2271 = vmul.f32 %v2244, %v2263
  %v2272 = vmul.f32 %v2243, %v2251
  %v2273 = vmul.f32 %v2241, %v2255
  %v2274 = vmul.f32 %v2239, %v2259
  %v2275 = vmul.f32 %v2245, %v2263
  %v2276 = vpack.c.bf16 %v2272, %v2268
  %v2277 = vpack.c.bf16 %v2273, %v2269
  %v2278 = vpack.c.bf16 %v2274, %v2270
  %v2279 = vpack.c.bf16 %v2275, %v2271
  %2280 = vst [vmem:[#allocation2 + $0xc0] sm:$0xff] %v2276
  %2281 = vst [vmem:[#allocation2 + $0xc8] sm:$0xff] %v2277
  %2282 = vst [vmem:[#allocation2 + $0xd0] sm:$0xff] %v2278
  %2283 = vst [vmem:[#allocation2 + $0xd8] sm:$0xff] %v2279
  %2284 = vrot.lane.b32.xlu0 %v1896, 112
  %v2285 = vpop.permute.xlu0 %2284
  %2286 = vrot.lane.b32.xlu0 %v1900, 112
  %v2287 = vpop.permute.xlu0 %2286
  %2288 = vrot.lane.b32.xlu0 %v1897, 112
  %v2289 = vpop.permute.xlu0 %2288
  %2290 = vrot.lane.b32.xlu0 %v1901, 112
  %v2291 = vpop.permute.xlu0 %2290
  %2292 = vrot.lane.b32.xlu0 %v1898, 112
  %v2293 = vpop.permute.xlu0 %2292
  %2294 = vrot.lane.b32.xlu0 %v1902, 112
  %v2295 = vpop.permute.xlu0 %2294
  %2296 = vrot.lane.b32.xlu0 %v1899, 112
  %v2297 = vpop.permute.xlu0 %2296
  %2298 = vrot.lane.b32.xlu0 %v1903, 112
  %v2299 = vpop.permute.xlu0 %2298
  %v2300 = vsel %vm462, %v2293, %v2297
  %v2301 = vsel %vm462, %v2295, %v2299
  %v2302 = vsel %vm462, %v2289, %v2293
  %v2303 = vsel %vm462, %v2291, %v2295
  %v2304 = vsel %vm462, %v2285, %v2289
  %v2305 = vsel %vm462, %v2287, %v2291
  %v2306 = vsel %vm462, %v2297, %v2285
  %v2307 = vsel %vm462, %v2299, %v2287
  %v2308 = vld [vmem:[%s471] ss:$8 sm:$0xf]
  %v2310 = vlaneseq
  %v2311 = vshrl.u32 %v2310, 7
  %v2312 = vsub.s32 0, %v2311
  %v2313 = vrot.slane %v2308, %v2312
  %v2314 = vlaneseq
  %v2315 = vshrl.u32 %v2314, 7
  %v2316 = vsub.s32 1, %v2315
  %v2317 = vrot.slane %v2308, %v2316
  %v2318 = vlaneseq
  %v2319 = vshrl.u32 %v2318, 7
  %v2320 = vsub.s32 2, %v2319
  %v2321 = vrot.slane %v2308, %v2320
  %v2322 = vlaneseq
  %v2323 = vshrl.u32 %v2322, 7
  %v2324 = vsub.s32 3, %v2323
  %v2325 = vrot.slane %v2308, %v2324
  %v2330 = vmul.f32 %v2304, %v2313
  %v2331 = vmul.f32 %v2302, %v2317
  %v2332 = vmul.f32 %v2300, %v2321
  %v2333 = vmul.f32 %v2306, %v2325
  %v2334 = vmul.f32 %v2305, %v2313
  %v2335 = vmul.f32 %v2303, %v2317
  %v2336 = vmul.f32 %v2301, %v2321
  %v2337 = vmul.f32 %v2307, %v2325
  %v2338 = vpack.c.bf16 %v2334, %v2330
  %v2339 = vpack.c.bf16 %v2335, %v2331
  %v2340 = vpack.c.bf16 %v2336, %v2332
  %v2341 = vpack.c.bf16 %v2337, %v2333
  %2342 = vst [vmem:[#allocation2 + $0xe0] sm:$0xff] %v2338
  %2343 = vst [vmem:[#allocation2 + $0xe8] sm:$0xff] %v2339
  %2344 = vst [vmem:[#allocation2 + $0xf0] sm:$0xff] %v2340
  %2345 = vst [vmem:[#allocation2 + $0xf8] sm:$0xff] %v2341
  %2346 = vrot.lane.b32.xlu0 %v1896, 111
  %v2347 = vpop.permute.xlu0 %2346
  %2348 = vrot.lane.b32.xlu0 %v1900, 111
  %v2349 = vpop.permute.xlu0 %2348
  %2350 = vrot.lane.b32.xlu0 %v1897, 111
  %v2351 = vpop.permute.xlu0 %2350
  %2352 = vrot.lane.b32.xlu0 %v1901, 111
  %v2353 = vpop.permute.xlu0 %2352
  %2354 = vrot.lane.b32.xlu0 %v1898, 111
  %v2355 = vpop.permute.xlu0 %2354
  %2356 = vrot.lane.b32.xlu0 %v1902, 111
  %v2357 = vpop.permute.xlu0 %2356
  %2358 = vrot.lane.b32.xlu0 %v1899, 111
  %v2359 = vpop.permute.xlu0 %2358
  %2360 = vrot.lane.b32.xlu0 %v1903, 111
  %v2361 = vpop.permute.xlu0 %2360
  %v2362 = vsel %vm526, %v2355, %v2359
  %v2363 = vsel %vm526, %v2357, %v2361
  %v2364 = vsel %vm526, %v2351, %v2355
  %v2365 = vsel %vm526, %v2353, %v2357
  %v2366 = vsel %vm526, %v2347, %v2351
  %v2367 = vsel %vm526, %v2349, %v2353
  %v2368 = vsel %vm526, %v2359, %v2347
  %v2369 = vsel %vm526, %v2361, %v2349
  %v2370 = vld [vmem:[%s535] ss:$8 sm:$0xf]
  %v2372 = vlaneseq
  %v2373 = vshrl.u32 %v2372, 7
  %v2374 = vsub.s32 0, %v2373
  %v2375 = vrot.slane %v2370, %v2374
  %v2376 = vlaneseq
  %v2377 = vshrl.u32 %v2376, 7
  %v2378 = vsub.s32 1, %v2377
  %v2379 = vrot.slane %v2370, %v2378
  %v2380 = vlaneseq
  %v2381 = vshrl.u32 %v2380, 7
  %v2382 = vsub.s32 2, %v2381
  %v2383 = vrot.slane %v2370, %v2382
  %v2384 = vlaneseq
  %v2385 = vshrl.u32 %v2384, 7
  %v2386 = vsub.s32 3, %v2385
  %v2387 = vrot.slane %v2370, %v2386
  %v2392 = vmul.f32 %v2366, %v2375
  %v2393 = vmul.f32 %v2364, %v2379
  %v2394 = vmul.f32 %v2362, %v2383
  %v2395 = vmul.f32 %v2368, %v2387
  %v2396 = vmul.f32 %v2367, %v2375
  %v2397 = vmul.f32 %v2365, %v2379
  %v2398 = vmul.f32 %v2363, %v2383
  %v2399 = vmul.f32 %v2369, %v2387
  %v2400 = vpack.c.bf16 %v2396, %v2392
  %v2401 = vpack.c.bf16 %v2397, %v2393
  %v2402 = vpack.c.bf16 %v2398, %v2394
  %v2403 = vpack.c.bf16 %v2399, %v2395
  %2404 = vst [vmem:[#allocation2 + $0x100] sm:$0xff] %v2400
  %2405 = vst [vmem:[#allocation2 + $0x108] sm:$0xff] %v2401
  %2406 = vst [vmem:[#allocation2 + $0x110] sm:$0xff] %v2402
  %2407 = vst [vmem:[#allocation2 + $0x118] sm:$0xff] %v2403
  %v2408 = vld [vmem:[%s5] sm:$0xff]
  %v2409 = vld [vmem:[%s5 + $0x8] sm:$0xff]
  %v2410 = vld [vmem:[#allocation2] sm:$0xff]
  %v2411 = vld [vmem:[#allocation2 + $0x8] sm:$0xff]
  %v2412 = vld [vmem:[#allocation2 + $0x10] sm:$0xff]
  %v2413 = vld [vmem:[#allocation2 + $0x18] sm:$0xff]
  %v2414 = vld [vmem:[#allocation2 + $0x20] sm:$0xff]
  %v2415 = vld [vmem:[#allocation2 + $0x28] sm:$0xff]
  %v2416 = vld [vmem:[#allocation2 + $0x30] sm:$0xff]
  %v2417 = vld [vmem:[#allocation2 + $0x38] sm:$0xff]
  %v2418 = vld [vmem:[#allocation2 + $0x40] sm:$0xff]
  %v2419 = vld [vmem:[#allocation2 + $0x48] sm:$0xff]
  %v2420 = vld [vmem:[#allocation2 + $0x50] sm:$0xff]
  %v2421 = vld [vmem:[#allocation2 + $0x58] sm:$0xff]
  %v2422 = vld [vmem:[#allocation2 + $0x60] sm:$0xff]
  %v2423 = vld [vmem:[#allocation2 + $0x68] sm:$0xff]
  %v2424 = vld [vmem:[#allocation2 + $0x70] sm:$0xff]
  %v2425 = vld [vmem:[#allocation2 + $0x78] sm:$0xff]
  %v2426 = vld [vmem:[#allocation2 + $0x80] sm:$0xff]
  %v2427 = vld [vmem:[#allocation2 + $0x88] sm:$0xff]
  %v2428 = vld [vmem:[#allocation2 + $0x90] sm:$0xff]
  %v2429 = vld [vmem:[#allocation2 + $0x98] sm:$0xff]
  %v2430 = vld [vmem:[#allocation2 + $0xa0] sm:$0xff]
  %v2431 = vld [vmem:[#allocation2 + $0xa8] sm:$0xff]
  %v2432 = vld [vmem:[#allocation2 + $0xb0] sm:$0xff]
  %v2433 = vld [vmem:[#allocation2 + $0xb8] sm:$0xff]
  %v2434 = vld [vmem:[#allocation2 + $0xc0] sm:$0xff]
  %v2435 = vld [vmem:[#allocation2 + $0xc8] sm:$0xff]
  %v2436 = vld [vmem:[#allocation2 + $0xd0] sm:$0xff]
  %v2437 = vld [vmem:[#allocation2 + $0xd8] sm:$0xff]
  %v2438 = vld [vmem:[#allocation2 + $0xe0] sm:$0xff]
  %v2439 = vld [vmem:[#allocation2 + $0xe8] sm:$0xff]
  %v2440 = vld [vmem:[#allocation2 + $0xf0] sm:$0xff]
  %v2441 = vld [vmem:[#allocation2 + $0xf8] sm:$0xff]
  %v2442 = vld [vmem:[#allocation2 + $0x100] sm:$0xff]
  %v2443 = vld [vmem:[#allocation2 + $0x108] sm:$0xff]
  %v2444 = vld [vmem:[#allocation2 + $0x110] sm:$0xff]
  %v2445 = vld [vmem:[#allocation2 + $0x118] sm:$0xff]
  %v2446 = vld [vmem:[%s10] sm:$0xff]
  %v2447 = vld [vmem:[%s10 + $0x8] sm:$0xff]
  %2449 = vset.pattern.permute.xlu0 0
  %2450 = vperm.xlu0 %2449, %v2446
  %v2451 = vpop.permute.xlu0 %2450
  %2454 = vset.pattern.permute.xlu0 0
  %2455 = vperm.xlu0 %2454, %v2447
  %v2456 = vpop.permute.xlu0 %2455
  %v2460 = vunpack.c.l.b16 %v2408
  %v2461 = vunpack.c.h.b16 %v2408
  %v2462 = vunpack.c.l.b16 %v2409
  %v2463 = vunpack.c.h.b16 %v2409
  %v2464 = vpack.c.b16 %v2462, %v2460
  %v2465 = vpack.c.b16 %v2463, %v2461
  %v2468 = vsel %vm656, %v2465, 0
  %2470 = vmatprep.subr.bf16.mxu0 %v2411
  %2471 = vmatpush1.bf16.msra.mxu0 %v2410
  %2472 = vmatprep.subr.bf16.mxu0 %v2415
  %2473 = vmatpush1.bf16.msra.mxu0 %v2414
  %2474 = vmatprep.subr.bf16.mxu0 %v2419
  %2475 = vmatpush1.bf16.msra.mxu0 %v2418
  %2476 = vmatprep.subr.bf16.mxu0 %v2423
  %2477 = vmatpush1.bf16.msra.mxu0 %v2422
  %2478 = vmatprep.subr.bf16.mxu0 %v2427
  %2479 = vmatpush1.bf16.msra.mxu0 %v2426
  %2480 = vmatprep.subr.bf16.mxu0 %v2431
  %2481 = vmatpush1.bf16.msra.mxu0 %v2430
  %2482 = vmatprep.subr.bf16.mxu0 %v2435
  %2483 = vmatpush1.bf16.msra.mxu0 %v2434
  %2484 = vmatprep.subr.bf16.mxu0 %v2439
  %2485 = vmatpush1.bf16.msra.mxu0 %v2438
  %2486 = vmatprep.subr.bf16.mxu0 %v2443
  %2487 = vmatpush1.bf16.msra.mxu0 %v2442
  %2488 = vmatprep.subr.bf16.mxu0 0
  %2489 = vmatpush1.bf16.msra.mxu0 0
  %2490 = vmatprep.subr.bf16.mxu0 0
  %2491 = vmatpush1.bf16.msra.mxu0 0
  %2492 = vmatprep.subr.bf16.mxu0 0
  %2493 = vmatpush1.bf16.msra.mxu0 0
  %2494 = vmatprep.subr.bf16.mxu0 0
  %2495 = vmatpush1.bf16.msra.mxu0 0
  %2496 = vmatprep.subr.bf16.mxu0 0
  %2497 = vmatpush1.bf16.msra.mxu0 0
  %2498 = vmatprep.subr.bf16.mxu0 0
  %2499 = vmatpush1.bf16.msra.mxu0 0
  %2500 = vmatprep.subr.bf16.mxu0 0
  %2501 = vmatpush1.bf16.msra.mxu0 0
  %2502 = vmatprep.mubr.bf16.mxu0 %v2468
  %2503 = vmatmul.mubr.bf16.gmra.mrb[0].mxu0 %v2464
  %v2504 = vpop.f32.mrb[0].mxu0
  %v2505 = vadd.f32 %v2451, %v2504
  %v2506 = vpop.f32.mrb[0].mxu0
  %v2507 = vadd.f32 %v2451, %v2506
  %v2508 = vpop.f32.mrb[0].mxu0
  %v2509 = vadd.f32 %v2456, %v2508
  %v2510 = vpop.f32.mrb[0].mxu0
  %v2511 = vadd.f32 %v2456, %v2510
  %2512 = vdwg.mxu0
  %2513 = vmatprep.subr.bf16.mxu0 %v2413
  %2514 = vmatpush1.bf16.msra.mxu0 %v2412
  %2515 = vmatprep.subr.bf16.mxu0 %v2417
  %2516 = vmatpush1.bf16.msra.mxu0 %v2416
  %2517 = vmatprep.subr.bf16.mxu0 %v2421
  %2518 = vmatpush1.bf16.msra.mxu0 %v2420
  %2519 = vmatprep.subr.bf16.mxu0 %v2425
  %2520 = vmatpush1.bf16.msra.mxu0 %v2424
  %2521 = vmatprep.subr.bf16.mxu0 %v2429
  %2522 = vmatpush1.bf16.msra.mxu0 %v2428
  %2523 = vmatprep.subr.bf16.mxu0 %v2433
  %2524 = vmatpush1.bf16.msra.mxu0 %v2432
  %2525 = vmatprep.subr.bf16.mxu0 %v2437
  %2526 = vmatpush1.bf16.msra.mxu0 %v2436
  %2527 = vmatprep.subr.bf16.mxu0 %v2441
  %2528 = vmatpush1.bf16.msra.mxu0 %v2440
  %2529 = vmatprep.subr.bf16.mxu0 %v2445
  %2530 = vmatpush1.bf16.msra.mxu0 %v2444
  %2531 = vmatprep.subr.bf16.mxu0 0
  %2532 = vmatpush1.bf16.msra.mxu0 0
  %2533 = vmatprep.subr.bf16.mxu0 0
  %2534 = vmatpush1.bf16.msra.mxu0 0
  %2535 = vmatprep.subr.bf16.mxu0 0
  %2536 = vmatpush1.bf16.msra.mxu0 0
  %2537 = vmatprep.subr.bf16.mxu0 0
  %2538 = vmatpush1.bf16.msra.mxu0 0
  %2539 = vmatprep.subr.bf16.mxu0 0
  %2540 = vmatpush1.bf16.msra.mxu0 0
  %2541 = vmatprep.subr.bf16.mxu0 0
  %2542 = vmatpush1.bf16.msra.mxu0 0
  %2543 = vmatprep.subr.bf16.mxu0 0
  %2544 = vmatpush1.bf16.msra.mxu0 0
  %2545 = vmatprep.mubr.bf16.mxu0 %v2468
  %2546 = vmatmul.mubr.bf16.gmra.mrb[0].mxu0 %v2464
  %v2547 = vpop.f32.mrb[0].mxu0
  %v2548 = vadd.f32 %v2451, %v2547
  %v2549 = vpop.f32.mrb[0].mxu0
  %v2550 = vadd.f32 %v2451, %v2549
  %v2551 = vpop.f32.mrb[0].mxu0
  %v2552 = vadd.f32 %v2456, %v2551
  %v2553 = vpop.f32.mrb[0].mxu0
  %v2554 = vadd.f32 %v2456, %v2553
  %2555 = vdwg.mxu0
  %v2556 = vmax.f32 %v2505, 0.0
  %v2557 = vmax.f32 %v2507, 0.0
  %v2558 = vmax.f32 %v2548, 0.0
  %v2559 = vmax.f32 %v2550, 0.0
  %v2560 = vmax.f32 %v2509, 0.0
  %v2561 = vmax.f32 %v2511, 0.0
  %v2562 = vmax.f32 %v2552, 0.0
  %v2563 = vmax.f32 %v2554, 0.0
  %2564 = vrot.lane.b32.xlu0 %v2556, 17
  %v2565 = vpop.permute.xlu0 %2564
  %2566 = vrot.lane.b32.xlu0 %v2560, 17
  %v2567 = vpop.permute.xlu0 %2566
  %2568 = vrot.lane.b32.xlu0 %v2557, 17
  %v2569 = vpop.permute.xlu0 %2568
  %2570 = vrot.lane.b32.xlu0 %v2561, 17
  %v2571 = vpop.permute.xlu0 %2570
  %2572 = vrot.lane.b32.xlu0 %v2558, 17
  %v2573 = vpop.permute.xlu0 %2572
  %2574 = vrot.lane.b32.xlu0 %v2562, 17
  %v2575 = vpop.permute.xlu0 %2574
  %2576 = vrot.lane.b32.xlu0 %v2559, 17
  %v2577 = vpop.permute.xlu0 %2576
  %2578 = vrot.lane.b32.xlu0 %v2563, 17
  %v2579 = vpop.permute.xlu0 %2578
  %v2580 = vsel %vm71, %v2573, %v2577
  %v2581 = vsel %vm71, %v2575, %v2579
  %v2582 = vsel %vm71, %v2569, %v2573
  %v2583 = vsel %vm71, %v2571, %v2575
  %v2584 = vsel %vm71, %v2565, %v2569
  %v2585 = vsel %vm71, %v2567, %v2571
  %v2586 = vsel %vm71, %v2577, %v2565
  %v2587 = vsel %vm71, %v2579, %v2567
  %v2588 = vld [vmem:[%s2] ss:$8 sm:$0xf]
  %v2590 = vlaneseq
  %v2591 = vshrl.u32 %v2590, 7
  %v2592 = vsub.s32 0, %v2591
  %v2593 = vrot.slane %v2588, %v2592
  %v2594 = vlaneseq
  %v2595 = vshrl.u32 %v2594, 7
  %v2596 = vsub.s32 1, %v2595
  %v2597 = vrot.slane %v2588, %v2596
  %v2598 = vlaneseq
  %v2599 = vshrl.u32 %v2598, 7
  %v2600 = vsub.s32 2, %v2599
  %v2601 = vrot.slane %v2588, %v2600
  %v2602 = vlaneseq
  %v2603 = vshrl.u32 %v2602, 7
  %v2604 = vsub.s32 3, %v2603
  %v2605 = vrot.slane %v2588, %v2604
  %v2610 = vmul.f32 %v2586, %v2593
  %v2611 = vmul.f32 %v2584, %v2597
  %v2612 = vmul.f32 %v2582, %v2601
  %v2613 = vmul.f32 %v2580, %v2605
  %v2614 = vmul.f32 %v2587, %v2593
  %v2615 = vmul.f32 %v2585, %v2597
  %v2616 = vmul.f32 %v2583, %v2601
  %v2617 = vmul.f32 %v2581, %v2605
  %v2618 = vpack.c.bf16 %v2614, %v2610
  %v2619 = vpack.c.bf16 %v2615, %v2611
  %v2620 = vpack.c.bf16 %v2616, %v2612
  %v2621 = vpack.c.bf16 %v2617, %v2613
  %2622 = vst [vmem:[#allocation2] sm:$0xff] %v2618
  %2623 = vst [vmem:[#allocation2 + $0x8] sm:$0xff] %v2619
  %2624 = vst [vmem:[#allocation2 + $0x10] sm:$0xff] %v2620
  %2625 = vst [vmem:[#allocation2 + $0x18] sm:$0xff] %v2621
  %2626 = vrot.lane.b32.xlu0 %v2556, 16
  %v2627 = vpop.permute.xlu0 %2626
  %2628 = vrot.lane.b32.xlu0 %v2560, 16
  %v2629 = vpop.permute.xlu0 %2628
  %2630 = vrot.lane.b32.xlu0 %v2557, 16
  %v2631 = vpop.permute.xlu0 %2630
  %2632 = vrot.lane.b32.xlu0 %v2561, 16
  %v2633 = vpop.permute.xlu0 %2632
  %2634 = vrot.lane.b32.xlu0 %v2558, 16
  %v2635 = vpop.permute.xlu0 %2634
  %2636 = vrot.lane.b32.xlu0 %v2562, 16
  %v2637 = vpop.permute.xlu0 %2636
  %2638 = vrot.lane.b32.xlu0 %v2559, 16
  %v2639 = vpop.permute.xlu0 %2638
  %2640 = vrot.lane.b32.xlu0 %v2563, 16
  %v2641 = vpop.permute.xlu0 %2640
  %v2642 = vsel %vm134, %v2635, %v2639
  %v2643 = vsel %vm134, %v2637, %v2641
  %v2644 = vsel %vm134, %v2631, %v2635
  %v2645 = vsel %vm134, %v2633, %v2637
  %v2646 = vsel %vm134, %v2627, %v2631
  %v2647 = vsel %vm134, %v2629, %v2633
  %v2648 = vsel %vm134, %v2639, %v2627
  %v2649 = vsel %vm134, %v2641, %v2629
  %v2650 = vld [vmem:[%s143] ss:$8 sm:$0xf]
  %v2652 = vlaneseq
  %v2653 = vshrl.u32 %v2652, 7
  %v2654 = vsub.s32 0, %v2653
  %v2655 = vrot.slane %v2650, %v2654
  %v2656 = vlaneseq
  %v2657 = vshrl.u32 %v2656, 7
  %v2658 = vsub.s32 1, %v2657
  %v2659 = vrot.slane %v2650, %v2658
  %v2660 = vlaneseq
  %v2661 = vshrl.u32 %v2660, 7
  %v2662 = vsub.s32 2, %v2661
  %v2663 = vrot.slane %v2650, %v2662
  %v2664 = vlaneseq
  %v2665 = vshrl.u32 %v2664, 7
  %v2666 = vsub.s32 3, %v2665
  %v2667 = vrot.slane %v2650, %v2666
  %v2672 = vmul.f32 %v2648, %v2655
  %v2673 = vmul.f32 %v2646, %v2659
  %v2674 = vmul.f32 %v2644, %v2663
  %v2675 = vmul.f32 %v2642, %v2667
  %v2676 = vmul.f32 %v2649, %v2655
  %v2677 = vmul.f32 %v2647, %v2659
  %v2678 = vmul.f32 %v2645, %v2663
  %v2679 = vmul.f32 %v2643, %v2667
  %v2680 = vpack.c.bf16 %v2676, %v2672
  %v2681 = vpack.c.bf16 %v2677, %v2673
  %v2682 = vpack.c.bf16 %v2678, %v2674
  %v2683 = vpack.c.bf16 %v2679, %v2675
  %2684 = vst [vmem:[#allocation2 + $0x20] sm:$0xff] %v2680
  %2685 = vst [vmem:[#allocation2 + $0x28] sm:$0xff] %v2681
  %2686 = vst [vmem:[#allocation2 + $0x30] sm:$0xff] %v2682
  %2687 = vst [vmem:[#allocation2 + $0x38] sm:$0xff] %v2683
  %2688 = vrot.lane.b32.xlu0 %v2556, 15
  %v2689 = vpop.permute.xlu0 %2688
  %2690 = vrot.lane.b32.xlu0 %v2560, 15
  %v2691 = vpop.permute.xlu0 %2690
  %2692 = vrot.lane.b32.xlu0 %v2557, 15
  %v2693 = vpop.permute.xlu0 %2692
  %2694 = vrot.lane.b32.xlu0 %v2561, 15
  %v2695 = vpop.permute.xlu0 %2694
  %2696 = vrot.lane.b32.xlu0 %v2558, 15
  %v2697 = vpop.permute.xlu0 %2696
  %2698 = vrot.lane.b32.xlu0 %v2562, 15
  %v2699 = vpop.permute.xlu0 %2698
  %2700 = vrot.lane.b32.xlu0 %v2559, 15
  %v2701 = vpop.permute.xlu0 %2700
  %2702 = vrot.lane.b32.xlu0 %v2563, 15
  %v2703 = vpop.permute.xlu0 %2702
  %v2704 = vsel %vm198, %v2697, %v2701
  %v2705 = vsel %vm198, %v2699, %v2703
  %v2706 = vsel %vm198, %v2693, %v2697
  %v2707 = vsel %vm198, %v2695, %v2699
  %v2708 = vsel %vm198, %v2689, %v2693
  %v2709 = vsel %vm198, %v2691, %v2695
  %v2710 = vsel %vm198, %v2701, %v2689
  %v2711 = vsel %vm198, %v2703, %v2691
  %v2712 = vld [vmem:[%s207] ss:$8 sm:$0xf]
  %v2714 = vlaneseq
  %v2715 = vshrl.u32 %v2714, 7
  %v2716 = vsub.s32 0, %v2715
  %v2717 = vrot.slane %v2712, %v2716
  %v2718 = vlaneseq
  %v2719 = vshrl.u32 %v2718, 7
  %v2720 = vsub.s32 1, %v2719
  %v2721 = vrot.slane %v2712, %v2720
  %v2722 = vlaneseq
  %v2723 = vshrl.u32 %v2722, 7
  %v2724 = vsub.s32 2, %v2723
  %v2725 = vrot.slane %v2712, %v2724
  %v2726 = vlaneseq
  %v2727 = vshrl.u32 %v2726, 7
  %v2728 = vsub.s32 3, %v2727
  %v2729 = vrot.slane %v2712, %v2728
  %v2734 = vmul.f32 %v2710, %v2717
  %v2735 = vmul.f32 %v2708, %v2721
  %v2736 = vmul.f32 %v2706, %v2725
  %v2737 = vmul.f32 %v2704, %v2729
  %v2738 = vmul.f32 %v2711, %v2717
  %v2739 = vmul.f32 %v2709, %v2721
  %v2740 = vmul.f32 %v2707, %v2725
  %v2741 = vmul.f32 %v2705, %v2729
  %v2742 = vpack.c.bf16 %v2738, %v2734
  %v2743 = vpack.c.bf16 %v2739, %v2735
  %v2744 = vpack.c.bf16 %v2740, %v2736
  %v2745 = vpack.c.bf16 %v2741, %v2737
  %2746 = vst [vmem:[#allocation2 + $0x40] sm:$0xff] %v2742
  %2747 = vst [vmem:[#allocation2 + $0x48] sm:$0xff] %v2743
  %2748 = vst [vmem:[#allocation2 + $0x50] sm:$0xff] %v2744
  %2749 = vst [vmem:[#allocation2 + $0x58] sm:$0xff] %v2745
  %2750 = vrot.lane.b32.xlu0 %v2556, 1
  %v2751 = vpop.permute.xlu0 %2750
  %2752 = vrot.lane.b32.xlu0 %v2560, 1
  %v2753 = vpop.permute.xlu0 %2752
  %2754 = vrot.lane.b32.xlu0 %v2557, 1
  %v2755 = vpop.permute.xlu0 %2754
  %2756 = vrot.lane.b32.xlu0 %v2561, 1
  %v2757 = vpop.permute.xlu0 %2756
  %2758 = vrot.lane.b32.xlu0 %v2558, 1
  %v2759 = vpop.permute.xlu0 %2758
  %2760 = vrot.lane.b32.xlu0 %v2562, 1
  %v2761 = vpop.permute.xlu0 %2760
  %2762 = vrot.lane.b32.xlu0 %v2559, 1
  %v2763 = vpop.permute.xlu0 %2762
  %2764 = vrot.lane.b32.xlu0 %v2563, 1
  %v2765 = vpop.permute.xlu0 %2764
  %v2766 = vsel %vm262, %v2759, %v2763
  %v2767 = vsel %vm262, %v2761, %v2765
  %v2768 = vsel %vm262, %v2755, %v2759
  %v2769 = vsel %vm262, %v2757, %v2761
  %v2770 = vsel %vm262, %v2751, %v2755
  %v2771 = vsel %vm262, %v2753, %v2757
  %v2772 = vsel %vm262, %v2763, %v2751
  %v2773 = vsel %vm262, %v2765, %v2753
  %v2774 = vld [vmem:[%s271] ss:$8 sm:$0xf]
  %v2776 = vlaneseq
  %v2777 = vshrl.u32 %v2776, 7
  %v2778 = vsub.s32 0, %v2777
  %v2779 = vrot.slane %v2774, %v2778
  %v2780 = vlaneseq
  %v2781 = vshrl.u32 %v2780, 7
  %v2782 = vsub.s32 1, %v2781
  %v2783 = vrot.slane %v2774, %v2782
  %v2784 = vlaneseq
  %v2785 = vshrl.u32 %v2784, 7
  %v2786 = vsub.s32 2, %v2785
  %v2787 = vrot.slane %v2774, %v2786
  %v2788 = vlaneseq
  %v2789 = vshrl.u32 %v2788, 7
  %v2790 = vsub.s32 3, %v2789
  %v2791 = vrot.slane %v2774, %v2790
  %v2796 = vmul.f32 %v2772, %v2779
  %v2797 = vmul.f32 %v2770, %v2783
  %v2798 = vmul.f32 %v2768, %v2787
  %v2799 = vmul.f32 %v2766, %v2791
  %v2800 = vmul.f32 %v2773, %v2779
  %v2801 = vmul.f32 %v2771, %v2783
  %v2802 = vmul.f32 %v2769, %v2787
  %v2803 = vmul.f32 %v2767, %v2791
  %v2804 = vpack.c.bf16 %v2800, %v2796
  %v2805 = vpack.c.bf16 %v2801, %v2797
  %v2806 = vpack.c.bf16 %v2802, %v2798
  %v2807 = vpack.c.bf16 %v2803, %v2799
  %2808 = vst [vmem:[#allocation2 + $0x60] sm:$0xff] %v2804
  %2809 = vst [vmem:[#allocation2 + $0x68] sm:$0xff] %v2805
  %2810 = vst [vmem:[#allocation2 + $0x70] sm:$0xff] %v2806
  %2811 = vst [vmem:[#allocation2 + $0x78] sm:$0xff] %v2807
  %v2812 = vpack.c.bf16 %v2560, %v2556
  %v2813 = vpack.c.bf16 %v2561, %v2557
  %v2814 = vpack.c.bf16 %v2562, %v2558
  %v2815 = vpack.c.bf16 %v2563, %v2559
  %2816 = vst [vmem:[#allocation2 + $0x80] sm:$0xff] %v2812
  %2817 = vst [vmem:[#allocation2 + $0x88] sm:$0xff] %v2813
  %2818 = vst [vmem:[#allocation2 + $0x90] sm:$0xff] %v2814
  %2819 = vst [vmem:[#allocation2 + $0x98] sm:$0xff] %v2815
  %2820 = vrot.lane.b32.xlu0 %v2556, 127
  %v2821 = vpop.permute.xlu0 %2820
  %2822 = vrot.lane.b32.xlu0 %v2560, 127
  %v2823 = vpop.permute.xlu0 %2822
  %2824 = vrot.lane.b32.xlu0 %v2557, 127
  %v2825 = vpop.permute.xlu0 %2824
  %2826 = vrot.lane.b32.xlu0 %v2561, 127
  %v2827 = vpop.permute.xlu0 %2826
  %2828 = vrot.lane.b32.xlu0 %v2558, 127
  %v2829 = vpop.permute.xlu0 %2828
  %2830 = vrot.lane.b32.xlu0 %v2562, 127
  %v2831 = vpop.permute.xlu0 %2830
  %2832 = vrot.lane.b32.xlu0 %v2559, 127
  %v2833 = vpop.permute.xlu0 %2832
  %2834 = vrot.lane.b32.xlu0 %v2563, 127
  %v2835 = vpop.permute.xlu0 %2834
  %v2836 = vsel %vm334, %v2829, %v2833
  %v2837 = vsel %vm334, %v2831, %v2835
  %v2838 = vsel %vm334, %v2825, %v2829
  %v2839 = vsel %vm334, %v2827, %v2831
  %v2840 = vsel %vm334, %v2821, %v2825
  %v2841 = vsel %vm334, %v2823, %v2827
  %v2842 = vsel %vm334, %v2833, %v2821
  %v2843 = vsel %vm334, %v2835, %v2823
  %v2844 = vld [vmem:[%s343] ss:$8 sm:$0xf]
  %v2846 = vlaneseq
  %v2847 = vshrl.u32 %v2846, 7
  %v2848 = vsub.s32 0, %v2847
  %v2849 = vrot.slane %v2844, %v2848
  %v2850 = vlaneseq
  %v2851 = vshrl.u32 %v2850, 7
  %v2852 = vsub.s32 1, %v2851
  %v2853 = vrot.slane %v2844, %v2852
  %v2854 = vlaneseq
  %v2855 = vshrl.u32 %v2854, 7
  %v2856 = vsub.s32 2, %v2855
  %v2857 = vrot.slane %v2844, %v2856
  %v2858 = vlaneseq
  %v2859 = vshrl.u32 %v2858, 7
  %v2860 = vsub.s32 3, %v2859
  %v2861 = vrot.slane %v2844, %v2860
  %v2866 = vmul.f32 %v2840, %v2849
  %v2867 = vmul.f32 %v2838, %v2853
  %v2868 = vmul.f32 %v2836, %v2857
  %v2869 = vmul.f32 %v2842, %v2861
  %v2870 = vmul.f32 %v2841, %v2849
  %v2871 = vmul.f32 %v2839, %v2853
  %v2872 = vmul.f32 %v2837, %v2857
  %v2873 = vmul.f32 %v2843, %v2861
  %v2874 = vpack.c.bf16 %v2870, %v2866
  %v2875 = vpack.c.bf16 %v2871, %v2867
  %v2876 = vpack.c.bf16 %v2872, %v2868
  %v2877 = vpack.c.bf16 %v2873, %v2869
  %2878 = vst [vmem:[#allocation2 + $0xa0] sm:$0xff] %v2874
  %2879 = vst [vmem:[#allocation2 + $0xa8] sm:$0xff] %v2875
  %2880 = vst [vmem:[#allocation2 + $0xb0] sm:$0xff] %v2876
  %2881 = vst [vmem:[#allocation2 + $0xb8] sm:$0xff] %v2877
  %2882 = vrot.lane.b32.xlu0 %v2556, 113
  %v2883 = vpop.permute.xlu0 %2882
  %2884 = vrot.lane.b32.xlu0 %v2560, 113
  %v2885 = vpop.permute.xlu0 %2884
  %2886 = vrot.lane.b32.xlu0 %v2557, 113
  %v2887 = vpop.permute.xlu0 %2886
  %2888 = vrot.lane.b32.xlu0 %v2561, 113
  %v2889 = vpop.permute.xlu0 %2888
  %2890 = vrot.lane.b32.xlu0 %v2558, 113
  %v2891 = vpop.permute.xlu0 %2890
  %2892 = vrot.lane.b32.xlu0 %v2562, 113
  %v2893 = vpop.permute.xlu0 %2892
  %2894 = vrot.lane.b32.xlu0 %v2559, 113
  %v2895 = vpop.permute.xlu0 %2894
  %2896 = vrot.lane.b32.xlu0 %v2563, 113
  %v2897 = vpop.permute.xlu0 %2896
  %v2898 = vsel %vm398, %v2891, %v2895
  %v2899 = vsel %vm398, %v2893, %v2897
  %v2900 = vsel %vm398, %v2887, %v2891
  %v2901 = vsel %vm398, %v2889, %v2893
  %v2902 = vsel %vm398, %v2883, %v2887
  %v2903 = vsel %vm398, %v2885, %v2889
  %v2904 = vsel %vm398, %v2895, %v2883
  %v2905 = vsel %vm398, %v2897, %v2885
  %v2906 = vld [vmem:[%s407] ss:$8 sm:$0xf]
  %v2908 = vlaneseq
  %v2909 = vshrl.u32 %v2908, 7
  %v2910 = vsub.s32 0, %v2909
  %v2911 = vrot.slane %v2906, %v2910
  %v2912 = vlaneseq
  %v2913 = vshrl.u32 %v2912, 7
  %v2914 = vsub.s32 1, %v2913
  %v2915 = vrot.slane %v2906, %v2914
  %v2916 = vlaneseq
  %v2917 = vshrl.u32 %v2916, 7
  %v2918 = vsub.s32 2, %v2917
  %v2919 = vrot.slane %v2906, %v2918
  %v2920 = vlaneseq
  %v2921 = vshrl.u32 %v2920, 7
  %v2922 = vsub.s32 3, %v2921
  %v2923 = vrot.slane %v2906, %v2922
  %v2928 = vmul.f32 %v2902, %v2911
  %v2929 = vmul.f32 %v2900, %v2915
  %v2930 = vmul.f32 %v2898, %v2919
  %v2931 = vmul.f32 %v2904, %v2923
  %v2932 = vmul.f32 %v2903, %v2911
  %v2933 = vmul.f32 %v2901, %v2915
  %v2934 = vmul.f32 %v2899, %v2919
  %v2935 = vmul.f32 %v2905, %v2923
  %v2936 = vpack.c.bf16 %v2932, %v2928
  %v2937 = vpack.c.bf16 %v2933, %v2929
  %v2938 = vpack.c.bf16 %v2934, %v2930
  %v2939 = vpack.c.bf16 %v2935, %v2931
  %2940 = vst [vmem:[#allocation2 + $0xc0] sm:$0xff] %v2936
  %2941 = vst [vmem:[#allocation2 + $0xc8] sm:$0xff] %v2937
  %2942 = vst [vmem:[#allocation2 + $0xd0] sm:$0xff] %v2938
  %2943 = vst [vmem:[#allocation2 + $0xd8] sm:$0xff] %v2939
  %2944 = vrot.lane.b32.xlu0 %v2556, 112
  %v2945 = vpop.permute.xlu0 %2944
  %2946 = vrot.lane.b32.xlu0 %v2560, 112
  %v2947 = vpop.permute.xlu0 %2946
  %2948 = vrot.lane.b32.xlu0 %v2557, 112
  %v2949 = vpop.permute.xlu0 %2948
  %2950 = vrot.lane.b32.xlu0 %v2561, 112
  %v2951 = vpop.permute.xlu0 %2950
  %2952 = vrot.lane.b32.xlu0 %v2558, 112
  %v2953 = vpop.permute.xlu0 %2952
  %2954 = vrot.lane.b32.xlu0 %v2562, 112
  %v2955 = vpop.permute.xlu0 %2954
  %2956 = vrot.lane.b32.xlu0 %v2559, 112
  %v2957 = vpop.permute.xlu0 %2956
  %2958 = vrot.lane.b32.xlu0 %v2563, 112
  %v2959 = vpop.permute.xlu0 %2958
  %v2960 = vsel %vm462, %v2953, %v2957
  %v2961 = vsel %vm462, %v2955, %v2959
  %v2962 = vsel %vm462, %v2949, %v2953
  %v2963 = vsel %vm462, %v2951, %v2955
  %v2964 = vsel %vm462, %v2945, %v2949
  %v2965 = vsel %vm462, %v2947, %v2951
  %v2966 = vsel %vm462, %v2957, %v2945
  %v2967 = vsel %vm462, %v2959, %v2947
  %v2968 = vld [vmem:[%s471] ss:$8 sm:$0xf]
  %v2970 = vlaneseq
  %v2971 = vshrl.u32 %v2970, 7
  %v2972 = vsub.s32 0, %v2971
  %v2973 = vrot.slane %v2968, %v2972
  %v2974 = vlaneseq
  %v2975 = vshrl.u32 %v2974, 7
  %v2976 = vsub.s32 1, %v2975
  %v2977 = vrot.slane %v2968, %v2976
  %v2978 = vlaneseq
  %v2979 = vshrl.u32 %v2978, 7
  %v2980 = vsub.s32 2, %v2979
  %v2981 = vrot.slane %v2968, %v2980
  %v2982 = vlaneseq
  %v2983 = vshrl.u32 %v2982, 7
  %v2984 = vsub.s32 3, %v2983
  %v2985 = vrot.slane %v2968, %v2984
  %v2990 = vmul.f32 %v2964, %v2973
  %v2991 = vmul.f32 %v2962, %v2977
  %v2992 = vmul.f32 %v2960, %v2981
  %v2993 = vmul.f32 %v2966, %v2985
  %v2994 = vmul.f32 %v2965, %v2973
  %v2995 = vmul.f32 %v2963, %v2977
  %v2996 = vmul.f32 %v2961, %v2981
  %v2997 = vmul.f32 %v2967, %v2985
  %v2998 = vpack.c.bf16 %v2994, %v2990
  %v2999 = vpack.c.bf16 %v2995, %v2991
  %v3000 = vpack.c.bf16 %v2996, %v2992
  %v3001 = vpack.c.bf16 %v2997, %v2993
  %3002 = vst [vmem:[#allocation2 + $0xe0] sm:$0xff] %v2998
  %3003 = vst [vmem:[#allocation2 + $0xe8] sm:$0xff] %v2999
  %3004 = vst [vmem:[#allocation2 + $0xf0] sm:$0xff] %v3000
  %3005 = vst [vmem:[#allocation2 + $0xf8] sm:$0xff] %v3001
  %3006 = vrot.lane.b32.xlu0 %v2556, 111
  %v3007 = vpop.permute.xlu0 %3006
  %3008 = vrot.lane.b32.xlu0 %v2560, 111
  %v3009 = vpop.permute.xlu0 %3008
  %3010 = vrot.lane.b32.xlu0 %v2557, 111
  %v3011 = vpop.permute.xlu0 %3010
  %3012 = vrot.lane.b32.xlu0 %v2561, 111
  %v3013 = vpop.permute.xlu0 %3012
  %3014 = vrot.lane.b32.xlu0 %v2558, 111
  %v3015 = vpop.permute.xlu0 %3014
  %3016 = vrot.lane.b32.xlu0 %v2562, 111
  %v3017 = vpop.permute.xlu0 %3016
  %3018 = vrot.lane.b32.xlu0 %v2559, 111
  %v3019 = vpop.permute.xlu0 %3018
  %3020 = vrot.lane.b32.xlu0 %v2563, 111
  %v3021 = vpop.permute.xlu0 %3020
  %v3022 = vsel %vm526, %v3015, %v3019
  %v3023 = vsel %vm526, %v3017, %v3021
  %v3024 = vsel %vm526, %v3011, %v3015
  %v3025 = vsel %vm526, %v3013, %v3017
  %v3026 = vsel %vm526, %v3007, %v3011
  %v3027 = vsel %vm526, %v3009, %v3013
  %v3028 = vsel %vm526, %v3019, %v3007
  %v3029 = vsel %vm526, %v3021, %v3009
  %v3030 = vld [vmem:[%s535] ss:$8 sm:$0xf]
  %v3032 = vlaneseq
  %v3033 = vshrl.u32 %v3032, 7
  %v3034 = vsub.s32 0, %v3033
  %v3035 = vrot.slane %v3030, %v3034
  %v3036 = vlaneseq
  %v3037 = vshrl.u32 %v3036, 7
  %v3038 = vsub.s32 1, %v3037
  %v3039 = vrot.slane %v3030, %v3038
  %v3040 = vlaneseq
  %v3041 = vshrl.u32 %v3040, 7
  %v3042 = vsub.s32 2, %v3041
  %v3043 = vrot.slane %v3030, %v3042
  %v3044 = vlaneseq
  %v3045 = vshrl.u32 %v3044, 7
  %v3046 = vsub.s32 3, %v3045
  %v3047 = vrot.slane %v3030, %v3046
  %v3052 = vmul.f32 %v3026, %v3035
  %v3053 = vmul.f32 %v3024, %v3039
  %v3054 = vmul.f32 %v3022, %v3043
  %v3055 = vmul.f32 %v3028, %v3047
  %v3056 = vmul.f32 %v3027, %v3035
  %v3057 = vmul.f32 %v3025, %v3039
  %v3058 = vmul.f32 %v3023, %v3043
  %v3059 = vmul.f32 %v3029, %v3047
  %v3060 = vpack.c.bf16 %v3056, %v3052
  %v3061 = vpack.c.bf16 %v3057, %v3053
  %v3062 = vpack.c.bf16 %v3058, %v3054
  %v3063 = vpack.c.bf16 %v3059, %v3055
  %3064 = vst [vmem:[#allocation2 + $0x100] sm:$0xff] %v3060
  %3065 = vst [vmem:[#allocation2 + $0x108] sm:$0xff] %v3061
  %3066 = vst [vmem:[#allocation2 + $0x110] sm:$0xff] %v3062
  %3067 = vst [vmem:[#allocation2 + $0x118] sm:$0xff] %v3063
  %v3068 = vld [vmem:[%s6] sm:$0xff]
  %v3069 = vld [vmem:[%s6 + $0x8] sm:$0xff]
  %v3070 = vld [vmem:[#allocation2] sm:$0xff]
  %v3071 = vld [vmem:[#allocation2 + $0x8] sm:$0xff]
  %v3072 = vld [vmem:[#allocation2 + $0x10] sm:$0xff]
  %v3073 = vld [vmem:[#allocation2 + $0x18] sm:$0xff]
  %v3074 = vld [vmem:[#allocation2 + $0x20] sm:$0xff]
  %v3075 = vld [vmem:[#allocation2 + $0x28] sm:$0xff]
  %v3076 = vld [vmem:[#allocation2 + $0x30] sm:$0xff]
  %v3077 = vld [vmem:[#allocation2 + $0x38] sm:$0xff]
  %v3078 = vld [vmem:[#allocation2 + $0x40] sm:$0xff]
  %v3079 = vld [vmem:[#allocation2 + $0x48] sm:$0xff]
  %v3080 = vld [vmem:[#allocation2 + $0x50] sm:$0xff]
  %v3081 = vld [vmem:[#allocation2 + $0x58] sm:$0xff]
  %v3082 = vld [vmem:[#allocation2 + $0x60] sm:$0xff]
  %v3083 = vld [vmem:[#allocation2 + $0x68] sm:$0xff]
  %v3084 = vld [vmem:[#allocation2 + $0x70] sm:$0xff]
  %v3085 = vld [vmem:[#allocation2 + $0x78] sm:$0xff]
  %v3086 = vld [vmem:[#allocation2 + $0x80] sm:$0xff]
  %v3087 = vld [vmem:[#allocation2 + $0x88] sm:$0xff]
  %v3088 = vld [vmem:[#allocation2 + $0x90] sm:$0xff]
  %v3089 = vld [vmem:[#allocation2 + $0x98] sm:$0xff]
  %v3090 = vld [vmem:[#allocation2 + $0xa0] sm:$0xff]
  %v3091 = vld [vmem:[#allocation2 + $0xa8] sm:$0xff]
  %v3092 = vld [vmem:[#allocation2 + $0xb0] sm:$0xff]
  %v3093 = vld [vmem:[#allocation2 + $0xb8] sm:$0xff]
  %v3094 = vld [vmem:[#allocation2 + $0xc0] sm:$0xff]
  %v3095 = vld [vmem:[#allocation2 + $0xc8] sm:$0xff]
  %v3096 = vld [vmem:[#allocation2 + $0xd0] sm:$0xff]
  %v3097 = vld [vmem:[#allocation2 + $0xd8] sm:$0xff]
  %v3098 = vld [vmem:[#allocation2 + $0xe0] sm:$0xff]
  %v3099 = vld [vmem:[#allocation2 + $0xe8] sm:$0xff]
  %v3100 = vld [vmem:[#allocation2 + $0xf0] sm:$0xff]
  %v3101 = vld [vmem:[#allocation2 + $0xf8] sm:$0xff]
  %v3102 = vld [vmem:[#allocation2 + $0x100] sm:$0xff]
  %v3103 = vld [vmem:[#allocation2 + $0x108] sm:$0xff]
  %v3104 = vld [vmem:[#allocation2 + $0x110] sm:$0xff]
  %v3105 = vld [vmem:[#allocation2 + $0x118] sm:$0xff]
  %v3106 = vld [vmem:[%s11] sm:$0xff]
  %v3107 = vld [vmem:[%s11 + $0x8] sm:$0xff]
  %3109 = vset.pattern.permute.xlu0 0
  %3110 = vperm.xlu0 %3109, %v3106
  %v3111 = vpop.permute.xlu0 %3110
  %3114 = vset.pattern.permute.xlu0 0
  %3115 = vperm.xlu0 %3114, %v3107
  %v3116 = vpop.permute.xlu0 %3115
  %v3120 = vunpack.c.l.b16 %v3068
  %v3121 = vunpack.c.h.b16 %v3068
  %v3122 = vunpack.c.l.b16 %v3069
  %v3123 = vunpack.c.h.b16 %v3069
  %v3124 = vpack.c.b16 %v3122, %v3120
  %v3125 = vpack.c.b16 %v3123, %v3121
  %v3128 = vsel %vm656, %v3125, 0
  %3130 = vmatprep.subr.bf16.mxu0 %v3071
  %3131 = vmatpush1.bf16.msra.mxu0 %v3070
  %3132 = vmatprep.subr.bf16.mxu0 %v3075
  %3133 = vmatpush1.bf16.msra.mxu0 %v3074
  %3134 = vmatprep.subr.bf16.mxu0 %v3079
  %3135 = vmatpush1.bf16.msra.mxu0 %v3078
  %3136 = vmatprep.subr.bf16.mxu0 %v3083
  %3137 = vmatpush1.bf16.msra.mxu0 %v3082
  %3138 = vmatprep.subr.bf16.mxu0 %v3087
  %3139 = vmatpush1.bf16.msra.mxu0 %v3086
  %3140 = vmatprep.subr.bf16.mxu0 %v3091
  %3141 = vmatpush1.bf16.msra.mxu0 %v3090
  %3142 = vmatprep.subr.bf16.mxu0 %v3095
  %3143 = vmatpush1.bf16.msra.mxu0 %v3094
  %3144 = vmatprep.subr.bf16.mxu0 %v3099
  %3145 = vmatpush1.bf16.msra.mxu0 %v3098
  %3146 = vmatprep.subr.bf16.mxu0 %v3103
  %3147 = vmatpush1.bf16.msra.mxu0 %v3102
  %3148 = vmatprep.subr.bf16.mxu0 0
  %3149 = vmatpush1.bf16.msra.mxu0 0
  %3150 = vmatprep.subr.bf16.mxu0 0
  %3151 = vmatpush1.bf16.msra.mxu0 0
  %3152 = vmatprep.subr.bf16.mxu0 0
  %3153 = vmatpush1.bf16.msra.mxu0 0
  %3154 = vmatprep.subr.bf16.mxu0 0
  %3155 = vmatpush1.bf16.msra.mxu0 0
  %3156 = vmatprep.subr.bf16.mxu0 0
  %3157 = vmatpush1.bf16.msra.mxu0 0
  %3158 = vmatprep.subr.bf16.mxu0 0
  %3159 = vmatpush1.bf16.msra.mxu0 0
  %3160 = vmatprep.subr.bf16.mxu0 0
  %3161 = vmatpush1.bf16.msra.mxu0 0
  %3162 = vmatprep.mubr.bf16.mxu0 %v3128
  %3163 = vmatmul.mubr.bf16.gmra.mrb[0].mxu0 %v3124
  %v3164 = vpop.f32.mrb[0].mxu0
  %v3165 = vadd.f32 %v3111, %v3164
  %v3166 = vpop.f32.mrb[0].mxu0
  %v3167 = vadd.f32 %v3111, %v3166
  %v3168 = vpop.f32.mrb[0].mxu0
  %v3169 = vadd.f32 %v3116, %v3168
  %v3170 = vpop.f32.mrb[0].mxu0
  %v3171 = vadd.f32 %v3116, %v3170
  %3172 = vdwg.mxu0
  %3173 = vmatprep.subr.bf16.mxu0 %v3073
  %3174 = vmatpush1.bf16.msra.mxu0 %v3072
  %3175 = vmatprep.subr.bf16.mxu0 %v3077
  %3176 = vmatpush1.bf16.msra.mxu0 %v3076
  %3177 = vmatprep.subr.bf16.mxu0 %v3081
  %3178 = vmatpush1.bf16.msra.mxu0 %v3080
  %3179 = vmatprep.subr.bf16.mxu0 %v3085
  %3180 = vmatpush1.bf16.msra.mxu0 %v3084
  %3181 = vmatprep.subr.bf16.mxu0 %v3089
  %3182 = vmatpush1.bf16.msra.mxu0 %v3088
  %3183 = vmatprep.subr.bf16.mxu0 %v3093
  %3184 = vmatpush1.bf16.msra.mxu0 %v3092
  %3185 = vmatprep.subr.bf16.mxu0 %v3097
  %3186 = vmatpush1.bf16.msra.mxu0 %v3096
  %3187 = vmatprep.subr.bf16.mxu0 %v3101
  %3188 = vmatpush1.bf16.msra.mxu0 %v3100
  %3189 = vmatprep.subr.bf16.mxu0 %v3105
  %3190 = vmatpush1.bf16.msra.mxu0 %v3104
  %3191 = vmatprep.subr.bf16.mxu0 0
  %3192 = vmatpush1.bf16.msra.mxu0 0
  %3193 = vmatprep.subr.bf16.mxu0 0
  %3194 = vmatpush1.bf16.msra.mxu0 0
  %3195 = vmatprep.subr.bf16.mxu0 0
  %3196 = vmatpush1.bf16.msra.mxu0 0
  %3197 = vmatprep.subr.bf16.mxu0 0
  %3198 = vmatpush1.bf16.msra.mxu0 0
  %3199 = vmatprep.subr.bf16.mxu0 0
  %3200 = vmatpush1.bf16.msra.mxu0 0
  %3201 = vmatprep.subr.bf16.mxu0 0
  %3202 = vmatpush1.bf16.msra.mxu0 0
  %3203 = vmatprep.subr.bf16.mxu0 0
  %3204 = vmatpush1.bf16.msra.mxu0 0
  %3205 = vmatprep.mubr.bf16.mxu0 %v3128
  %3206 = vmatmul.mubr.bf16.gmra.mrb[0].mxu0 %v3124
  %v3207 = vpop.f32.mrb[0].mxu0
  %v3208 = vadd.f32 %v3111, %v3207
  %v3209 = vpop.f32.mrb[0].mxu0
  %v3210 = vadd.f32 %v3111, %v3209
  %v3211 = vpop.f32.mrb[0].mxu0
  %v3212 = vadd.f32 %v3116, %v3211
  %v3213 = vpop.f32.mrb[0].mxu0
  %v3214 = vadd.f32 %v3116, %v3213
  %3215 = vdwg.mxu0
  %v3216 = vmax.f32 %v3165, 0.0
  %v3217 = vmax.f32 %v3167, 0.0
  %v3218 = vmax.f32 %v3208, 0.0
  %v3219 = vmax.f32 %v3210, 0.0
  %v3220 = vmax.f32 %v3169, 0.0
  %v3221 = vmax.f32 %v3171, 0.0
  %v3222 = vmax.f32 %v3212, 0.0
  %v3223 = vmax.f32 %v3214, 0.0
  %3224 = vrot.lane.b32.xlu0 %v3216, 17
  %v3225 = vpop.permute.xlu0 %3224
  %3226 = vrot.lane.b32.xlu0 %v3220, 17
  %v3227 = vpop.permute.xlu0 %3226
  %3228 = vrot.lane.b32.xlu0 %v3217, 17
  %v3229 = vpop.permute.xlu0 %3228
  %3230 = vrot.lane.b32.xlu0 %v3221, 17
  %v3231 = vpop.permute.xlu0 %3230
  %3232 = vrot.lane.b32.xlu0 %v3218, 17
  %v3233 = vpop.permute.xlu0 %3232
  %3234 = vrot.lane.b32.xlu0 %v3222, 17
  %v3235 = vpop.permute.xlu0 %3234
  %3236 = vrot.lane.b32.xlu0 %v3219, 17
  %v3237 = vpop.permute.xlu0 %3236
  %3238 = vrot.lane.b32.xlu0 %v3223, 17
  %v3239 = vpop.permute.xlu0 %3238
  %v3240 = vsel %vm71, %v3233, %v3237
  %v3241 = vsel %vm71, %v3235, %v3239
  %v3242 = vsel %vm71, %v3229, %v3233
  %v3243 = vsel %vm71, %v3231, %v3235
  %v3244 = vsel %vm71, %v3225, %v3229
  %v3245 = vsel %vm71, %v3227, %v3231
  %v3246 = vsel %vm71, %v3237, %v3225
  %v3247 = vsel %vm71, %v3239, %v3227
  %v3248 = vld [vmem:[%s2] ss:$8 sm:$0xf]
  %v3250 = vlaneseq
  %v3251 = vshrl.u32 %v3250, 7
  %v3252 = vsub.s32 0, %v3251
  %v3253 = vrot.slane %v3248, %v3252
  %v3254 = vlaneseq
  %v3255 = vshrl.u32 %v3254, 7
  %v3256 = vsub.s32 1, %v3255
  %v3257 = vrot.slane %v3248, %v3256
  %v3258 = vlaneseq
  %v3259 = vshrl.u32 %v3258, 7
  %v3260 = vsub.s32 2, %v3259
  %v3261 = vrot.slane %v3248, %v3260
  %v3262 = vlaneseq
  %v3263 = vshrl.u32 %v3262, 7
  %v3264 = vsub.s32 3, %v3263
  %v3265 = vrot.slane %v3248, %v3264
  %v3270 = vmul.f32 %v3246, %v3253
  %v3271 = vmul.f32 %v3244, %v3257
  %v3272 = vmul.f32 %v3242, %v3261
  %v3273 = vmul.f32 %v3240, %v3265
  %v3274 = vmul.f32 %v3247, %v3253
  %v3275 = vmul.f32 %v3245, %v3257
  %v3276 = vmul.f32 %v3243, %v3261
  %v3277 = vmul.f32 %v3241, %v3265
  %v3278 = vpack.c.bf16 %v3274, %v3270
  %v3279 = vpack.c.bf16 %v3275, %v3271
  %v3280 = vpack.c.bf16 %v3276, %v3272
  %v3281 = vpack.c.bf16 %v3277, %v3273
  %3282 = vst [vmem:[#allocation2] sm:$0xff] %v3278
  %3283 = vst [vmem:[#allocation2 + $0x8] sm:$0xff] %v3279
  %3284 = vst [vmem:[#allocation2 + $0x10] sm:$0xff] %v3280
  %3285 = vst [vmem:[#allocation2 + $0x18] sm:$0xff] %v3281
  %3286 = vrot.lane.b32.xlu0 %v3216, 16
  %v3287 = vpop.permute.xlu0 %3286
  %3288 = vrot.lane.b32.xlu0 %v3220, 16
  %v3289 = vpop.permute.xlu0 %3288
  %3290 = vrot.lane.b32.xlu0 %v3217, 16
  %v3291 = vpop.permute.xlu0 %3290
  %3292 = vrot.lane.b32.xlu0 %v3221, 16
  %v3293 = vpop.permute.xlu0 %3292
  %3294 = vrot.lane.b32.xlu0 %v3218, 16
  %v3295 = vpop.permute.xlu0 %3294
  %3296 = vrot.lane.b32.xlu0 %v3222, 16
  %v3297 = vpop.permute.xlu0 %3296
  %3298 = vrot.lane.b32.xlu0 %v3219, 16
  %v3299 = vpop.permute.xlu0 %3298
  %3300 = vrot.lane.b32.xlu0 %v3223, 16
  %v3301 = vpop.permute.xlu0 %3300
  %v3302 = vsel %vm134, %v3295, %v3299
  %v3303 = vsel %vm134, %v3297, %v3301
  %v3304 = vsel %vm134, %v3291, %v3295
  %v3305 = vsel %vm134, %v3293, %v3297
  %v3306 = vsel %vm134, %v3287, %v3291
  %v3307 = vsel %vm134, %v3289, %v3293
  %v3308 = vsel %vm134, %v3299, %v3287
  %v3309 = vsel %vm134, %v3301, %v3289
  %v3310 = vld [vmem:[%s143] ss:$8 sm:$0xf]
  %v3312 = vlaneseq
  %v3313 = vshrl.u32 %v3312, 7
  %v3314 = vsub.s32 0, %v3313
  %v3315 = vrot.slane %v3310, %v3314
  %v3316 = vlaneseq
  %v3317 = vshrl.u32 %v3316, 7
  %v3318 = vsub.s32 1, %v3317
  %v3319 = vrot.slane %v3310, %v3318
  %v3320 = vlaneseq
  %v3321 = vshrl.u32 %v3320, 7
  %v3322 = vsub.s32 2, %v3321
  %v3323 = vrot.slane %v3310, %v3322
  %v3324 = vlaneseq
  %v3325 = vshrl.u32 %v3324, 7
  %v3326 = vsub.s32 3, %v3325
  %v3327 = vrot.slane %v3310, %v3326
  %v3332 = vmul.f32 %v3308, %v3315
  %v3333 = vmul.f32 %v3306, %v3319
  %v3334 = vmul.f32 %v3304, %v3323
  %v3335 = vmul.f32 %v3302, %v3327
  %v3336 = vmul.f32 %v3309, %v3315
  %v3337 = vmul.f32 %v3307, %v3319
  %v3338 = vmul.f32 %v3305, %v3323
  %v3339 = vmul.f32 %v3303, %v3327
  %v3340 = vpack.c.bf16 %v3336, %v3332
  %v3341 = vpack.c.bf16 %v3337, %v3333
  %v3342 = vpack.c.bf16 %v3338, %v3334
  %v3343 = vpack.c.bf16 %v3339, %v3335
  %3344 = vst [vmem:[#allocation2 + $0x20] sm:$0xff] %v3340
  %3345 = vst [vmem:[#allocation2 + $0x28] sm:$0xff] %v3341
  %3346 = vst [vmem:[#allocation2 + $0x30] sm:$0xff] %v3342
  %3347 = vst [vmem:[#allocation2 + $0x38] sm:$0xff] %v3343
  %3348 = vrot.lane.b32.xlu0 %v3216, 15
  %v3349 = vpop.permute.xlu0 %3348
  %3350 = vrot.lane.b32.xlu0 %v3220, 15
  %v3351 = vpop.permute.xlu0 %3350
  %3352 = vrot.lane.b32.xlu0 %v3217, 15
  %v3353 = vpop.permute.xlu0 %3352
  %3354 = vrot.lane.b32.xlu0 %v3221, 15
  %v3355 = vpop.permute.xlu0 %3354
  %3356 = vrot.lane.b32.xlu0 %v3218, 15
  %v3357 = vpop.permute.xlu0 %3356
  %3358 = vrot.lane.b32.xlu0 %v3222, 15
  %v3359 = vpop.permute.xlu0 %3358
  %3360 = vrot.lane.b32.xlu0 %v3219, 15
  %v3361 = vpop.permute.xlu0 %3360
  %3362 = vrot.lane.b32.xlu0 %v3223, 15
  %v3363 = vpop.permute.xlu0 %3362
  %v3364 = vsel %vm198, %v3357, %v3361
  %v3365 = vsel %vm198, %v3359, %v3363
  %v3366 = vsel %vm198, %v3353, %v3357
  %v3367 = vsel %vm198, %v3355, %v3359
  %v3368 = vsel %vm198, %v3349, %v3353
  %v3369 = vsel %vm198, %v3351, %v3355
  %v3370 = vsel %vm198, %v3361, %v3349
  %v3371 = vsel %vm198, %v3363, %v3351
  %v3372 = vld [vmem:[%s207] ss:$8 sm:$0xf]
  %v3374 = vlaneseq
  %v3375 = vshrl.u32 %v3374, 7
  %v3376 = vsub.s32 0, %v3375
  %v3377 = vrot.slane %v3372, %v3376
  %v3378 = vlaneseq
  %v3379 = vshrl.u32 %v3378, 7
  %v3380 = vsub.s32 1, %v3379
  %v3381 = vrot.slane %v3372, %v3380
  %v3382 = vlaneseq
  %v3383 = vshrl.u32 %v3382, 7
  %v3384 = vsub.s32 2, %v3383
  %v3385 = vrot.slane %v3372, %v3384
  %v3386 = vlaneseq
  %v3387 = vshrl.u32 %v3386, 7
  %v3388 = vsub.s32 3, %v3387
  %v3389 = vrot.slane %v3372, %v3388
  %v3394 = vmul.f32 %v3370, %v3377
  %v3395 = vmul.f32 %v3368, %v3381
  %v3396 = vmul.f32 %v3366, %v3385
  %v3397 = vmul.f32 %v3364, %v3389
  %v3398 = vmul.f32 %v3371, %v3377
  %v3399 = vmul.f32 %v3369, %v3381
  %v3400 = vmul.f32 %v3367, %v3385
  %v3401 = vmul.f32 %v3365, %v3389
  %v3402 = vpack.c.bf16 %v3398, %v3394
  %v3403 = vpack.c.bf16 %v3399, %v3395
  %v3404 = vpack.c.bf16 %v3400, %v3396
  %v3405 = vpack.c.bf16 %v3401, %v3397
  %3406 = vst [vmem:[#allocation2 + $0x40] sm:$0xff] %v3402
  %3407 = vst [vmem:[#allocation2 + $0x48] sm:$0xff] %v3403
  %3408 = vst [vmem:[#allocation2 + $0x50] sm:$0xff] %v3404
  %3409 = vst [vmem:[#allocation2 + $0x58] sm:$0xff] %v3405
  %3410 = vrot.lane.b32.xlu0 %v3216, 1
  %v3411 = vpop.permute.xlu0 %3410
  %3412 = vrot.lane.b32.xlu0 %v3220, 1
  %v3413 = vpop.permute.xlu0 %3412
  %3414 = vrot.lane.b32.xlu0 %v3217, 1
  %v3415 = vpop.permute.xlu0 %3414
  %3416 = vrot.lane.b32.xlu0 %v3221, 1
  %v3417 = vpop.permute.xlu0 %3416
  %3418 = vrot.lane.b32.xlu0 %v3218, 1
  %v3419 = vpop.permute.xlu0 %3418
  %3420 = vrot.lane.b32.xlu0 %v3222, 1
  %v3421 = vpop.permute.xlu0 %3420
  %3422 = vrot.lane.b32.xlu0 %v3219, 1
  %v3423 = vpop.permute.xlu0 %3422
  %3424 = vrot.lane.b32.xlu0 %v3223, 1
  %v3425 = vpop.permute.xlu0 %3424
  %v3426 = vsel %vm262, %v3419, %v3423
  %v3427 = vsel %vm262, %v3421, %v3425
  %v3428 = vsel %vm262, %v3415, %v3419
  %v3429 = vsel %vm262, %v3417, %v3421
  %v3430 = vsel %vm262, %v3411, %v3415
  %v3431 = vsel %vm262, %v3413, %v3417
  %v3432 = vsel %vm262, %v3423, %v3411
  %v3433 = vsel %vm262, %v3425, %v3413
  %v3434 = vld [vmem:[%s271] ss:$8 sm:$0xf]
  %v3436 = vlaneseq
  %v3437 = vshrl.u32 %v3436, 7
  %v3438 = vsub.s32 0, %v3437
  %v3439 = vrot.slane %v3434, %v3438
  %v3440 = vlaneseq
  %v3441 = vshrl.u32 %v3440, 7
  %v3442 = vsub.s32 1, %v3441
  %v3443 = vrot.slane %v3434, %v3442
  %v3444 = vlaneseq
  %v3445 = vshrl.u32 %v3444, 7
  %v3446 = vsub.s32 2, %v3445
  %v3447 = vrot.slane %v3434, %v3446
  %v3448 = vlaneseq
  %v3449 = vshrl.u32 %v3448, 7
  %v3450 = vsub.s32 3, %v3449
  %v3451 = vrot.slane %v3434, %v3450
  %v3456 = vmul.f32 %v3432, %v3439
  %v3457 = vmul.f32 %v3430, %v3443
  %v3458 = vmul.f32 %v3428, %v3447
  %v3459 = vmul.f32 %v3426, %v3451
  %v3460 = vmul.f32 %v3433, %v3439
  %v3461 = vmul.f32 %v3431, %v3443
  %v3462 = vmul.f32 %v3429, %v3447
  %v3463 = vmul.f32 %v3427, %v3451
  %v3464 = vpack.c.bf16 %v3460, %v3456
  %v3465 = vpack.c.bf16 %v3461, %v3457
  %v3466 = vpack.c.bf16 %v3462, %v3458
  %v3467 = vpack.c.bf16 %v3463, %v3459
  %3468 = vst [vmem:[#allocation2 + $0x60] sm:$0xff] %v3464
  %3469 = vst [vmem:[#allocation2 + $0x68] sm:$0xff] %v3465
  %3470 = vst [vmem:[#allocation2 + $0x70] sm:$0xff] %v3466
  %3471 = vst [vmem:[#allocation2 + $0x78] sm:$0xff] %v3467
  %v3472 = vpack.c.bf16 %v3220, %v3216
  %v3473 = vpack.c.bf16 %v3221, %v3217
  %v3474 = vpack.c.bf16 %v3222, %v3218
  %v3475 = vpack.c.bf16 %v3223, %v3219
  %3476 = vst [vmem:[#allocation2 + $0x80] sm:$0xff] %v3472
  %3477 = vst [vmem:[#allocation2 + $0x88] sm:$0xff] %v3473
  %3478 = vst [vmem:[#allocation2 + $0x90] sm:$0xff] %v3474
  %3479 = vst [vmem:[#allocation2 + $0x98] sm:$0xff] %v3475
  %3480 = vrot.lane.b32.xlu0 %v3216, 127
  %v3481 = vpop.permute.xlu0 %3480
  %3482 = vrot.lane.b32.xlu0 %v3220, 127
  %v3483 = vpop.permute.xlu0 %3482
  %3484 = vrot.lane.b32.xlu0 %v3217, 127
  %v3485 = vpop.permute.xlu0 %3484
  %3486 = vrot.lane.b32.xlu0 %v3221, 127
  %v3487 = vpop.permute.xlu0 %3486
  %3488 = vrot.lane.b32.xlu0 %v3218, 127
  %v3489 = vpop.permute.xlu0 %3488
  %3490 = vrot.lane.b32.xlu0 %v3222, 127
  %v3491 = vpop.permute.xlu0 %3490
  %3492 = vrot.lane.b32.xlu0 %v3219, 127
  %v3493 = vpop.permute.xlu0 %3492
  %3494 = vrot.lane.b32.xlu0 %v3223, 127
  %v3495 = vpop.permute.xlu0 %3494
  %v3496 = vsel %vm334, %v3489, %v3493
  %v3497 = vsel %vm334, %v3491, %v3495
  %v3498 = vsel %vm334, %v3485, %v3489
  %v3499 = vsel %vm334, %v3487, %v3491
  %v3500 = vsel %vm334, %v3481, %v3485
  %v3501 = vsel %vm334, %v3483, %v3487
  %v3502 = vsel %vm334, %v3493, %v3481
  %v3503 = vsel %vm334, %v3495, %v3483
  %v3504 = vld [vmem:[%s343] ss:$8 sm:$0xf]
  %v3506 = vlaneseq
  %v3507 = vshrl.u32 %v3506, 7
  %v3508 = vsub.s32 0, %v3507
  %v3509 = vrot.slane %v3504, %v3508
  %v3510 = vlaneseq
  %v3511 = vshrl.u32 %v3510, 7
  %v3512 = vsub.s32 1, %v3511
  %v3513 = vrot.slane %v3504, %v3512
  %v3514 = vlaneseq
  %v3515 = vshrl.u32 %v3514, 7
  %v3516 = vsub.s32 2, %v3515
  %v3517 = vrot.slane %v3504, %v3516
  %v3518 = vlaneseq
  %v3519 = vshrl.u32 %v3518, 7
  %v3520 = vsub.s32 3, %v3519
  %v3521 = vrot.slane %v3504, %v3520
  %v3526 = vmul.f32 %v3500, %v3509
  %v3527 = vmul.f32 %v3498, %v3513
  %v3528 = vmul.f32 %v3496, %v3517
  %v3529 = vmul.f32 %v3502, %v3521
  %v3530 = vmul.f32 %v3501, %v3509
  %v3531 = vmul.f32 %v3499, %v3513
  %v3532 = vmul.f32 %v3497, %v3517
  %v3533 = vmul.f32 %v3503, %v3521
  %v3534 = vpack.c.bf16 %v3530, %v3526
  %v3535 = vpack.c.bf16 %v3531, %v3527
  %v3536 = vpack.c.bf16 %v3532, %v3528
  %v3537 = vpack.c.bf16 %v3533, %v3529
  %3538 = vst [vmem:[#allocation2 + $0xa0] sm:$0xff] %v3534
  %3539 = vst [vmem:[#allocation2 + $0xa8] sm:$0xff] %v3535
  %3540 = vst [vmem:[#allocation2 + $0xb0] sm:$0xff] %v3536
  %3541 = vst [vmem:[#allocation2 + $0xb8] sm:$0xff] %v3537
  %3542 = vrot.lane.b32.xlu0 %v3216, 113
  %v3543 = vpop.permute.xlu0 %3542
  %3544 = vrot.lane.b32.xlu0 %v3220, 113
  %v3545 = vpop.permute.xlu0 %3544
  %3546 = vrot.lane.b32.xlu0 %v3217, 113
  %v3547 = vpop.permute.xlu0 %3546
  %3548 = vrot.lane.b32.xlu0 %v3221, 113
  %v3549 = vpop.permute.xlu0 %3548
  %3550 = vrot.lane.b32.xlu0 %v3218, 113
  %v3551 = vpop.permute.xlu0 %3550
  %3552 = vrot.lane.b32.xlu0 %v3222, 113
  %v3553 = vpop.permute.xlu0 %3552
  %3554 = vrot.lane.b32.xlu0 %v3219, 113
  %v3555 = vpop.permute.xlu0 %3554
  %3556 = vrot.lane.b32.xlu0 %v3223, 113
  %v3557 = vpop.permute.xlu0 %3556
  %v3558 = vsel %vm398, %v3551, %v3555
  %v3559 = vsel %vm398, %v3553, %v3557
  %v3560 = vsel %vm398, %v3547, %v3551
  %v3561 = vsel %vm398, %v3549, %v3553
  %v3562 = vsel %vm398, %v3543, %v3547
  %v3563 = vsel %vm398, %v3545, %v3549
  %v3564 = vsel %vm398, %v3555, %v3543
  %v3565 = vsel %vm398, %v3557, %v3545
  %v3566 = vld [vmem:[%s407] ss:$8 sm:$0xf]
  %v3568 = vlaneseq
  %v3569 = vshrl.u32 %v3568, 7
  %v3570 = vsub.s32 0, %v3569
  %v3571 = vrot.slane %v3566, %v3570
  %v3572 = vlaneseq
  %v3573 = vshrl.u32 %v3572, 7
  %v3574 = vsub.s32 1, %v3573
  %v3575 = vrot.slane %v3566, %v3574
  %v3576 = vlaneseq
  %v3577 = vshrl.u32 %v3576, 7
  %v3578 = vsub.s32 2, %v3577
  %v3579 = vrot.slane %v3566, %v3578
  %v3580 = vlaneseq
  %v3581 = vshrl.u32 %v3580, 7
  %v3582 = vsub.s32 3, %v3581
  %v3583 = vrot.slane %v3566, %v3582
  %v3588 = vmul.f32 %v3562, %v3571
  %v3589 = vmul.f32 %v3560, %v3575
  %v3590 = vmul.f32 %v3558, %v3579
  %v3591 = vmul.f32 %v3564, %v3583
  %v3592 = vmul.f32 %v3563, %v3571
  %v3593 = vmul.f32 %v3561, %v3575
  %v3594 = vmul.f32 %v3559, %v3579
  %v3595 = vmul.f32 %v3565, %v3583
  %v3596 = vpack.c.bf16 %v3592, %v3588
  %v3597 = vpack.c.bf16 %v3593, %v3589
  %v3598 = vpack.c.bf16 %v3594, %v3590
  %v3599 = vpack.c.bf16 %v3595, %v3591
  %3600 = vst [vmem:[#allocation2 + $0xc0] sm:$0xff] %v3596
  %3601 = vst [vmem:[#allocation2 + $0xc8] sm:$0xff] %v3597
  %3602 = vst [vmem:[#allocation2 + $0xd0] sm:$0xff] %v3598
  %3603 = vst [vmem:[#allocation2 + $0xd8] sm:$0xff] %v3599
  %3604 = vrot.lane.b32.xlu0 %v3216, 112
  %v3605 = vpop.permute.xlu0 %3604
  %3606 = vrot.lane.b32.xlu0 %v3220, 112
  %v3607 = vpop.permute.xlu0 %3606
  %3608 = vrot.lane.b32.xlu0 %v3217, 112
  %v3609 = vpop.permute.xlu0 %3608
  %3610 = vrot.lane.b32.xlu0 %v3221, 112
  %v3611 = vpop.permute.xlu0 %3610
  %3612 = vrot.lane.b32.xlu0 %v3218, 112
  %v3613 = vpop.permute.xlu0 %3612
  %3614 = vrot.lane.b32.xlu0 %v3222, 112
  %v3615 = vpop.permute.xlu0 %3614
  %3616 = vrot.lane.b32.xlu0 %v3219, 112
  %v3617 = vpop.permute.xlu0 %3616
  %3618 = vrot.lane.b32.xlu0 %v3223, 112
  %v3619 = vpop.permute.xlu0 %3618
  %v3620 = vsel %vm462, %v3613, %v3617
  %v3621 = vsel %vm462, %v3615, %v3619
  %v3622 = vsel %vm462, %v3609, %v3613
  %v3623 = vsel %vm462, %v3611, %v3615
  %v3624 = vsel %vm462, %v3605, %v3609
  %v3625 = vsel %vm462, %v3607, %v3611
  %v3626 = vsel %vm462, %v3617, %v3605
  %v3627 = vsel %vm462, %v3619, %v3607
  %v3628 = vld [vmem:[%s471] ss:$8 sm:$0xf]
  %v3630 = vlaneseq
  %v3631 = vshrl.u32 %v3630, 7
  %v3632 = vsub.s32 0, %v3631
  %v3633 = vrot.slane %v3628, %v3632
  %v3634 = vlaneseq
  %v3635 = vshrl.u32 %v3634, 7
  %v3636 = vsub.s32 1, %v3635
  %v3637 = vrot.slane %v3628, %v3636
  %v3638 = vlaneseq
  %v3639 = vshrl.u32 %v3638, 7
  %v3640 = vsub.s32 2, %v3639
  %v3641 = vrot.slane %v3628, %v3640
  %v3642 = vlaneseq
  %v3643 = vshrl.u32 %v3642, 7
  %v3644 = vsub.s32 3, %v3643
  %v3645 = vrot.slane %v3628, %v3644
  %v3650 = vmul.f32 %v3624, %v3633
  %v3651 = vmul.f32 %v3622, %v3637
  %v3652 = vmul.f32 %v3620, %v3641
  %v3653 = vmul.f32 %v3626, %v3645
  %v3654 = vmul.f32 %v3625, %v3633
  %v3655 = vmul.f32 %v3623, %v3637
  %v3656 = vmul.f32 %v3621, %v3641
  %v3657 = vmul.f32 %v3627, %v3645
  %v3658 = vpack.c.bf16 %v3654, %v3650
  %v3659 = vpack.c.bf16 %v3655, %v3651
  %v3660 = vpack.c.bf16 %v3656, %v3652
  %v3661 = vpack.c.bf16 %v3657, %v3653
  %3662 = vst [vmem:[#allocation2 + $0xe0] sm:$0xff] %v3658
  %3663 = vst [vmem:[#allocation2 + $0xe8] sm:$0xff] %v3659
  %3664 = vst [vmem:[#allocation2 + $0xf0] sm:$0xff] %v3660
  %3665 = vst [vmem:[#allocation2 + $0xf8] sm:$0xff] %v3661
  %3666 = vrot.lane.b32.xlu0 %v3216, 111
  %v3667 = vpop.permute.xlu0 %3666
  %3668 = vrot.lane.b32.xlu0 %v3220, 111
  %v3669 = vpop.permute.xlu0 %3668
  %3670 = vrot.lane.b32.xlu0 %v3217, 111
  %v3671 = vpop.permute.xlu0 %3670
  %3672 = vrot.lane.b32.xlu0 %v3221, 111
  %v3673 = vpop.permute.xlu0 %3672
  %3674 = vrot.lane.b32.xlu0 %v3218, 111
  %v3675 = vpop.permute.xlu0 %3674
  %3676 = vrot.lane.b32.xlu0 %v3222, 111
  %v3677 = vpop.permute.xlu0 %3676
  %3678 = vrot.lane.b32.xlu0 %v3219, 111
  %v3679 = vpop.permute.xlu0 %3678
  %3680 = vrot.lane.b32.xlu0 %v3223, 111
  %v3681 = vpop.permute.xlu0 %3680
  %v3682 = vsel %vm526, %v3675, %v3679
  %v3683 = vsel %vm526, %v3677, %v3681
  %v3684 = vsel %vm526, %v3671, %v3675
  %v3685 = vsel %vm526, %v3673, %v3677
  %v3686 = vsel %vm526, %v3667, %v3671
  %v3687 = vsel %vm526, %v3669, %v3673
  %v3688 = vsel %vm526, %v3679, %v3667
  %v3689 = vsel %vm526, %v3681, %v3669
  %v3690 = vld [vmem:[%s535] ss:$8 sm:$0xf]
  %v3692 = vlaneseq
  %v3693 = vshrl.u32 %v3692, 7
  %v3694 = vsub.s32 0, %v3693
  %v3695 = vrot.slane %v3690, %v3694
  %v3696 = vlaneseq
  %v3697 = vshrl.u32 %v3696, 7
  %v3698 = vsub.s32 1, %v3697
  %v3699 = vrot.slane %v3690, %v3698
  %v3700 = vlaneseq
  %v3701 = vshrl.u32 %v3700, 7
  %v3702 = vsub.s32 2, %v3701
  %v3703 = vrot.slane %v3690, %v3702
  %v3704 = vlaneseq
  %v3705 = vshrl.u32 %v3704, 7
  %v3706 = vsub.s32 3, %v3705
  %v3707 = vrot.slane %v3690, %v3706
  %v3712 = vmul.f32 %v3686, %v3695
  %v3713 = vmul.f32 %v3684, %v3699
  %v3714 = vmul.f32 %v3682, %v3703
  %v3715 = vmul.f32 %v3688, %v3707
  %v3716 = vmul.f32 %v3687, %v3695
  %v3717 = vmul.f32 %v3685, %v3699
  %v3718 = vmul.f32 %v3683, %v3703
  %v3719 = vmul.f32 %v3689, %v3707
  %v3720 = vpack.c.bf16 %v3716, %v3712
  %v3721 = vpack.c.bf16 %v3717, %v3713
  %v3722 = vpack.c.bf16 %v3718, %v3714
  %v3723 = vpack.c.bf16 %v3719, %v3715
  %3724 = vst [vmem:[#allocation2 + $0x100] sm:$0xff] %v3720
  %3725 = vst [vmem:[#allocation2 + $0x108] sm:$0xff] %v3721
  %3726 = vst [vmem:[#allocation2 + $0x110] sm:$0xff] %v3722
  %3727 = vst [vmem:[#allocation2 + $0x118] sm:$0xff] %v3723
  %v3728 = vld [vmem:[%s7] sm:$0xff]
  %v3729 = vld [vmem:[%s7 + $0x8] sm:$0xff]
  %v3730 = vld [vmem:[#allocation2] sm:$0xff]
  %v3731 = vld [vmem:[#allocation2 + $0x8] sm:$0xff]
  %v3732 = vld [vmem:[#allocation2 + $0x10] sm:$0xff]
  %v3733 = vld [vmem:[#allocation2 + $0x18] sm:$0xff]
  %v3734 = vld [vmem:[#allocation2 + $0x20] sm:$0xff]
  %v3735 = vld [vmem:[#allocation2 + $0x28] sm:$0xff]
  %v3736 = vld [vmem:[#allocation2 + $0x30] sm:$0xff]
  %v3737 = vld [vmem:[#allocation2 + $0x38] sm:$0xff]
  %v3738 = vld [vmem:[#allocation2 + $0x40] sm:$0xff]
  %v3739 = vld [vmem:[#allocation2 + $0x48] sm:$0xff]
  %v3740 = vld [vmem:[#allocation2 + $0x50] sm:$0xff]
  %v3741 = vld [vmem:[#allocation2 + $0x58] sm:$0xff]
  %v3742 = vld [vmem:[#allocation2 + $0x60] sm:$0xff]
  %v3743 = vld [vmem:[#allocation2 + $0x68] sm:$0xff]
  %v3744 = vld [vmem:[#allocation2 + $0x70] sm:$0xff]
  %v3745 = vld [vmem:[#allocation2 + $0x78] sm:$0xff]
  %v3746 = vld [vmem:[#allocation2 + $0x80] sm:$0xff]
  %v3747 = vld [vmem:[#allocation2 + $0x88] sm:$0xff]
  %v3748 = vld [vmem:[#allocation2 + $0x90] sm:$0xff]
  %v3749 = vld [vmem:[#allocation2 + $0x98] sm:$0xff]
  %v3750 = vld [vmem:[#allocation2 + $0xa0] sm:$0xff]
  %v3751 = vld [vmem:[#allocation2 + $0xa8] sm:$0xff]
  %v3752 = vld [vmem:[#allocation2 + $0xb0] sm:$0xff]
  %v3753 = vld [vmem:[#allocation2 + $0xb8] sm:$0xff]
  %v3754 = vld [vmem:[#allocation2 + $0xc0] sm:$0xff]
  %v3755 = vld [vmem:[#allocation2 + $0xc8] sm:$0xff]
  %v3756 = vld [vmem:[#allocation2 + $0xd0] sm:$0xff]
  %v3757 = vld [vmem:[#allocation2 + $0xd8] sm:$0xff]
  %v3758 = vld [vmem:[#allocation2 + $0xe0] sm:$0xff]
  %v3759 = vld [vmem:[#allocation2 + $0xe8] sm:$0xff]
  %v3760 = vld [vmem:[#allocation2 + $0xf0] sm:$0xff]
  %v3761 = vld [vmem:[#allocation2 + $0xf8] sm:$0xff]
  %v3762 = vld [vmem:[#allocation2 + $0x100] sm:$0xff]
  %v3763 = vld [vmem:[#allocation2 + $0x108] sm:$0xff]
  %v3764 = vld [vmem:[#allocation2 + $0x110] sm:$0xff]
  %v3765 = vld [vmem:[#allocation2 + $0x118] sm:$0xff]
  %v3766 = vld [vmem:[%s12] sm:$0xff]
  %v3767 = vld [vmem:[%s12 + $0x8] sm:$0xff]
  %3769 = vset.pattern.permute.xlu0 0
  %3770 = vperm.xlu0 %3769, %v3766
  %v3771 = vpop.permute.xlu0 %3770
  %3774 = vset.pattern.permute.xlu0 0
  %3775 = vperm.xlu0 %3774, %v3767
  %v3776 = vpop.permute.xlu0 %3775
  %v3779 = vunpack.c.l.b16 %v3728
  %v3780 = vunpack.c.h.b16 %v3728
  %v3781 = vunpack.c.l.b16 %v3729
  %v3782 = vunpack.c.h.b16 %v3729
  %v3783 = vpack.c.b16 %v3781, %v3779
  %v3784 = vpack.c.b16 %v3782, %v3780
  %v3787 = vsel %vm656, %v3784, 0
  %3789 = vmatprep.subr.bf16.mxu0 %v3731
  %3790 = vmatpush1.bf16.msra.mxu0 %v3730
  %3791 = vmatprep.subr.bf16.mxu0 %v3735
  %3792 = vmatpush1.bf16.msra.mxu0 %v3734
  %3793 = vmatprep.subr.bf16.mxu0 %v3739
  %3794 = vmatpush1.bf16.msra.mxu0 %v3738
  %3795 = vmatprep.subr.bf16.mxu0 %v3743
  %3796 = vmatpush1.bf16.msra.mxu0 %v3742
  %3797 = vmatprep.subr.bf16.mxu0 %v3747
  %3798 = vmatpush1.bf16.msra.mxu0 %v3746
  %3799 = vmatprep.subr.bf16.mxu0 %v3751
  %3800 = vmatpush1.bf16.msra.mxu0 %v3750
  %3801 = vmatprep.subr.bf16.mxu0 %v3755
  %3802 = vmatpush1.bf16.msra.mxu0 %v3754
  %3803 = vmatprep.subr.bf16.mxu0 %v3759
  %3804 = vmatpush1.bf16.msra.mxu0 %v3758
  %3805 = vmatprep.subr.bf16.mxu0 %v3763
  %3806 = vmatpush1.bf16.msra.mxu0 %v3762
  %3807 = vmatprep.subr.bf16.mxu0 0
  %3808 = vmatpush1.bf16.msra.mxu0 0
  %3809 = vmatprep.subr.bf16.mxu0 0
  %3810 = vmatpush1.bf16.msra.mxu0 0
  %3811 = vmatprep.subr.bf16.mxu0 0
  %3812 = vmatpush1.bf16.msra.mxu0 0
  %3813 = vmatprep.subr.bf16.mxu0 0
  %3814 = vmatpush1.bf16.msra.mxu0 0
  %3815 = vmatprep.subr.bf16.mxu0 0
  %3816 = vmatpush1.bf16.msra.mxu0 0
  %3817 = vmatprep.subr.bf16.mxu0 0
  %3818 = vmatpush1.bf16.msra.mxu0 0
  %3819 = vmatprep.subr.bf16.mxu0 0
  %3820 = vmatpush1.bf16.msra.mxu0 0
  %3821 = vmatprep.mubr.bf16.mxu0 %v3787
  %3822 = vmatmul.mubr.bf16.gmra.mrb[0].mxu0 %v3783
  %v3823 = vpop.f32.mrb[0].mxu0
  %v3824 = vadd.f32 %v3771, %v3823
  %v3825 = vpop.f32.mrb[0].mxu0
  %v3826 = vadd.f32 %v3771, %v3825
  %v3827 = vpop.f32.mrb[0].mxu0
  %v3828 = vpop.f32.mrb[0].mxu0
  %3829 = vdwg.mxu0
  %3830 = vmatprep.subr.bf16.mxu0 %v3733
  %3831 = vmatpush1.bf16.msra.mxu0 %v3732
  %3832 = vmatprep.subr.bf16.mxu0 %v3737
  %3833 = vmatpush1.bf16.msra.mxu0 %v3736
  %3834 = vmatprep.subr.bf16.mxu0 %v3741
  %3835 = vmatpush1.bf16.msra.mxu0 %v3740
  %3836 = vmatprep.subr.bf16.mxu0 %v3745
  %3837 = vmatpush1.bf16.msra.mxu0 %v3744
  %3838 = vmatprep.subr.bf16.mxu0 %v3749
  %3839 = vmatpush1.bf16.msra.mxu0 %v3748
  %3840 = vmatprep.subr.bf16.mxu0 %v3753
  %3841 = vmatpush1.bf16.msra.mxu0 %v3752
  %3842 = vmatprep.subr.bf16.mxu0 %v3757
  %3843 = vmatpush1.bf16.msra.mxu0 %v3756
  %3844 = vmatprep.subr.bf16.mxu0 %v3761
  %3845 = vmatpush1.bf16.msra.mxu0 %v3760
  %3846 = vmatprep.subr.bf16.mxu0 %v3765
  %3847 = vmatpush1.bf16.msra.mxu0 %v3764
  %3848 = vmatprep.subr.bf16.mxu0 0
  %3849 = vmatpush1.bf16.msra.mxu0 0
  %3850 = vmatprep.subr.bf16.mxu0 0
  %3851 = vmatpush1.bf16.msra.mxu0 0
  %3852 = vmatprep.subr.bf16.mxu0 0
  %3853 = vmatpush1.bf16.msra.mxu0 0
  %3854 = vmatprep.subr.bf16.mxu0 0
  %3855 = vmatpush1.bf16.msra.mxu0 0
  %3856 = vmatprep.subr.bf16.mxu0 0
  %3857 = vmatpush1.bf16.msra.mxu0 0
  %3858 = vmatprep.subr.bf16.mxu0 0
  %3859 = vmatpush1.bf16.msra.mxu0 0
  %3860 = vmatprep.subr.bf16.mxu0 0
  %3861 = vmatpush1.bf16.msra.mxu0 0
  %3862 = vmatprep.mubr.bf16.mxu0 %v3787
  %3863 = vmatmul.mubr.bf16.gmra.mrb[0].mxu0 %v3783
  %v3864 = vpop.f32.mrb[0].mxu0
  %v3865 = vadd.f32 %v3771, %v3864
  %v3866 = vpop.f32.mrb[0].mxu0
  %v3867 = vadd.f32 %v3771, %v3866
  %v3868 = vpop.f32.mrb[0].mxu0
  %v3869 = vpop.f32.mrb[0].mxu0
  %3870 = vdwg.mxu0
  %vm3871 = vcmask 1041408
  %v3872 = vsel %vm3871, %v3824, -inf
  %v3873 = vsel %vm3871, %v3826, -inf
  %v3874 = vmax.f32 %v3872, %v3873
  %3875 = vmax.xlane.f32.xlu0 %v3874
  %v3876 = vpop.xlane.xlu0 %3875
  %v3877 = vsub.f32 %v3824, %v3876
  %v3878 = vsub.f32 %v3826, %v3876
  %v3879 = vmul.f32 %v3877, 1.442695
  %v3880 = vpow.pop %v3879
  %v3881 = vmul.f32 %v3878, 1.442695
  %v3882 = vpow.pop %v3881
  %v3883 = vsel %vm3871, %v3880, 0.0
  %v3884 = vsel %vm3871, %v3882, 0.0
  %v3885 = vadd.f32 %v3883, %v3884
  %3886 = vadd.xlane.f32.xlu0 %v3885
  %v3887 = vpop.xlane.xlu0 %3886
  %v3888 = vrcp.pop %v3887
  %v3889 = vld [vmem:[%s1] ss:$2 sm:$0x3]
  %v3891 = vlaneseq
  %v3892 = vshrl.u32 %v3891, 7
  %v3893 = vsub.s32 0, %v3892
  %v3894 = vrot.slane %v3889, %v3893
  %v3895 = vlaneseq
  %v3896 = vshrl.u32 %v3895, 7
  %v3897 = vsub.s32 1, %v3896
  %v3898 = vrot.slane %v3889, %v3897
  %v3901 = vmul.f32 %v3880, %v3894
  %v3902 = vmul.f32 %v3882, %v3898
  %v3903 = vsel %vm3871, %v3901, 0.0
  %v3904 = vsel %vm3871, %v3902, 0.0
  %v3905 = vadd.f32 %v3903, %v3904
  %3906 = vadd.xlane.f32.xlu0 %v3905
  %v3907 = vpop.xlane.xlu0 %3906
  %v3908 = vmul.f32 %v3907, %v3888
  %s3909 = scalar_lea.vmem %s1, 1
  %v3910 = vld [vmem:[%s3909] ss:$2 sm:$0x3]
  %v3912 = vlaneseq
  %v3913 = vshrl.u32 %v3912, 7
  %v3914 = vsub.s32 0, %v3913
  %v3915 = vrot.slane %v3910, %v3914
  %v3916 = vlaneseq
  %v3917 = vshrl.u32 %v3916, 7
  %v3918 = vsub.s32 1, %v3917
  %v3919 = vrot.slane %v3910, %v3918
  %v3922 = vmul.f32 %v3880, %v3915
  %v3923 = vmul.f32 %v3882, %v3919
  %v3924 = vsel %vm3871, %v3922, 0.0
  %v3925 = vsel %vm3871, %v3923, 0.0
  %v3926 = vadd.f32 %v3924, %v3925
  %3927 = vadd.xlane.f32.xlu0 %v3926
  %v3928 = vpop.xlane.xlu0 %3927
  %v3929 = vmul.f32 %v3928, %v3888
  %vm3930 = vcmp.eq.s32.totalorder %v70, 0
  %v3931 = vsel %vm3930, %v3908, 0.0
  %vm3932 = vcmp.eq.s32.totalorder %v70, 1
  %v3933 = vsel %vm3932, %v3929, %v3931
  %vm3934 = vcmp.eq.s32.totalorder %v70, 2
  %v3936 = vrot.slane %v3933, 7
  %v3938 = vsel %vm3934, %v3908, %v3936
  %vm3939 = vcmp.eq.s32.totalorder %v70, 3
  %v3940 = vsel %vm3939, %v3929, %v3938
  %v3941 = vmul.f32 %v3940, 0.00390625
  %v3942 = vsel %vm3871, %v3865, -inf
  %v3943 = vsel %vm3871, %v3867, -inf
  %v3944 = vmax.f32 %v3942, %v3943
  %3945 = vmax.xlane.f32.xlu0 %v3944
  %v3946 = vpop.xlane.xlu0 %3945
  %v3947 = vsub.f32 %v3865, %v3946
  %v3948 = vsub.f32 %v3867, %v3946
  %v3949 = vmul.f32 %v3947, 1.442695
  %v3950 = vpow.pop %v3949
  %v3951 = vmul.f32 %v3948, 1.442695
  %v3952 = vpow.pop %v3951
  %v3953 = vsel %vm3871, %v3950, 0.0
  %v3954 = vsel %vm3871, %v3952, 0.0
  %v3955 = vadd.f32 %v3953, %v3954
  %3956 = vadd.xlane.f32.xlu0 %v3955
  %v3957 = vpop.xlane.xlu0 %3956
  %v3958 = vrcp.pop %v3957
  %v3959 = vmul.f32 %v3950, %v3894
  %v3960 = vmul.f32 %v3952, %v3898
  %v3961 = vsel %vm3871, %v3959, 0.0
  %v3962 = vsel %vm3871, %v3960, 0.0
  %v3963 = vadd.f32 %v3961, %v3962
  %3964 = vadd.xlane.f32.xlu0 %v3963
  %v3965 = vpop.xlane.xlu0 %3964
  %v3966 = vmul.f32 %v3965, %v3958
  %v3967 = vmul.f32 %v3950, %v3915
  %v3968 = vmul.f32 %v3952, %v3919
  %v3969 = vsel %vm3871, %v3967, 0.0
  %v3970 = vsel %vm3871, %v3968, 0.0
  %v3971 = vadd.f32 %v3969, %v3970
  %3972 = vadd.xlane.f32.xlu0 %v3971
  %v3973 = vpop.xlane.xlu0 %3972
  %v3974 = vmul.f32 %v3973, %v3958
  %v3975 = vsel %vm3930, %v3966, 0.0
  %v3976 = vsel %vm3932, %v3974, %v3975
  %v3978 = vrot.slane %v3976, 7
  %v3980 = vsel %vm3934, %v3966, %v3978
  %v3981 = vsel %vm3939, %v3974, %v3980
  %v3982 = vmul.f32 %v3981, 0.00390625
  %v3984 = vrot.slane %v3941, 1
  %vm3986 = vcmask 1040384
  %v3987 = vsel %vm3986, %v3984, %v3982
  %v3988 = vsel %vm3871, %v3987, 0.0
  %3989 = vst [vmem:[%s13] sm:$0xff] %v3988
  // Predicated region
  $region54: #{corner_predictor_lite_forward.1} parent=0 // pred_check
    _
  $region55: #{corner_predictor_lite_forward.1} parent=0 // pred_check_branch
    %3991 = sbr.rel (0) target = $region57
  $region56: #{corner_predictor_lite_forward.1} parent=0 // pred_region
    _
  $region57: #{corner_predictor_lite_forward.1} parent=0 // pred_fallthru
    _
  // Predicated region
  $region58: #{corner_predictor_lite_forward.1} parent=0 // pred_check
    _
  $region59: #{corner_predictor_lite_forward.1} parent=0 // pred_check_branch
    %3993 = sbr.rel (0) target = $region61
  $region60: #{corner_predictor_lite_forward.1} parent=0 // pred_region
    _
  $region61: #{corner_predictor_lite_forward.1} parent=0 // pred_fallthru
    _

</llo_original>
